<compile_context>
chip_gen: v5e
topology: v5e:2x2
jax: 0.10.0
libtpu: 0.0.40
codegen_flags: <defaults>
</compile_context>

<pallas_src>
import functools

import jax
import jax.numpy as jnp
from jax.experimental import pallas as pl
from jax.experimental.pallas import tpu as pltpu


_COMPILER_PARAMS = pltpu.CompilerParams(vmem_limit_bytes=32 * 1024 * 1024)


# ----------------------------- Pallas kernels ------------------------------

def _fc1_bn_relu_kernel(x_ref, w_ref, b_ref, o_ref):
    """relu(x @ w + b); BN1's eval-mode scale/shift is pre-folded into w, b."""
    y = jnp.dot(x_ref[...], w_ref[...], preferred_element_type=jnp.float32)
    o_ref[...] = jnp.maximum(y + b_ref[...], 0.0)


def _lstm_layer_kernel(x_ref, wih_ref, whh_ref, b_ref, o_ref,
                       *, seq_len, batch, hidden):
    """One bidirectional LSTM layer in a single kernel invocation.

    x_ref : (T*N, in_dim)  time-major rows (row = t*N + n)
    wih   : (2, in_dim, 4H), whh: (2, H, 4H), b: (2, 1, 4H)  [fwd, bwd]
    o_ref : (T*N, 2H)  -- fwd hidden in lanes [0,H), bwd hidden in [H,2H)
    """
    T, N, H = seq_len, batch, hidden
    x = x_ref[...]
    # Input projection for every timestep of both directions (two MXU matmuls,
    # biases b_ih + b_hh already folded into b_ref).
    gf = jnp.dot(x, wih_ref[0], preferred_element_type=jnp.float32) + b_ref[0]
    gb = jnp.dot(x, wih_ref[1], preferred_element_type=jnp.float32) + b_ref[1]
    whh_f = whh_ref[0]
    whh_b = whh_ref[1]

    def cell(gates_x, h, c, whh):
        gates = gates_x + jnp.dot(h, whh, preferred_element_type=jnp.float32)
        i = jax.nn.sigmoid(gates[:, 0 * H:1 * H])
        f = jax.nn.sigmoid(gates[:, 1 * H:2 * H])
        g = jnp.tanh(gates[:, 2 * H:3 * H])
        o = jax.nn.sigmoid(gates[:, 3 * H:4 * H])
        c = f * c + i * g
        h = o * jnp.tanh(c)
        return h, c

    hf = jnp.zeros((N, H), jnp.float32)
    cf = jnp.zeros((N, H), jnp.float32)
    hb = jnp.zeros((N, H), jnp.float32)
    cb = jnp.zeros((N, H), jnp.float32)
    # Statically unrolled scan over the short time axis: fwd scans t=0..T-1,
    # bwd scans t=T-1..0.  States stay in vregs; all slices are static.
    for t in range(T):
        hf, cf = cell(gf[t * N:(t + 1) * N, :], hf, cf, whh_f)
        o_ref[t * N:(t + 1) * N, 0:H] = hf
        tb = T - 1 - t
        hb, cb = cell(gb[tb * N:(tb + 1) * N, :], hb, cb, whh_b)
        o_ref[tb * N:(tb + 1) * N, H:2 * H] = hb


def _bn_ln_attn_fc_kernel(h_ref, bns_ref, bnt_ref, lng_ref, lnb_ref,
                          inw_ref, inb_ref, outw_ref, outb_ref,
                          sel_ref, selt_ref, fcw_ref, fcb_ref,
                          lfg_ref, lfb_ref, o_ref,
                          *, seq_len, batch, embed, num_heads, eps):
    """bn_lstm + ln_lstm + MHA(last query) + out-proj + fc_out + ln_fc."""
    T, N, E = seq_len, batch, embed
    dh = E // num_heads

    # bn_lstm (eval-mode affine) then ln_lstm.
    z = h_ref[...] * bns_ref[...] + bnt_ref[...]
    mu = jnp.mean(z, axis=-1, keepdims=True)
    zc = z - mu
    var = jnp.mean(zc * zc, axis=-1, keepdims=True)
    z = zc * jax.lax.rsqrt(var + eps) * lng_ref[...] + lnb_ref[...]

    # MultiheadAttention in-projection (single MXU matmul for Q, K, V).
    qkv = jnp.dot(z, inw_ref[...], preferred_element_type=jnp.float32) + inb_ref[...]
    # Only the last timestep of the attention output feeds fc_out, so only the
    # last-position query is needed; in time-major layout those are the last N
    # rows, which keeps this a contiguous static slice.
    q_last = qkv[(T - 1) * N:, 0:E] * (1.0 / float(dh) ** 0.5)     # (N, E)
    k = qkv[:, E:2 * E]                                            # (T*N, E)
    v = qkv[:, 2 * E:3 * E]                                        # (T*N, E)

    # Per-head scores via the 0/1 head-selector matrix sel (E, num_heads):
    #   s[t*N+n, h] = sum_d q_last[n, h*dh+d] * k[t*N+n, h*dh+d]
    q_exp = jnp.broadcast_to(q_last[None, :, :], (T, N, E)).reshape(T * N, E)
    s = jnp.dot(q_exp * k, sel_ref[...], preferred_element_type=jnp.float32)
    s3 = s.reshape(T, N, num_heads)                 # softmax over time (axis 0)
    m = jnp.max(s3, axis=0, keepdims=True)
    p3 = jnp.exp(s3 - m)
    l = jnp.sum(p3, axis=0, keepdims=True)
    p3 = p3 * pl.reciprocal(l, approx=True)
    # Broadcast per-head weights back to E lanes (MXU with sel^T) and reduce
    # over time to get the per-batch context vectors.
    pe = jnp.dot(p3.reshape(T * N, num_heads), selt_ref[...],
                 preferred_element_type=jnp.float32)               # (T*N, E)
    ctx = jnp.sum((pe * v).reshape(T, N, E), axis=0)               # (N, E)

    # Attention out-projection -> fc_out -> ln_fc.
    a = jnp.dot(ctx, outw_ref[...], preferred_element_type=jnp.float32) + outb_ref[...]
    logits = jnp.dot(a, fcw_ref[...], preferred_element_type=jnp.float32) + fcb_ref[...]
    lmu = jnp.mean(logits, axis=-1, keepdims=True)
    lc = logits - lmu
    lvar = jnp.mean(lc * lc, axis=-1, keepdims=True)
    o_ref[...] = lc * jax.lax.rsqrt(lvar + eps) * lfg_ref[...] + lfb_ref[...]


# ------------------------------ kernel wrappers ------------------------------

def fc1_bn_relu(x2d, w, b):
    m = x2d.shape[0]
    n = w.shape[1]
    return pl.pallas_call(
        _fc1_bn_relu_kernel,
        out_shape=jax.ShapeDtypeStruct((m, n), jnp.float32),
        compiler_params=_COMPILER_PARAMS,
    )(x2d, w, b)


def lstm_layer_bidir(x2d, w_ih, w_hh, b, *, seq_len, batch, hidden):
    return pl.pallas_call(
        functools.partial(_lstm_layer_kernel, seq_len=seq_len, batch=batch,
                          hidden=hidden),
        out_shape=jax.ShapeDtypeStruct((seq_len * batch, 2 * hidden),
                                       jnp.float32),
        compiler_params=_COMPILER_PARAMS,
    )(x2d, w_ih, w_hh, b)


def bn_ln_attn_fc(h2d, kp, *, seq_len, batch, embed, num_heads, num_classes):
    return pl.pallas_call(
        functools.partial(_bn_ln_attn_fc_kernel, seq_len=seq_len, batch=batch,
                          embed=embed, num_heads=num_heads, eps=1e-5),
        out_shape=jax.ShapeDtypeStruct((batch, num_classes), jnp.float32),
        compiler_params=_COMPILER_PARAMS,
    )(h2d, kp['bn_s'], kp['bn_t'], kp['ln_g'], kp['ln_b'],
      kp['attn_in_w'], kp['attn_in_b'], kp['attn_out_w'], kp['attn_out_b'],
      kp['head_sel'], kp['head_sel_t'], kp['fc_w'], kp['fc_b'],
      kp['lnfc_g'], kp['lnfc_b'])


# ----------------------------- parameter handling ---------------------------

def init_params(key, input_size, hidden_size, num_layers, num_classes,
                num_heads, bidirectional=True):
    """PyTorch-layout parameters (weights stored as nn.Module would)."""
    E = hidden_size * 2 if bidirectional else hidden_size
    keys = iter(jax.random.split(key, 128))

    def nrm(shape, s=0.1):
        return s * jax.random.normal(next(keys), shape, dtype=jnp.float32)

    p = {}
    p['fc1_w'] = nrm((hidden_size, input_size))
    p['fc1_b'] = nrm((hidden_size,))
    p['bn1'] = dict(gamma=1.0 + nrm((hidden_size,)), beta=nrm((hidden_size,)),
                    mean=nrm((hidden_size,)),
                    var=1.0 + jnp.abs(nrm((hidden_size,))))
    lstm = []
    for l in range(num_layers):
        in_dim = hidden_size if l == 0 else E
        layer = {}
        for d in (['fwd', 'bwd'] if bidirectional else ['fwd']):
            layer[d] = dict(w_ih=nrm((4 * hidden_size, in_dim)),
                            w_hh=nrm((4 * hidden_size, hidden_size)),
                            b_ih=nrm((4 * hidden_size,)),
                            b_hh=nrm((4 * hidden_size,)))
        lstm.append(layer)
    p['lstm'] = lstm
    p['bn_lstm'] = dict(gamma=1.0 + nrm((E,)), beta=nrm((E,)),
                        mean=nrm((E,)), var=1.0 + jnp.abs(nrm((E,))))
    p['ln_lstm'] = dict(gamma=1.0 + nrm((E,)), beta=nrm((E,)))
    p['attn'] = dict(in_w=nrm((3 * E, E)), in_b=nrm((3 * E,)),
                     out_w=nrm((E, E)), out_b=nrm((E,)))
    p['fc_out_w'] = nrm((num_classes, E))
    p['fc_out_b'] = nrm((num_classes,))
    p['ln_fc'] = dict(gamma=1.0 + nrm((num_classes,)), beta=nrm((num_classes,)))
    return p


def prepare_kernel_params(p, *, num_heads, hidden_size, eps=1e-5):
    """Pre-transpose / pre-fold weights ONCE into kernel-ready layout."""
    E = 2 * hidden_size

    def bn_fold(bn):
        s = bn['gamma'] * jax.lax.rsqrt(bn['var'] + eps)
        t = bn['beta'] - bn['mean'] * s
        return s.astype(jnp.float32), t.astype(jnp.float32)

    kp = {}
    # fc1 with bn1 folded: relu((x @ W1^T + b1) * s + t) = relu(x @ (W1^T * s) + (b1*s + t))
    s1, t1 = bn_fold(p['bn1'])
    kp['fc1_w'] = (p['fc1_w'].T * s1[None, :]).astype(jnp.float32)
    kp['fc1_b'] = (p['fc1_b'] * s1 + t1).reshape(1, -1).astype(jnp.float32)

    layers = []
    for layer in p['lstm']:
        w_ih = jnp.stack([layer['fwd']['w_ih'].T, layer['bwd']['w_ih'].T],
                         axis=0).astype(jnp.float32)              # (2, in, 4H)
        w_hh = jnp.stack([layer['fwd']['w_hh'].T, layer['bwd']['w_hh'].T],
                         axis=0).astype(jnp.float32)              # (2, H, 4H)
        b = jnp.stack(
            [(layer['fwd']['b_ih'] + layer['fwd']['b_hh']).reshape(1, -1),
             (layer['bwd']['b_ih'] + layer['bwd']['b_hh']).reshape(1, -1)],
            axis=0).astype(jnp.float32)                           # (2, 1, 4H)
        layers.append(dict(w_ih=w_ih, w_hh=w_hh, b=b))
    kp['lstm'] = layers

    sb, tb = bn_fold(p['bn_lstm'])
    kp['bn_s'] = sb.reshape(1, -1)
    kp['bn_t'] = tb.reshape(1, -1)
    kp['ln_g'] = p['ln_lstm']['gamma'].reshape(1, -1).astype(jnp.float32)
    kp['ln_b'] = p['ln_lstm']['beta'].reshape(1, -1).astype(jnp.float32)

    kp['attn_in_w'] = p['attn']['in_w'].T.astype(jnp.float32)     # (E, 3E)
    kp['attn_in_b'] = p['attn']['in_b'].reshape(1, -1).astype(jnp.float32)
    kp['attn_out_w'] = p['attn']['out_w'].T.astype(jnp.float32)   # (E, E)
    kp['attn_out_b'] = p['attn']['out_b'].reshape(1, -1).astype(jnp.float32)

    dh = E // num_heads
    sel = (jnp.arange(E)[:, None] // dh
           == jnp.arange(num_heads)[None, :]).astype(jnp.float32)  # (E, heads)
    kp['head_sel'] = sel
    kp['head_sel_t'] = jnp.transpose(sel)                          # (heads, E)

    kp['fc_w'] = p['fc_out_w'].T.astype(jnp.float32)               # (E, NC)
    kp['fc_b'] = p['fc_out_b'].reshape(1, -1).astype(jnp.float32)
    kp['lnfc_g'] = p['ln_fc']['gamma'].reshape(1, -1).astype(jnp.float32)
    kp['lnfc_b'] = p['ln_fc']['beta'].reshape(1, -1).astype(jnp.float32)
    return kp


# ------------------------------- forward pass --------------------------------

def lstm_model_forward(kp, x, *, hidden_size, num_heads, num_classes):
    n, t, v, c = x.shape
    e = 2 * hidden_size
    # Time-major (T*N, feat) activations throughout: row = time * N + batch.
    xt = x.reshape(n, t, v * c).astype(jnp.float32)
    xt = xt.transpose(1, 0, 2).reshape(t * n, v * c)

    # fc1 + bn1 (eval) + relu; dropout = identity in eval mode.
    h = fc1_bn_relu(xt, kp['fc1_w'], kp['fc1_b'])

    # Bidirectional multi-layer LSTM, one fused kernel per layer
    # (inter-layer dropout = identity in eval mode).
    for layer in kp['lstm']:
        h = lstm_layer_bidir(h, layer['w_ih'], layer['w_hh'], layer['b'],
                             seq_len=t, batch=n, hidden=hidden_size)

    # bn_lstm + ln_lstm + self-attention (last query only, since only the last
    # timestep feeds fc_out) + out-proj + fc_out + ln_fc, all fused.
    return bn_ln_attn_fc(h, kp, seq_len=t, batch=n, embed=e,
                         num_heads=num_heads, num_classes=num_classes)


# TODO(synk): train-mode dropout / batch-statistic BatchNorm are not
# implemented; this forward reproduces eval/inference semantics.

if __name__ == "__main__":
    N, T, V, C = 2, 8, 4, 4          # -> input_size = V*C = 16
    hidden_size = 32
    num_layers = 2
    num_classes = 5
    num_heads = 8                    # embed = 2*hidden = 64, head dim = 8

    key = jax.random.PRNGKey(0)
    kx, kparam = jax.random.split(key)
    x = jax.random.normal(kx, (N, T, V, C), dtype=jnp.float32)
    params = init_params(kparam, V * C, hidden_size, num_layers, num_classes,
                         num_heads, bidirectional=True)
    kernel_params = prepare_kernel_params(params, num_heads=num_heads,
                                          hidden_size=hidden_size)

    fwd = jax.jit(functools.partial(lstm_model_forward,
                                    hidden_size=hidden_size,
                                    num_heads=num_heads,
                                    num_classes=num_classes))
    out = fwd(kernel_params, x)
    out = jax.block_until_ready(out)
    assert out.shape == (N, num_classes), out.shape
    assert bool(jnp.all(jnp.isfinite(out)))
    print("KERNEL_OK")
</pallas_src>

<mosaic_0001>
module attributes {stable_mosaic.version = 11 : i64} {
  func.func @_fc1_bn_relu_kernel(%arg0: memref<16x16xf32, #tpu.memory_space<vmem>>, %arg1: memref<16x32xf32, #tpu.memory_space<vmem>>, %arg2: memref<1x32xf32, #tpu.memory_space<vmem>>, %arg3: memref<16x32xf32, #tpu.memory_space<vmem>>) attributes {dimension_semantics = [], scalar_prefetch = 0 : i64, scratch_operands = 0 : i64, tpu.core_type = #tpu.core_type<tc>} {
    %c0 = arith.constant 0 : index
    %c0_0 = arith.constant 0 : index
    %0 = vector.load %arg0[%c0, %c0_0] : memref<16x16xf32, #tpu.memory_space<vmem>>, vector<16x16xf32>
    %c0_1 = arith.constant 0 : index
    %c0_2 = arith.constant 0 : index
    %1 = vector.load %arg1[%c0_1, %c0_2] : memref<16x32xf32, #tpu.memory_space<vmem>>, vector<16x32xf32>
    %cst = arith.constant dense<0.000000e+00> : vector<16x32xf32>
    %2 = tpu.matmul %0, %1, %cst {dimension_numbers = #tpu.dot_dimension_numbers<[1], [0], [0], [1], [0, 0, 1, 1], [], []>} : vector<16x16xf32>, vector<16x32xf32>, vector<16x32xf32> -> vector<16x32xf32>
    %c0_3 = arith.constant 0 : index
    %c0_4 = arith.constant 0 : index
    %3 = vector.load %arg2[%c0_3, %c0_4] : memref<1x32xf32, #tpu.memory_space<vmem>>, vector<1x32xf32>
    %4 = vector.broadcast %3 : vector<1x32xf32> to vector<16x32xf32>
    %5 = arith.addf %2, %4 : vector<16x32xf32>
    %cst_5 = arith.constant 0.000000e+00 : f32
    %6 = vector.broadcast %cst_5 : f32 to vector<16x32xf32>
    %7 = arith.maximumf %5, %6 : vector<16x32xf32>
    %c0_6 = arith.constant 0 : index
    %c0_7 = arith.constant 0 : index
    %8 = vector.load %arg3[%c0_6, %c0_7] : memref<16x32xf32, #tpu.memory_space<vmem>>, vector<16x32xf32>
    tpu.vector_store %arg3[%c0_6, %c0_7], %7 {strides = array<i32>} : memref<16x32xf32, #tpu.memory_space<vmem>>, vector<16x32xf32>,
    return
  }
}

module attributes {stable_mosaic.version = 11 : i64} {
  func.func @_lstm_layer_kernel(%arg0: memref<16x32xf32, #tpu.memory_space<vmem>>, %arg1: memref<2x32x128xf32, #tpu.memory_space<vmem>>, %arg2: memref<2x32x128xf32, #tpu.memory_space<vmem>>, %arg3: memref<2x1x128xf32, #tpu.memory_space<vmem>>, %arg4: memref<16x64xf32, #tpu.memory_space<vmem>>) attributes {dimension_semantics = [], scalar_prefetch = 0 : i64, scratch_operands = 0 : i64, tpu.core_type = #tpu.core_type<tc>} {
    %c0 = arith.constant 0 : index
    %c0_0 = arith.constant 0 : index
    %0 = vector.load %arg0[%c0, %c0_0] : memref<16x32xf32, #tpu.memory_space<vmem>>, vector<16x32xf32>
    %c0_1 = arith.constant 0 : index
    %c0_2 = arith.constant 0 : index
    %c0_3 = arith.constant 0 : index
    %1 = vector.load %arg1[%c0_1, %c0_2, %c0_3] : memref<2x32x128xf32, #tpu.memory_space<vmem>>, vector<1x32x128xf32>
    %2 = vector.shape_cast %1 : vector<1x32x128xf32> to vector<32x128xf32>
    %cst = arith.constant dense<0.000000e+00> : vector<16x128xf32>
    %3 = tpu.matmul %0, %2, %cst {dimension_numbers = #tpu.dot_dimension_numbers<[1], [0], [0], [1], [0, 0, 1, 1], [], []>} : vector<16x32xf32>, vector<32x128xf32>, vector<16x128xf32> -> vector<16x128xf32>
    %c0_4 = arith.constant 0 : index
    %c0_5 = arith.constant 0 : index
    %c0_6 = arith.constant 0 : index
    %4 = vector.load %arg3[%c0_4, %c0_5, %c0_6] : memref<2x1x128xf32, #tpu.memory_space<vmem>>, vector<1x1x128xf32>
    %5 = vector.shape_cast %4 : vector<1x1x128xf32> to vector<1x128xf32>
    %6 = vector.broadcast %5 : vector<1x128xf32> to vector<16x128xf32>
    %7 = arith.addf %3, %6 : vector<16x128xf32>
    %c1 = arith.constant 1 : index
    %c0_7 = arith.constant 0 : index
    %c0_8 = arith.constant 0 : index
    %8 = vector.load %arg1[%c1, %c0_7, %c0_8] : memref<2x32x128xf32, #tpu.memory_space<vmem>>, vector<1x32x128xf32>
    %9 = vector.shape_cast %8 : vector<1x32x128xf32> to vector<32x128xf32>
    %cst_9 = arith.constant dense<0.000000e+00> : vector<16x128xf32>
    %10 = tpu.matmul %0, %9, %cst_9 {dimension_numbers = #tpu.dot_dimension_numbers<[1], [0], [0], [1], [0, 0, 1, 1], [], []>} : vector<16x32xf32>, vector<32x128xf32>, vector<16x128xf32> -> vector<16x128xf32>
    %c1_10 = arith.constant 1 : index
    %c0_11 = arith.constant 0 : index
    %c0_12 = arith.constant 0 : index
    %11 = vector.load %arg3[%c1_10, %c0_11, %c0_12] : memref<2x1x128xf32, #tpu.memory_space<vmem>>, vector<1x1x128xf32>
    %12 = vector.shape_cast %11 : vector<1x1x128xf32> to vector<1x128xf32>
    %13 = vector.broadcast %12 : vector<1x128xf32> to vector<16x128xf32>
    %14 = arith.addf %10, %13 : vector<16x128xf32>
    %c0_13 = arith.constant 0 : index
    %c0_14 = arith.constant 0 : index
    %c0_15 = arith.constant 0 : index
    %15 = vector.load %arg2[%c0_13, %c0_14, %c0_15] : memref<2x32x128xf32, #tpu.memory_space<vmem>>, vector<1x32x128xf32>
    %16 = vector.shape_cast %15 : vector<1x32x128xf32> to vector<32x128xf32>
    %c1_16 = arith.constant 1 : index
    %c0_17 = arith.constant 0 : index
    %c0_18 = arith.constant 0 : index
    %17 = vector.load %arg2[%c1_16, %c0_17, %c0_18] : memref<2x32x128xf32, #tpu.memory_space<vmem>>, vector<1x32x128xf32>
    %18 = vector.shape_cast %17 : vector<1x32x128xf32> to vector<32x128xf32>
    %cst_19 = arith.constant 0.000000e+00 : f32
    %19 = vector.broadcast %cst_19 : f32 to vector<2x32xf32>
    %cst_20 = arith.constant 0.000000e+00 : f32
    %20 = vector.broadcast %cst_20 : f32 to vector<2x32xf32>
    %cst_21 = arith.constant 0.000000e+00 : f32
    %21 = vector.broadcast %cst_21 : f32 to vector<2x32xf32>
    %cst_22 = arith.constant 0.000000e+00 : f32
    %22 = vector.broadcast %cst_22 : f32 to vector<2x32xf32>
    %23 = vector.extract_strided_slice %7 {offsets = [0, 0], sizes = [2, 128], strides = [1, 1]} : vector<16x128xf32> to vector<2x128xf32>
    %cst_23 = arith.constant dense<0.000000e+00> : vector<2x128xf32>
    %24 = tpu.matmul %19, %16, %cst_23 {dimension_numbers = #tpu.dot_dimension_numbers<[1], [0], [0], [1], [0, 0, 1, 1], [], []>} : vector<2x32xf32>, vector<32x128xf32>, vector<2x128xf32> -> vector<2x128xf32>
    %25 = arith.addf %23, %24 : vector<2x128xf32>
    %26 = vector.extract_strided_slice %25 {offsets = [0, 0], sizes = [2, 32], strides = [1, 1]} : vector<2x128xf32> to vector<2x32xf32>
    %27 = arith.negf %26 : vector<2x32xf32>
    %28 = math.exp %27 : vector<2x32xf32>
    %cst_24 = arith.constant 1.000000e+00 : f32
    %29 = vector.broadcast %cst_24 : f32 to vector<2x32xf32>
    %30 = arith.addf %29, %28 : vector<2x32xf32>
    %31 = arith.divf %29, %30 : vector<2x32xf32>
    %32 = vector.extract_strided_slice %25 {offsets = [0, 32], sizes = [2, 32], strides = [1, 1]} : vector<2x128xf32> to vector<2x32xf32>
    %33 = arith.negf %32 : vector<2x32xf32>
    %34 = math.exp %33 : vector<2x32xf32>
    %cst_25 = arith.constant 1.000000e+00 : f32
    %35 = vector.broadcast %cst_25 : f32 to vector<2x32xf32>
    %36 = arith.addf %35, %34 : vector<2x32xf32>
    %37 = arith.divf %35, %36 : vector<2x32xf32>
    %38 = vector.extract_strided_slice %25 {offsets = [0, 64], sizes = [2, 32], strides = [1, 1]} : vector<2x128xf32> to vector<2x32xf32>
    %39 = math.tanh %38 : vector<2x32xf32>
    %40 = vector.extract_strided_slice %25 {offsets = [0, 96], sizes = [2, 32], strides = [1, 1]} : vector<2x128xf32> to vector<2x32xf32>
    %41 = arith.negf %40 : vector<2x32xf32>
    %42 = math.exp %41 : vector<2x32xf32>
    %cst_26 = arith.constant 1.000000e+00 : f32
    %43 = vector.broadcast %cst_26 : f32 to vector<2x32xf32>
    %44 = arith.addf %43, %42 : vector<2x32xf32>
    %45 = arith.divf %43, %44 : vector<2x32xf32>
    %46 = arith.mulf %37, %20 : vector<2x32xf32>
    %47 = arith.mulf %31, %39 : vector<2x32xf32>
    %48 = arith.addf %46, %47 : vector<2x32xf32>
    %49 = math.tanh %48 : vector<2x32xf32>
    %50 = arith.mulf %45, %49 : vector<2x32xf32>
    %c0_27 = arith.constant 0 : index
    %c0_28 = arith.constant 0 : index
    %51 = vector.load %arg4[%c0_27, %c0_28] : memref<16x64xf32, #tpu.memory_space<vmem>>, vector<2x32xf32>
    tpu.vector_store %arg4[%c0_27, %c0_28], %50 {strides = array<i32>} : memref<16x64xf32, #tpu.memory_space<vmem>>, vector<2x32xf32>,
    %52 = vector.extract_strided_slice %14 {offsets = [14, 0], sizes = [2, 128], strides = [1, 1]} : vector<16x128xf32> to vector<2x128xf32>
    %cst_29 = arith.constant dense<0.000000e+00> : vector<2x128xf32>
    %53 = tpu.matmul %21, %18, %cst_29 {dimension_numbers = #tpu.dot_dimension_numbers<[1], [0], [0], [1], [0, 0, 1, 1], [], []>} : vector<2x32xf32>, vector<32x128xf32>, vector<2x128xf32> -> vector<2x128xf32>
    %54 = arith.addf %52, %53 : vector<2x128xf32>
    %55 = vector.extract_strided_slice %54 {offsets = [0, 0], sizes = [2, 32], strides = [1, 1]} : vector<2x128xf32> to vector<2x32xf32>
    %56 = arith.negf %55 : vector<2x32xf32>
    %57 = math.exp %56 : vector<2x32xf32>
    %cst_30 = arith.constant 1.000000e+00 : f32
    %58 = vector.broadcast %cst_30 : f32 to vector<2x32xf32>
    %59 = arith.addf %58, %57 : vector<2x32xf32>
    %60 = arith.divf %58, %59 : vector<2x32xf32>
    %61 = vector.extract_strided_slice %54 {offsets = [0, 32], sizes = [2, 32], strides = [1, 1]} : vector<2x128xf32> to vector<2x32xf32>
    %62 = arith.negf %61 : vector<2x32xf32>
    %63 = math.exp %62 : vector<2x32xf32>
    %cst_31 = arith.constant 1.000000e+00 : f32
    %64 = vector.broadcast %cst_31 : f32 to vector<2x32xf32>
    %65 = arith.addf %64, %63 : vector<2x32xf32>
    %66 = arith.divf %64, %65 : vector<2x32xf32>
    %67 = vector.extract_strided_slice %54 {offsets = [0, 64], sizes = [2, 32], strides = [1, 1]} : vector<2x128xf32> to vector<2x32xf32>
    %68 = math.tanh %67 : vector<2x32xf32>
    %69 = vector.extract_strided_slice %54 {offsets = [0, 96], sizes = [2, 32], strides = [1, 1]} : vector<2x128xf32> to vector<2x32xf32>
    %70 = arith.negf %69 : vector<2x32xf32>
    %71 = math.exp %70 : vector<2x32xf32>
    %cst_32 = arith.constant 1.000000e+00 : f32
    %72 = vector.broadcast %cst_32 : f32 to vector<2x32xf32>
    %73 = arith.addf %72, %71 : vector<2x32xf32>
    %74 = arith.divf %72, %73 : vector<2x32xf32>
    %75 = arith.mulf %66, %22 : vector<2x32xf32>
    %76 = arith.mulf %60, %68 : vector<2x32xf32>
    %77 = arith.addf %75, %76 : vector<2x32xf32>
    %78 = math.tanh %77 : vector<2x32xf32>
    %79 = arith.mulf %74, %78 : vector<2x32xf32>
    %c14 = arith.constant 14 : index
    %c32 = arith.constant 32 : index
    %80 = vector.load %arg4[%c14, %c32] : memref<16x64xf32, #tpu.memory_space<vmem>>, vector<2x32xf32>
    tpu.vector_store %arg4[%c14, %c32], %79 {strides = array<i32>} : memref<16x64xf32, #tpu.memory_space<vmem>>, vector<2x32xf32>,
    %81 = vector.extract_strided_slice %7 {offsets = [2, 0], sizes = [2, 128], strides = [1, 1]} : vector<16x128xf32> to vector<2x128xf32>
    %cst_33 = arith.constant dense<0.000000e+00> : vector<2x128xf32>
    %82 = tpu.matmul %50, %16, %cst_33 {dimension_numbers = #tpu.dot_dimension_numbers<[1], [0], [0], [1], [0, 0, 1, 1], [], []>} : vector<2x32xf32>, vector<32x128xf32>, vector<2x128xf32> -> vector<2x128xf32>
    %83 = arith.addf %81, %82 : vector<2x128xf32>
    %84 = vector.extract_strided_slice %83 {offsets = [0, 0], sizes = [2, 32], strides = [1, 1]} : vector<2x128xf32> to vector<2x32xf32>
    %85 = arith.negf %84 : vector<2x32xf32>
    %86 = math.exp %85 : vector<2x32xf32>
    %cst_34 = arith.constant 1.000000e+00 : f32
    %87 = vector.broadcast %cst_34 : f32 to vector<2x32xf32>
    %88 = arith.addf %87, %86 : vector<2x32xf32>
    %89 = arith.divf %87, %88 : vector<2x32xf32>
    %90 = vector.extract_strided_slice %83 {offsets = [0, 32], sizes = [2, 32], strides = [1, 1]} : vector<2x128xf32> to vector<2x32xf32>
    %91 = arith.negf %90 : vector<2x32xf32>
    %92 = math.exp %91 : vector<2x32xf32>
    %cst_35 = arith.constant 1.000000e+00 : f32
    %93 = vector.broadcast %cst_35 : f32 to vector<2x32xf32>
    %94 = arith.addf %93, %92 : vector<2x32xf32>
    %95 = arith.divf %93, %94 : vector<2x32xf32>
    %96 = vector.extract_strided_slice %83 {offsets = [0, 64], sizes = [2, 32], strides = [1, 1]} : vector<2x128xf32> to vector<2x32xf32>
    %97 = math.tanh %96 : vector<2x32xf32>
    %98 = vector.extract_strided_slice %83 {offsets = [0, 96], sizes = [2, 32], strides = [1, 1]} : vector<2x128xf32> to vector<2x32xf32>
    %99 = arith.negf %98 : vector<2x32xf32>
    %100 = math.exp %99 : vector<2x32xf32>
    %cst_36 = arith.constant 1.000000e+00 : f32
    %101 = vector.broadcast %cst_36 : f32 to vector<2x32xf32>
    %102 = arith.addf %101, %100 : vector<2x32xf32>
    %103 = arith.divf %101, %102 : vector<2x32xf32>
    %104 = arith.mulf %95, %48 : vector<2x32xf32>
    %105 = arith.mulf %89, %97 : vector<2x32xf32>
    %106 = arith.addf %104, %105 : vector<2x32xf32>
    %107 = math.tanh %106 : vector<2x32xf32>
    %108 = arith.mulf %103, %107 : vector<2x32xf32>
    %c2 = arith.constant 2 : index
    %c0_37 = arith.constant 0 : index
    %109 = vector.load %arg4[%c2, %c0_37] : memref<16x64xf32, #tpu.memory_space<vmem>>, vector<2x32xf32>
    tpu.vector_store %arg4[%c2, %c0_37], %108 {strides = array<i32>} : memref<16x64xf32, #tpu.memory_space<vmem>>, vector<2x32xf32>,
    %110 = vector.extract_strided_slice %14 {offsets = [12, 0], sizes = [2, 128], strides = [1, 1]} : vector<16x128xf32> to vector<2x128xf32>
    %cst_38 = arith.constant dense<0.000000e+00> : vector<2x128xf32>
    %111 = tpu.matmul %79, %18, %cst_38 {dimension_numbers = #tpu.dot_dimension_numbers<[1], [0], [0], [1], [0, 0, 1, 1], [], []>} : vector<2x32xf32>, vector<32x128xf32>, vector<2x128xf32> -> vector<2x128xf32>
    %112 = arith.addf %110, %111 : vector<2x128xf32>
    %113 = vector.extract_strided_slice %112 {offsets = [0, 0], sizes = [2, 32], strides = [1, 1]} : vector<2x128xf32> to vector<2x32xf32>
    %114 = arith.negf %113 : vector<2x32xf32>
    %115 = math.exp %114 : vector<2x32xf32>
    %cst_39 = arith.constant 1.000000e+00 : f32
    %116 = vector.broadcast %cst_39 : f32 to vector<2x32xf32>
    %117 = arith.addf %116, %115 : vector<2x32xf32>
    %118 = arith.divf %116, %117 : vector<2x32xf32>
    %119 = vector.extract_strided_slice %112 {offsets = [0, 32], sizes = [2, 32], strides = [1, 1]} : vector<2x128xf32> to vector<2x32xf32>
    %120 = arith.negf %119 : vector<2x32xf32>
    %121 = math.exp %120 : vector<2x32xf32>
    %cst_40 = arith.constant 1.000000e+00 : f32
    %122 = vector.broadcast %cst_40 : f32 to vector<2x32xf32>
    %123 = arith.addf %122, %121 : vector<2x32xf32>
    %124 = arith.divf %122, %123 : vector<2x32xf32>
    %125 = vector.extract_strided_slice %112 {offsets = [0, 64], sizes = [2, 32], strides = [1, 1]} : vector<2x128xf32> to vector<2x32xf32>
    %126 = math.tanh %125 : vector<2x32xf32>
    %127 = vector.extract_strided_slice %112 {offsets = [0, 96], sizes = [2, 32], strides = [1, 1]} : vector<2x128xf32> to vector<2x32xf32>
    %128 = arith.negf %127 : vector<2x32xf32>
    %129 = math.exp %128 : vector<2x32xf32>
    %cst_41 = arith.constant 1.000000e+00 : f32
    %130 = vector.broadcast %cst_41 : f32 to vector<2x32xf32>
    %131 = arith.addf %130, %129 : vector<2x32xf32>
    %132 = arith.divf %130, %131 : vector<2x32xf32>
    %133 = arith.mulf %124, %77 : vector<2x32xf32>
    %134 = arith.mulf %118, %126 : vector<2x32xf32>
    %135 = arith.addf %133, %134 : vector<2x32xf32>
    %136 = math.tanh %135 : vector<2x32xf32>
    %137 = arith.mulf %132, %136 : vector<2x32xf32>
    %c12 = arith.constant 12 : index
    %c32_42 = arith.constant 32 : index
    %138 = vector.load %arg4[%c12, %c32_42] : memref<16x64xf32, #tpu.memory_space<vmem>>, vector<2x32xf32>
    tpu.vector_store %arg4[%c12, %c32_42], %137 {strides = array<i32>} : memref<16x64xf32, #tpu.memory_space<vmem>>, vector<2x32xf32>,
    %139 = vector.extract_strided_slice %7 {offsets = [4, 0], sizes = [2, 128], strides = [1, 1]} : vector<16x128xf32> to vector<2x128xf32>
    %cst_43 = arith.constant dense<0.000000e+00> : vector<2x128xf32>
    %140 = tpu.matmul %108, %16, %cst_43 {dimension_numbers = #tpu.dot_dimension_numbers<[1], [0], [0], [1], [0, 0, 1, 1], [], []>} : vector<2x32xf32>, vector<32x128xf32>, vector<2x128xf32> -> vector<2x128xf32>
    %141 = arith.addf %139, %140 : vector<2x128xf32>
    %142 = vector.extract_strided_slice %141 {offsets = [0, 0], sizes = [2, 32], strides = [1, 1]} : vector<2x128xf32> to vector<2x32xf32>
    %143 = arith.negf %142 : vector<2x32xf32>
    %144 = math.exp %143 : vector<2x32xf32>
    %cst_44 = arith.constant 1.000000e+00 : f32
    %145 = vector.broadcast %cst_44 : f32 to vector<2x32xf32>
    %146 = arith.addf %145, %144 : vector<2x32xf32>
    %147 = arith.divf %145, %146 : vector<2x32xf32>
    %148 = vector.extract_strided_slice %141 {offsets = [0, 32], sizes = [2, 32], strides = [1, 1]} : vector<2x128xf32> to vector<2x32xf32>
    %149 = arith.negf %148 : vector<2x32xf32>
    %150 = math.exp %149 : vector<2x32xf32>
    %cst_45 = arith.constant 1.000000e+00 : f32
    %151 = vector.broadcast %cst_45 : f32 to vector<2x32xf32>
    %152 = arith.addf %151, %150 : vector<2x32xf32>
    %153 = arith.divf %151, %152 : vector<2x32xf32>
    %154 = vector.extract_strided_slice %141 {offsets = [0, 64], sizes = [2, 32], strides = [1, 1]} : vector<2x128xf32> to vector<2x32xf32>
    %155 = math.tanh %154 : vector<2x32xf32>
    %156 = vector.extract_strided_slice %141 {offsets = [0, 96], sizes = [2, 32], strides = [1, 1]} : vector<2x128xf32> to vector<2x32xf32>
    %157 = arith.negf %156 : vector<2x32xf32>
    %158 = math.exp %157 : vector<2x32xf32>
    %cst_46 = arith.constant 1.000000e+00 : f32
    %159 = vector.broadcast %cst_46 : f32 to vector<2x32xf32>
    %160 = arith.addf %159, %158 : vector<2x32xf32>
    %161 = arith.divf %159, %160 : vector<2x32xf32>
    %162 = arith.mulf %153, %106 : vector<2x32xf32>
    %163 = arith.mulf %147, %155 : vector<2x32xf32>
    %164 = arith.addf %162, %163 : vector<2x32xf32>
    %165 = math.tanh %164 : vector<2x32xf32>
    %166 = arith.mulf %161, %165 : vector<2x32xf32>
    %c4 = arith.constant 4 : index
    %c0_47 = arith.constant 0 : index
    %167 = vector.load %arg4[%c4, %c0_47] : memref<16x64xf32, #tpu.memory_space<vmem>>, vector<2x32xf32>
    tpu.vector_store %arg4[%c4, %c0_47], %166 {strides = array<i32>} : memref<16x64xf32, #tpu.memory_space<vmem>>, vector<2x32xf32>,
    %168 = vector.extract_strided_slice %14 {offsets = [10, 0], sizes = [2, 128], strides = [1, 1]} : vector<16x128xf32> to vector<2x128xf32>
    %cst_48 = arith.constant dense<0.000000e+00> : vector<2x128xf32>
    %169 = tpu.matmul %137, %18, %cst_48 {dimension_numbers = #tpu.dot_dimension_numbers<[1], [0], [0], [1], [0, 0, 1, 1], [], []>} : vector<2x32xf32>, vector<32x128xf32>, vector<2x128xf32> -> vector<2x128xf32>
    %170 = arith.addf %168, %169 : vector<2x128xf32>
    %171 = vector.extract_strided_slice %170 {offsets = [0, 0], sizes = [2, 32], strides = [1, 1]} : vector<2x128xf32> to vector<2x32xf32>
    %172 = arith.negf %171 : vector<2x32xf32>
    %173 = math.exp %172 : vector<2x32xf32>
    %cst_49 = arith.constant 1.000000e+00 : f32
    %174 = vector.broadcast %cst_49 : f32 to vector<2x32xf32>
    %175 = arith.addf %174, %173 : vector<2x32xf32>
    %176 = arith.divf %174, %175 : vector<2x32xf32>
    %177 = vector.extract_strided_slice %170 {offsets = [0, 32], sizes = [2, 32], strides = [1, 1]} : vector<2x128xf32> to vector<2x32xf32>
    %178 = arith.negf %177 : vector<2x32xf32>
    %179 = math.exp %178 : vector<2x32xf32>
    %cst_50 = arith.constant 1.000000e+00 : f32
    %180 = vector.broadcast %cst_50 : f32 to vector<2x32xf32>
    %181 = arith.addf %180, %179 : vector<2x32xf32>
    %182 = arith.divf %180, %181 : vector<2x32xf32>
    %183 = vector.extract_strided_slice %170 {offsets = [0, 64], sizes = [2, 32], strides = [1, 1]} : vector<2x128xf32> to vector<2x32xf32>
    %184 = math.tanh %183 : vector<2x32xf32>
    %185 = vector.extract_strided_slice %170 {offsets = [0, 96], sizes = [2, 32], strides = [1, 1]} : vector<2x128xf32> to vector<2x32xf32>
    %186 = arith.negf %185 : vector<2x32xf32>
    %187 = math.exp %186 : vector<2x32xf32>
    %cst_51 = arith.constant 1.000000e+00 : f32
    %188 = vector.broadcast %cst_51 : f32 to vector<2x32xf32>
    %189 = arith.addf %188, %187 : vector<2x32xf32>
    %190 = arith.divf %188, %189 : vector<2x32xf32>
    %191 = arith.mulf %182, %135 : vector<2x32xf32>
    %192 = arith.mulf %176, %184 : vector<2x32xf32>
    %193 = arith.addf %191, %192 : vector<2x32xf32>
    %194 = math.tanh %193 : vector<2x32xf32>
    %195 = arith.mulf %190, %194 : vector<2x32xf32>
    %c10 = arith.constant 10 : index
    %c32_52 = arith.constant 32 : index
    %196 = vector.load %arg4[%c10, %c32_52] : memref<16x64xf32, #tpu.memory_space<vmem>>, vector<2x32xf32>
    tpu.vector_store %arg4[%c10, %c32_52], %195 {strides = array<i32>} : memref<16x64xf32, #tpu.memory_space<vmem>>, vector<2x32xf32>,
    %197 = vector.extract_strided_slice %7 {offsets = [6, 0], sizes = [2, 128], strides = [1, 1]} : vector<16x128xf32> to vector<2x128xf32>
    %cst_53 = arith.constant dense<0.000000e+00> : vector<2x128xf32>
    %198 = tpu.matmul %166, %16, %cst_53 {dimension_numbers = #tpu.dot_dimension_numbers<[1], [0], [0], [1], [0, 0, 1, 1], [], []>} : vector<2x32xf32>, vector<32x128xf32>, vector<2x128xf32> -> vector<2x128xf32>
    %199 = arith.addf %197, %198 : vector<2x128xf32>
    %200 = vector.extract_strided_slice %199 {offsets = [0, 0], sizes = [2, 32], strides = [1, 1]} : vector<2x128xf32> to vector<2x32xf32>
    %201 = arith.negf %200 : vector<2x32xf32>
    %202 = math.exp %201 : vector<2x32xf32>
    %cst_54 = arith.constant 1.000000e+00 : f32
    %203 = vector.broadcast %cst_54 : f32 to vector<2x32xf32>
    %204 = arith.addf %203, %202 : vector<2x32xf32>
    %205 = arith.divf %203, %204 : vector<2x32xf32>
    %206 = vector.extract_strided_slice %199 {offsets = [0, 32], sizes = [2, 32], strides = [1, 1]} : vector<2x128xf32> to vector<2x32xf32>
    %207 = arith.negf %206 : vector<2x32xf32>
    %208 = math.exp %207 : vector<2x32xf32>
    %cst_55 = arith.constant 1.000000e+00 : f32
    %209 = vector.broadcast %cst_55 : f32 to vector<2x32xf32>
    %210 = arith.addf %209, %208 : vector<2x32xf32>
    %211 = arith.divf %209, %210 : vector<2x32xf32>
    %212 = vector.extract_strided_slice %199 {offsets = [0, 64], sizes = [2, 32], strides = [1, 1]} : vector<2x128xf32> to vector<2x32xf32>
    %213 = math.tanh %212 : vector<2x32xf32>
    %214 = vector.extract_strided_slice %199 {offsets = [0, 96], sizes = [2, 32], strides = [1, 1]} : vector<2x128xf32> to vector<2x32xf32>
    %215 = arith.negf %214 : vector<2x32xf32>
    %216 = math.exp %215 : vector<2x32xf32>
    %cst_56 = arith.constant 1.000000e+00 : f32
    %217 = vector.broadcast %cst_56 : f32 to vector<2x32xf32>
    %218 = arith.addf %217, %216 : vector<2x32xf32>
    %219 = arith.divf %217, %218 : vector<2x32xf32>
    %220 = arith.mulf %211, %164 : vector<2x32xf32>
    %221 = arith.mulf %205, %213 : vector<2x32xf32>
    %222 = arith.addf %220, %221 : vector<2x32xf32>
    %223 = math.tanh %222 : vector<2x32xf32>
    %224 = arith.mulf %219, %223 : vector<2x32xf32>
    %c6 = arith.constant 6 : index
    %c0_57 = arith.constant 0 : index
    %225 = vector.load %arg4[%c6, %c0_57] : memref<16x64xf32, #tpu.memory_space<vmem>>, vector<2x32xf32>
    tpu.vector_store %arg4[%c6, %c0_57], %224 {strides = array<i32>} : memref<16x64xf32, #tpu.memory_space<vmem>>, vector<2x32xf32>,
    %226 = vector.extract_strided_slice %14 {offsets = [8, 0], sizes = [2, 128], strides = [1, 1]} : vector<16x128xf32> to vector<2x128xf32>
    %cst_58 = arith.constant dense<0.000000e+00> : vector<2x128xf32>
    %227 = tpu.matmul %195, %18, %cst_58 {dimension_numbers = #tpu.dot_dimension_numbers<[1], [0], [0], [1], [0, 0, 1, 1], [], []>} : vector<2x32xf32>, vector<32x128xf32>, vector<2x128xf32> -> vector<2x128xf32>
    %228 = arith.addf %226, %227 : vector<2x128xf32>
    %229 = vector.extract_strided_slice %228 {offsets = [0, 0], sizes = [2, 32], strides = [1, 1]} : vector<2x128xf32> to vector<2x32xf32>
    %230 = arith.negf %229 : vector<2x32xf32>
    %231 = math.exp %230 : vector<2x32xf32>
    %cst_59 = arith.constant 1.000000e+00 : f32
    %232 = vector.broadcast %cst_59 : f32 to vector<2x32xf32>
    %233 = arith.addf %232, %231 : vector<2x32xf32>
    %234 = arith.divf %232, %233 : vector<2x32xf32>
    %235 = vector.extract_strided_slice %228 {offsets = [0, 32], sizes = [2, 32], strides = [1, 1]} : vector<2x128xf32> to vector<2x32xf32>
    %236 = arith.negf %235 : vector<2x32xf32>
    %237 = math.exp %236 : vector<2x32xf32>
    %cst_60 = arith.constant 1.000000e+00 : f32
    %238 = vector.broadcast %cst_60 : f32 to vector<2x32xf32>
    %239 = arith.addf %238, %237 : vector<2x32xf32>
    %240 = arith.divf %238, %239 : vector<2x32xf32>
    %241 = vector.extract_strided_slice %228 {offsets = [0, 64], sizes = [2, 32], strides = [1, 1]} : vector<2x128xf32> to vector<2x32xf32>
    %242 = math.tanh %241 : vector<2x32xf32>
    %243 = vector.extract_strided_slice %228 {offsets = [0, 96], sizes = [2, 32], strides = [1, 1]} : vector<2x128xf32> to vector<2x32xf32>
    %244 = arith.negf %243 : vector<2x32xf32>
    %245 = math.exp %244 : vector<2x32xf32>
    %cst_61 = arith.constant 1.000000e+00 : f32
    %246 = vector.broadcast %cst_61 : f32 to vector<2x32xf32>
    %247 = arith.addf %246, %245 : vector<2x32xf32>
    %248 = arith.divf %246, %247 : vector<2x32xf32>
    %249 = arith.mulf %240, %193 : vector<2x32xf32>
    %250 = arith.mulf %234, %242 : vector<2x32xf32>
    %251 = arith.addf %249, %250 : vector<2x32xf32>
    %252 = math.tanh %251 : vector<2x32xf32>
    %253 = arith.mulf %248, %252 : vector<2x32xf32>
    %c8 = arith.constant 8 : index
    %c32_62 = arith.constant 32 : index
    %254 = vector.load %arg4[%c8, %c32_62] : memref<16x64xf32, #tpu.memory_space<vmem>>, vector<2x32xf32>
    tpu.vector_store %arg4[%c8, %c32_62], %253 {strides = array<i32>} : memref<16x64xf32, #tpu.memory_space<vmem>>, vector<2x32xf32>,
    %255 = vector.extract_strided_slice %7 {offsets = [8, 0], sizes = [2, 128], strides = [1, 1]} : vector<16x128xf32> to vector<2x128xf32>
    %cst_63 = arith.constant dense<0.000000e+00> : vector<2x128xf32>
    %256 = tpu.matmul %224, %16, %cst_63 {dimension_numbers = #tpu.dot_dimension_numbers<[1], [0], [0], [1], [0, 0, 1, 1], [], []>} : vector<2x32xf32>, vector<32x128xf32>, vector<2x128xf32> -> vector<2x128xf32>
    %257 = arith.addf %255, %256 : vector<2x128xf32>
    %258 = vector.extract_strided_slice %257 {offsets = [0, 0], sizes = [2, 32], strides = [1, 1]} : vector<2x128xf32> to vector<2x32xf32>
    %259 = arith.negf %258 : vector<2x32xf32>
    %260 = math.exp %259 : vector<2x32xf32>
    %cst_64 = arith.constant 1.000000e+00 : f32
    %261 = vector.broadcast %cst_64 : f32 to vector<2x32xf32>
    %262 = arith.addf %261, %260 : vector<2x32xf32>
    %263 = arith.divf %261, %262 : vector<2x32xf32>
    %264 = vector.extract_strided_slice %257 {offsets = [0, 32], sizes = [2, 32], strides = [1, 1]} : vector<2x128xf32> to vector<2x32xf32>
    %265 = arith.negf %264 : vector<2x32xf32>
    %266 = math.exp %265 : vector<2x32xf32>
    %cst_65 = arith.constant 1.000000e+00 : f32
    %267 = vector.broadcast %cst_65 : f32 to vector<2x32xf32>
    %268 = arith.addf %267, %266 : vector<2x32xf32>
    %269 = arith.divf %267, %268 : vector<2x32xf32>
    %270 = vector.extract_strided_slice %257 {offsets = [0, 64], sizes = [2, 32], strides = [1, 1]} : vector<2x128xf32> to vector<2x32xf32>
    %271 = math.tanh %270 : vector<2x32xf32>
    %272 = vector.extract_strided_slice %257 {offsets = [0, 96], sizes = [2, 32], strides = [1, 1]} : vector<2x128xf32> to vector<2x32xf32>
    %273 = arith.negf %272 : vector<2x32xf32>
    %274 = math.exp %273 : vector<2x32xf32>
    %cst_66 = arith.constant 1.000000e+00 : f32
    %275 = vector.broadcast %cst_66 : f32 to vector<2x32xf32>
    %276 = arith.addf %275, %274 : vector<2x32xf32>
    %277 = arith.divf %275, %276 : vector<2x32xf32>
    %278 = arith.mulf %269, %222 : vector<2x32xf32>
    %279 = arith.mulf %263, %271 : vector<2x32xf32>
    %280 = arith.addf %278, %279 : vector<2x32xf32>
    %281 = math.tanh %280 : vector<2x32xf32>
    %282 = arith.mulf %277, %281 : vector<2x32xf32>
    %c8_67 = arith.constant 8 : index
    %c0_68 = arith.constant 0 : index
    %283 = vector.load %arg4[%c8_67, %c0_68] : memref<16x64xf32, #tpu.memory_space<vmem>>, vector<2x32xf32>
    tpu.vector_store %arg4[%c8_67, %c0_68], %282 {strides = array<i32>} : memref<16x64xf32, #tpu.memory_space<vmem>>, vector<2x32xf32>,
    %284 = vector.extract_strided_slice %14 {offsets = [6, 0], sizes = [2, 128], strides = [1, 1]} : vector<16x128xf32> to vector<2x128xf32>
    %cst_69 = arith.constant dense<0.000000e+00> : vector<2x128xf32>
    %285 = tpu.matmul %253, %18, %cst_69 {dimension_numbers = #tpu.dot_dimension_numbers<[1], [0], [0], [1], [0, 0, 1, 1], [], []>} : vector<2x32xf32>, vector<32x128xf32>, vector<2x128xf32> -> vector<2x128xf32>
    %286 = arith.addf %284, %285 : vector<2x128xf32>
    %287 = vector.extract_strided_slice %286 {offsets = [0, 0], sizes = [2, 32], strides = [1, 1]} : vector<2x128xf32> to vector<2x32xf32>
    %288 = arith.negf %287 : vector<2x32xf32>
    %289 = math.exp %288 : vector<2x32xf32>
    %cst_70 = arith.constant 1.000000e+00 : f32
    %290 = vector.broadcast %cst_70 : f32 to vector<2x32xf32>
    %291 = arith.addf %290, %289 : vector<2x32xf32>
    %292 = arith.divf %290, %291 : vector<2x32xf32>
    %293 = vector.extract_strided_slice %286 {offsets = [0, 32], sizes = [2, 32], strides = [1, 1]} : vector<2x128xf32> to vector<2x32xf32>
    %294 = arith.negf %293 : vector<2x32xf32>
    %295 = math.exp %294 : vector<2x32xf32>
    %cst_71 = arith.constant 1.000000e+00 : f32
    %296 = vector.broadcast %cst_71 : f32 to vector<2x32xf32>
    %297 = arith.addf %296, %295 : vector<2x32xf32>
    %298 = arith.divf %296, %297 : vector<2x32xf32>
    %299 = vector.extract_strided_slice %286 {offsets = [0, 64], sizes = [2, 32], strides = [1, 1]} : vector<2x128xf32> to vector<2x32xf32>
    %300 = math.tanh %299 : vector<2x32xf32>
    %301 = vector.extract_strided_slice %286 {offsets = [0, 96], sizes = [2, 32], strides = [1, 1]} : vector<2x128xf32> to vector<2x32xf32>
    %302 = arith.negf %301 : vector<2x32xf32>
    %303 = math.exp %302 : vector<2x32xf32>
    %cst_72 = arith.constant 1.000000e+00 : f32
    %304 = vector.broadcast %cst_72 : f32 to vector<2x32xf32>
    %305 = arith.addf %304, %303 : vector<2x32xf32>
    %306 = arith.divf %304, %305 : vector<2x32xf32>
    %307 = arith.mulf %298, %251 : vector<2x32xf32>
    %308 = arith.mulf %292, %300 : vector<2x32xf32>
    %309 = arith.addf %307, %308 : vector<2x32xf32>
    %310 = math.tanh %309 : vector<2x32xf32>
    %311 = arith.mulf %306, %310 : vector<2x32xf32>
    %c6_73 = arith.constant 6 : index
    %c32_74 = arith.constant 32 : index
    %312 = vector.load %arg4[%c6_73, %c32_74] : memref<16x64xf32, #tpu.memory_space<vmem>>, vector<2x32xf32>
    tpu.vector_store %arg4[%c6_73, %c32_74], %311 {strides = array<i32>} : memref<16x64xf32, #tpu.memory_space<vmem>>, vector<2x32xf32>,
    %313 = vector.extract_strided_slice %7 {offsets = [10, 0], sizes = [2, 128], strides = [1, 1]} : vector<16x128xf32> to vector<2x128xf32>
    %cst_75 = arith.constant dense<0.000000e+00> : vector<2x128xf32>
    %314 = tpu.matmul %282, %16, %cst_75 {dimension_numbers = #tpu.dot_dimension_numbers<[1], [0], [0], [1], [0, 0, 1, 1], [], []>} : vector<2x32xf32>, vector<32x128xf32>, vector<2x128xf32> -> vector<2x128xf32>
    %315 = arith.addf %313, %314 : vector<2x128xf32>
    %316 = vector.extract_strided_slice %315 {offsets = [0, 0], sizes = [2, 32], strides = [1, 1]} : vector<2x128xf32> to vector<2x32xf32>
    %317 = arith.negf %316 : vector<2x32xf32>
    %318 = math.exp %317 : vector<2x32xf32>
    %cst_76 = arith.constant 1.000000e+00 : f32
    %319 = vector.broadcast %cst_76 : f32 to vector<2x32xf32>
    %320 = arith.addf %319, %318 : vector<2x32xf32>
    %321 = arith.divf %319, %320 : vector<2x32xf32>
    %322 = vector.extract_strided_slice %315 {offsets = [0, 32], sizes = [2, 32], strides = [1, 1]} : vector<2x128xf32> to vector<2x32xf32>
    %323 = arith.negf %322 : vector<2x32xf32>
    %324 = math.exp %323 : vector<2x32xf32>
    %cst_77 = arith.constant 1.000000e+00 : f32
    %325 = vector.broadcast %cst_77 : f32 to vector<2x32xf32>
    %326 = arith.addf %325, %324 : vector<2x32xf32>
    %327 = arith.divf %325, %326 : vector<2x32xf32>
    %328 = vector.extract_strided_slice %315 {offsets = [0, 64], sizes = [2, 32], strides = [1, 1]} : vector<2x128xf32> to vector<2x32xf32>
    %329 = math.tanh %328 : vector<2x32xf32>
    %330 = vector.extract_strided_slice %315 {offsets = [0, 96], sizes = [2, 32], strides = [1, 1]} : vector<2x128xf32> to vector<2x32xf32>
    %331 = arith.negf %330 : vector<2x32xf32>
    %332 = math.exp %331 : vector<2x32xf32>
    %cst_78 = arith.constant 1.000000e+00 : f32
    %333 = vector.broadcast %cst_78 : f32 to vector<2x32xf32>
    %334 = arith.addf %333, %332 : vector<2x32xf32>
    %335 = arith.divf %333, %334 : vector<2x32xf32>
    %336 = arith.mulf %327, %280 : vector<2x32xf32>
    %337 = arith.mulf %321, %329 : vector<2x32xf32>
    %338 = arith.addf %336, %337 : vector<2x32xf32>
    %339 = math.tanh %338 : vector<2x32xf32>
    %340 = arith.mulf %335, %339 : vector<2x32xf32>
    %c10_79 = arith.constant 10 : index
    %c0_80 = arith.constant 0 : index
    %341 = vector.load %arg4[%c10_79, %c0_80] : memref<16x64xf32, #tpu.memory_space<vmem>>, vector<2x32xf32>
    tpu.vector_store %arg4[%c10_79, %c0_80], %340 {strides = array<i32>} : memref<16x64xf32, #tpu.memory_space<vmem>>, vector<2x32xf32>,
    %342 = vector.extract_strided_slice %14 {offsets = [4, 0], sizes = [2, 128], strides = [1, 1]} : vector<16x128xf32> to vector<2x128xf32>
    %cst_81 = arith.constant dense<0.000000e+00> : vector<2x128xf32>
    %343 = tpu.matmul %311, %18, %cst_81 {dimension_numbers = #tpu.dot_dimension_numbers<[1], [0], [0], [1], [0, 0, 1, 1], [], []>} : vector<2x32xf32>, vector<32x128xf32>, vector<2x128xf32> -> vector<2x128xf32>
    %344 = arith.addf %342, %343 : vector<2x128xf32>
    %345 = vector.extract_strided_slice %344 {offsets = [0, 0], sizes = [2, 32], strides = [1, 1]} : vector<2x128xf32> to vector<2x32xf32>
    %346 = arith.negf %345 : vector<2x32xf32>
    %347 = math.exp %346 : vector<2x32xf32>
    %cst_82 = arith.constant 1.000000e+00 : f32
    %348 = vector.broadcast %cst_82 : f32 to vector<2x32xf32>
    %349 = arith.addf %348, %347 : vector<2x32xf32>
    %350 = arith.divf %348, %349 : vector<2x32xf32>
    %351 = vector.extract_strided_slice %344 {offsets = [0, 32], sizes = [2, 32], strides = [1, 1]} : vector<2x128xf32> to vector<2x32xf32>
    %352 = arith.negf %351 : vector<2x32xf32>
    %353 = math.exp %352 : vector<2x32xf32>
    %cst_83 = arith.constant 1.000000e+00 : f32
    %354 = vector.broadcast %cst_83 : f32 to vector<2x32xf32>
    %355 = arith.addf %354, %353 : vector<2x32xf32>
    %356 = arith.divf %354, %355 : vector<2x32xf32>
    %357 = vector.extract_strided_slice %344 {offsets = [0, 64], sizes = [2, 32], strides = [1, 1]} : vector<2x128xf32> to vector<2x32xf32>
    %358 = math.tanh %357 : vector<2x32xf32>
    %359 = vector.extract_strided_slice %344 {offsets = [0, 96], sizes = [2, 32], strides = [1, 1]} : vector<2x128xf32> to vector<2x32xf32>
    %360 = arith.negf %359 : vector<2x32xf32>
    %361 = math.exp %360 : vector<2x32xf32>
    %cst_84 = arith.constant 1.000000e+00 : f32
    %362 = vector.broadcast %cst_84 : f32 to vector<2x32xf32>
    %363 = arith.addf %362, %361 : vector<2x32xf32>
    %364 = arith.divf %362, %363 : vector<2x32xf32>
    %365 = arith.mulf %356, %309 : vector<2x32xf32>
    %366 = arith.mulf %350, %358 : vector<2x32xf32>
    %367 = arith.addf %365, %366 : vector<2x32xf32>
    %368 = math.tanh %367 : vector<2x32xf32>
    %369 = arith.mulf %364, %368 : vector<2x32xf32>
    %c4_85 = arith.constant 4 : index
    %c32_86 = arith.constant 32 : index
    %370 = vector.load %arg4[%c4_85, %c32_86] : memref<16x64xf32, #tpu.memory_space<vmem>>, vector<2x32xf32>
    tpu.vector_store %arg4[%c4_85, %c32_86], %369 {strides = array<i32>} : memref<16x64xf32, #tpu.memory_space<vmem>>, vector<2x32xf32>,
    %371 = vector.extract_strided_slice %7 {offsets = [12, 0], sizes = [2, 128], strides = [1, 1]} : vector<16x128xf32> to vector<2x128xf32>
    %cst_87 = arith.constant dense<0.000000e+00> : vector<2x128xf32>
    %372 = tpu.matmul %340, %16, %cst_87 {dimension_numbers = #tpu.dot_dimension_numbers<[1], [0], [0], [1], [0, 0, 1, 1], [], []>} : vector<2x32xf32>, vector<32x128xf32>, vector<2x128xf32> -> vector<2x128xf32>
    %373 = arith.addf %371, %372 : vector<2x128xf32>
    %374 = vector.extract_strided_slice %373 {offsets = [0, 0], sizes = [2, 32], strides = [1, 1]} : vector<2x128xf32> to vector<2x32xf32>
    %375 = arith.negf %374 : vector<2x32xf32>
    %376 = math.exp %375 : vector<2x32xf32>
    %cst_88 = arith.constant 1.000000e+00 : f32
    %377 = vector.broadcast %cst_88 : f32 to vector<2x32xf32>
    %378 = arith.addf %377, %376 : vector<2x32xf32>
    %379 = arith.divf %377, %378 : vector<2x32xf32>
    %380 = vector.extract_strided_slice %373 {offsets = [0, 32], sizes = [2, 32], strides = [1, 1]} : vector<2x128xf32> to vector<2x32xf32>
    %381 = arith.negf %380 : vector<2x32xf32>
    %382 = math.exp %381 : vector<2x32xf32>
    %cst_89 = arith.constant 1.000000e+00 : f32
    %383 = vector.broadcast %cst_89 : f32 to vector<2x32xf32>
    %384 = arith.addf %383, %382 : vector<2x32xf32>
    %385 = arith.divf %383, %384 : vector<2x32xf32>
    %386 = vector.extract_strided_slice %373 {offsets = [0, 64], sizes = [2, 32], strides = [1, 1]} : vector<2x128xf32> to vector<2x32xf32>
    %387 = math.tanh %386 : vector<2x32xf32>
    %388 = vector.extract_strided_slice %373 {offsets = [0, 96], sizes = [2, 32], strides = [1, 1]} : vector<2x128xf32> to vector<2x32xf32>
    %389 = arith.negf %388 : vector<2x32xf32>
    %390 = math.exp %389 : vector<2x32xf32>
    %cst_90 = arith.constant 1.000000e+00 : f32
    %391 = vector.broadcast %cst_90 : f32 to vector<2x32xf32>
    %392 = arith.addf %391, %390 : vector<2x32xf32>
    %393 = arith.divf %391, %392 : vector<2x32xf32>
    %394 = arith.mulf %385, %338 : vector<2x32xf32>
    %395 = arith.mulf %379, %387 : vector<2x32xf32>
    %396 = arith.addf %394, %395 : vector<2x32xf32>
    %397 = math.tanh %396 : vector<2x32xf32>
    %398 = arith.mulf %393, %397 : vector<2x32xf32>
    %c12_91 = arith.constant 12 : index
    %c0_92 = arith.constant 0 : index
    %399 = vector.load %arg4[%c12_91, %c0_92] : memref<16x64xf32, #tpu.memory_space<vmem>>, vector<2x32xf32>
    tpu.vector_store %arg4[%c12_91, %c0_92], %398 {strides = array<i32>} : memref<16x64xf32, #tpu.memory_space<vmem>>, vector<2x32xf32>,
    %400 = vector.extract_strided_slice %14 {offsets = [2, 0], sizes = [2, 128], strides = [1, 1]} : vector<16x128xf32> to vector<2x128xf32>
    %cst_93 = arith.constant dense<0.000000e+00> : vector<2x128xf32>
    %401 = tpu.matmul %369, %18, %cst_93 {dimension_numbers = #tpu.dot_dimension_numbers<[1], [0], [0], [1], [0, 0, 1, 1], [], []>} : vector<2x32xf32>, vector<32x128xf32>, vector<2x128xf32> -> vector<2x128xf32>
    %402 = arith.addf %400, %401 : vector<2x128xf32>
    %403 = vector.extract_strided_slice %402 {offsets = [0, 0], sizes = [2, 32], strides = [1, 1]} : vector<2x128xf32> to vector<2x32xf32>
    %404 = arith.negf %403 : vector<2x32xf32>
    %405 = math.exp %404 : vector<2x32xf32>
    %cst_94 = arith.constant 1.000000e+00 : f32
    %406 = vector.broadcast %cst_94 : f32 to vector<2x32xf32>
    %407 = arith.addf %406, %405 : vector<2x32xf32>
    %408 = arith.divf %406, %407 : vector<2x32xf32>
    %409 = vector.extract_strided_slice %402 {offsets = [0, 32], sizes = [2, 32], strides = [1, 1]} : vector<2x128xf32> to vector<2x32xf32>
    %410 = arith.negf %409 : vector<2x32xf32>
    %411 = math.exp %410 : vector<2x32xf32>
    %cst_95 = arith.constant 1.000000e+00 : f32
    %412 = vector.broadcast %cst_95 : f32 to vector<2x32xf32>
    %413 = arith.addf %412, %411 : vector<2x32xf32>
    %414 = arith.divf %412, %413 : vector<2x32xf32>
    %415 = vector.extract_strided_slice %402 {offsets = [0, 64], sizes = [2, 32], strides = [1, 1]} : vector<2x128xf32> to vector<2x32xf32>
    %416 = math.tanh %415 : vector<2x32xf32>
    %417 = vector.extract_strided_slice %402 {offsets = [0, 96], sizes = [2, 32], strides = [1, 1]} : vector<2x128xf32> to vector<2x32xf32>
    %418 = arith.negf %417 : vector<2x32xf32>
    %419 = math.exp %418 : vector<2x32xf32>
    %cst_96 = arith.constant 1.000000e+00 : f32
    %420 = vector.broadcast %cst_96 : f32 to vector<2x32xf32>
    %421 = arith.addf %420, %419 : vector<2x32xf32>
    %422 = arith.divf %420, %421 : vector<2x32xf32>
    %423 = arith.mulf %414, %367 : vector<2x32xf32>
    %424 = arith.mulf %408, %416 : vector<2x32xf32>
    %425 = arith.addf %423, %424 : vector<2x32xf32>
    %426 = math.tanh %425 : vector<2x32xf32>
    %427 = arith.mulf %422, %426 : vector<2x32xf32>
    %c2_97 = arith.constant 2 : index
    %c32_98 = arith.constant 32 : index
    %428 = vector.load %arg4[%c2_97, %c32_98] : memref<16x64xf32, #tpu.memory_space<vmem>>, vector<2x32xf32>
    tpu.vector_store %arg4[%c2_97, %c32_98], %427 {strides = array<i32>} : memref<16x64xf32, #tpu.memory_space<vmem>>, vector<2x32xf32>,
    %429 = vector.extract_strided_slice %7 {offsets = [14, 0], sizes = [2, 128], strides = [1, 1]} : vector<16x128xf32> to vector<2x128xf32>
    %cst_99 = arith.constant dense<0.000000e+00> : vector<2x128xf32>
    %430 = tpu.matmul %398, %16, %cst_99 {dimension_numbers = #tpu.dot_dimension_numbers<[1], [0], [0], [1], [0, 0, 1, 1], [], []>} : vector<2x32xf32>, vector<32x128xf32>, vector<2x128xf32> -> vector<2x128xf32>
    %431 = arith.addf %429, %430 : vector<2x128xf32>
    %432 = vector.extract_strided_slice %431 {offsets = [0, 0], sizes = [2, 32], strides = [1, 1]} : vector<2x128xf32> to vector<2x32xf32>
    %433 = arith.negf %432 : vector<2x32xf32>
    %434 = math.exp %433 : vector<2x32xf32>
    %cst_100 = arith.constant 1.000000e+00 : f32
    %435 = vector.broadcast %cst_100 : f32 to vector<2x32xf32>
    %436 = arith.addf %435, %434 : vector<2x32xf32>
    %437 = arith.divf %435, %436 : vector<2x32xf32>
    %438 = vector.extract_strided_slice %431 {offsets = [0, 32], sizes = [2, 32], strides = [1, 1]} : vector<2x128xf32> to vector<2x32xf32>
    %439 = arith.negf %438 : vector<2x32xf32>
    %440 = math.exp %439 : vector<2x32xf32>
    %cst_101 = arith.constant 1.000000e+00 : f32
    %441 = vector.broadcast %cst_101 : f32 to vector<2x32xf32>
    %442 = arith.addf %441, %440 : vector<2x32xf32>
    %443 = arith.divf %441, %442 : vector<2x32xf32>
    %444 = vector.extract_strided_slice %431 {offsets = [0, 64], sizes = [2, 32], strides = [1, 1]} : vector<2x128xf32> to vector<2x32xf32>
    %445 = math.tanh %444 : vector<2x32xf32>
    %446 = vector.extract_strided_slice %431 {offsets = [0, 96], sizes = [2, 32], strides = [1, 1]} : vector<2x128xf32> to vector<2x32xf32>
    %447 = arith.negf %446 : vector<2x32xf32>
    %448 = math.exp %447 : vector<2x32xf32>
    %cst_102 = arith.constant 1.000000e+00 : f32
    %449 = vector.broadcast %cst_102 : f32 to vector<2x32xf32>
    %450 = arith.addf %449, %448 : vector<2x32xf32>
    %451 = arith.divf %449, %450 : vector<2x32xf32>
    %452 = arith.mulf %443, %396 : vector<2x32xf32>
    %453 = arith.mulf %437, %445 : vector<2x32xf32>
    %454 = arith.addf %452, %453 : vector<2x32xf32>
    %455 = math.tanh %454 : vector<2x32xf32>
    %456 = arith.mulf %451, %455 : vector<2x32xf32>
    %c14_103 = arith.constant 14 : index
    %c0_104 = arith.constant 0 : index
    %457 = vector.load %arg4[%c14_103, %c0_104] : memref<16x64xf32, #tpu.memory_space<vmem>>, vector<2x32xf32>
    tpu.vector_store %arg4[%c14_103, %c0_104], %456 {strides = array<i32>} : memref<16x64xf32, #tpu.memory_space<vmem>>, vector<2x32xf32>,
    %458 = vector.extract_strided_slice %14 {offsets = [0, 0], sizes = [2, 128], strides = [1, 1]} : vector<16x128xf32> to vector<2x128xf32>
    %cst_105 = arith.constant dense<0.000000e+00> : vector<2x128xf32>
    %459 = tpu.matmul %427, %18, %cst_105 {dimension_numbers = #tpu.dot_dimension_numbers<[1], [0], [0], [1], [0, 0, 1, 1], [], []>} : vector<2x32xf32>, vector<32x128xf32>, vector<2x128xf32> -> vector<2x128xf32>
    %460 = arith.addf %458, %459 : vector<2x128xf32>
    %461 = vector.extract_strided_slice %460 {offsets = [0, 0], sizes = [2, 32], strides = [1, 1]} : vector<2x128xf32> to vector<2x32xf32>
    %462 = arith.negf %461 : vector<2x32xf32>
    %463 = math.exp %462 : vector<2x32xf32>
    %cst_106 = arith.constant 1.000000e+00 : f32
    %464 = vector.broadcast %cst_106 : f32 to vector<2x32xf32>
    %465 = arith.addf %464, %463 : vector<2x32xf32>
    %466 = arith.divf %464, %465 : vector<2x32xf32>
    %467 = vector.extract_strided_slice %460 {offsets = [0, 32], sizes = [2, 32], strides = [1, 1]} : vector<2x128xf32> to vector<2x32xf32>
    %468 = arith.negf %467 : vector<2x32xf32>
    %469 = math.exp %468 : vector<2x32xf32>
    %cst_107 = arith.constant 1.000000e+00 : f32
    %470 = vector.broadcast %cst_107 : f32 to vector<2x32xf32>
    %471 = arith.addf %470, %469 : vector<2x32xf32>
    %472 = arith.divf %470, %471 : vector<2x32xf32>
    %473 = vector.extract_strided_slice %460 {offsets = [0, 64], sizes = [2, 32], strides = [1, 1]} : vector<2x128xf32> to vector<2x32xf32>
    %474 = math.tanh %473 : vector<2x32xf32>
    %475 = vector.extract_strided_slice %460 {offsets = [0, 96], sizes = [2, 32], strides = [1, 1]} : vector<2x128xf32> to vector<2x32xf32>
    %476 = arith.negf %475 : vector<2x32xf32>
    %477 = math.exp %476 : vector<2x32xf32>
    %cst_108 = arith.constant 1.000000e+00 : f32
    %478 = vector.broadcast %cst_108 : f32 to vector<2x32xf32>
    %479 = arith.addf %478, %477 : vector<2x32xf32>
    %480 = arith.divf %478, %479 : vector<2x32xf32>
    %481 = arith.mulf %472, %425 : vector<2x32xf32>
    %482 = arith.mulf %466, %474 : vector<2x32xf32>
    %483 = arith.addf %481, %482 : vector<2x32xf32>
    %484 = math.tanh %483 : vector<2x32xf32>
    %485 = arith.mulf %480, %484 : vector<2x32xf32>
    %c0_109 = arith.constant 0 : index
    %c32_110 = arith.constant 32 : index
    %486 = vector.load %arg4[%c0_109, %c32_110] : memref<16x64xf32, #tpu.memory_space<vmem>>, vector<2x32xf32>
    tpu.vector_store %arg4[%c0_109, %c32_110], %485 {strides = array<i32>} : memref<16x64xf32, #tpu.memory_space<vmem>>, vector<2x32xf32>,
    return
  }
}

module attributes {stable_mosaic.version = 11 : i64} {
  func.func @_lstm_layer_kernel(%arg0: memref<16x64xf32, #tpu.memory_space<vmem>>, %arg1: memref<2x64x128xf32, #tpu.memory_space<vmem>>, %arg2: memref<2x32x128xf32, #tpu.memory_space<vmem>>, %arg3: memref<2x1x128xf32, #tpu.memory_space<vmem>>, %arg4: memref<16x64xf32, #tpu.memory_space<vmem>>) attributes {dimension_semantics = [], scalar_prefetch = 0 : i64, scratch_operands = 0 : i64, tpu.core_type = #tpu.core_type<tc>} {
    %c0 = arith.constant 0 : index
    %c0_0 = arith.constant 0 : index
    %0 = vector.load %arg0[%c0, %c0_0] : memref<16x64xf32, #tpu.memory_space<vmem>>, vector<16x64xf32>
    %c0_1 = arith.constant 0 : index
    %c0_2 = arith.constant 0 : index
    %c0_3 = arith.constant 0 : index
    %1 = vector.load %arg1[%c0_1, %c0_2, %c0_3] : memref<2x64x128xf32, #tpu.memory_space<vmem>>, vector<1x64x128xf32>
    %2 = vector.shape_cast %1 : vector<1x64x128xf32> to vector<64x128xf32>
    %cst = arith.constant dense<0.000000e+00> : vector<16x128xf32>
    %3 = tpu.matmul %0, %2, %cst {dimension_numbers = #tpu.dot_dimension_numbers<[1], [0], [0], [1], [0, 0, 1, 1], [], []>} : vector<16x64xf32>, vector<64x128xf32>, vector<16x128xf32> -> vector<16x128xf32>
    %c0_4 = arith.constant 0 : index
    %c0_5 = arith.constant 0 : index
    %c0_6 = arith.constant 0 : index
    %4 = vector.load %arg3[%c0_4, %c0_5, %c0_6] : memref<2x1x128xf32, #tpu.memory_space<vmem>>, vector<1x1x128xf32>
    %5 = vector.shape_cast %4 : vector<1x1x128xf32> to vector<1x128xf32>
    %6 = vector.broadcast %5 : vector<1x128xf32> to vector<16x128xf32>
    %7 = arith.addf %3, %6 : vector<16x128xf32>
    %c1 = arith.constant 1 : index
    %c0_7 = arith.constant 0 : index
    %c0_8 = arith.constant 0 : index
    %8 = vector.load %arg1[%c1, %c0_7, %c0_8] : memref<2x64x128xf32, #tpu.memory_space<vmem>>, vector<1x64x128xf32>
    %9 = vector.shape_cast %8 : vector<1x64x128xf32> to vector<64x128xf32>
    %cst_9 = arith.constant dense<0.000000e+00> : vector<16x128xf32>
    %10 = tpu.matmul %0, %9, %cst_9 {dimension_numbers = #tpu.dot_dimension_numbers<[1], [0], [0], [1], [0, 0, 1, 1], [], []>} : vector<16x64xf32>, vector<64x128xf32>, vector<16x128xf32> -> vector<16x128xf32>
    %c1_10 = arith.constant 1 : index
    %c0_11 = arith.constant 0 : index
    %c0_12 = arith.constant 0 : index
    %11 = vector.load %arg3[%c1_10, %c0_11, %c0_12] : memref<2x1x128xf32, #tpu.memory_space<vmem>>, vector<1x1x128xf32>
    %12 = vector.shape_cast %11 : vector<1x1x128xf32> to vector<1x128xf32>
    %13 = vector.broadcast %12 : vector<1x128xf32> to vector<16x128xf32>
    %14 = arith.addf %10, %13 : vector<16x128xf32>
    %c0_13 = arith.constant 0 : index
    %c0_14 = arith.constant 0 : index
    %c0_15 = arith.constant 0 : index
    %15 = vector.load %arg2[%c0_13, %c0_14, %c0_15] : memref<2x32x128xf32, #tpu.memory_space<vmem>>, vector<1x32x128xf32>
    %16 = vector.shape_cast %15 : vector<1x32x128xf32> to vector<32x128xf32>
    %c1_16 = arith.constant 1 : index
    %c0_17 = arith.constant 0 : index
    %c0_18 = arith.constant 0 : index
    %17 = vector.load %arg2[%c1_16, %c0_17, %c0_18] : memref<2x32x128xf32, #tpu.memory_space<vmem>>, vector<1x32x128xf32>
    %18 = vector.shape_cast %17 : vector<1x32x128xf32> to vector<32x128xf32>
    %cst_19 = arith.constant 0.000000e+00 : f32
    %19 = vector.broadcast %cst_19 : f32 to vector<2x32xf32>
    %cst_20 = arith.constant 0.000000e+00 : f32
    %20 = vector.broadcast %cst_20 : f32 to vector<2x32xf32>
    %cst_21 = arith.constant 0.000000e+00 : f32
    %21 = vector.broadcast %cst_21 : f32 to vector<2x32xf32>
    %cst_22 = arith.constant 0.000000e+00 : f32
    %22 = vector.broadcast %cst_22 : f32 to vector<2x32xf32>
    %23 = vector.extract_strided_slice %7 {offsets = [0, 0], sizes = [2, 128], strides = [1, 1]} : vector<16x128xf32> to vector<2x128xf32>
    %cst_23 = arith.constant dense<0.000000e+00> : vector<2x128xf32>
    %24 = tpu.matmul %19, %16, %cst_23 {dimension_numbers = #tpu.dot_dimension_numbers<[1], [0], [0], [1], [0, 0, 1, 1], [], []>} : vector<2x32xf32>, vector<32x128xf32>, vector<2x128xf32> -> vector<2x128xf32>
    %25 = arith.addf %23, %24 : vector<2x128xf32>
    %26 = vector.extract_strided_slice %25 {offsets = [0, 0], sizes = [2, 32], strides = [1, 1]} : vector<2x128xf32> to vector<2x32xf32>
    %27 = arith.negf %26 : vector<2x32xf32>
    %28 = math.exp %27 : vector<2x32xf32>
    %cst_24 = arith.constant 1.000000e+00 : f32
    %29 = vector.broadcast %cst_24 : f32 to vector<2x32xf32>
    %30 = arith.addf %29, %28 : vector<2x32xf32>
    %31 = arith.divf %29, %30 : vector<2x32xf32>
    %32 = vector.extract_strided_slice %25 {offsets = [0, 32], sizes = [2, 32], strides = [1, 1]} : vector<2x128xf32> to vector<2x32xf32>
    %33 = arith.negf %32 : vector<2x32xf32>
    %34 = math.exp %33 : vector<2x32xf32>
    %cst_25 = arith.constant 1.000000e+00 : f32
    %35 = vector.broadcast %cst_25 : f32 to vector<2x32xf32>
    %36 = arith.addf %35, %34 : vector<2x32xf32>
    %37 = arith.divf %35, %36 : vector<2x32xf32>
    %38 = vector.extract_strided_slice %25 {offsets = [0, 64], sizes = [2, 32], strides = [1, 1]} : vector<2x128xf32> to vector<2x32xf32>
    %39 = math.tanh %38 : vector<2x32xf32>
    %40 = vector.extract_strided_slice %25 {offsets = [0, 96], sizes = [2, 32], strides = [1, 1]} : vector<2x128xf32> to vector<2x32xf32>
    %41 = arith.negf %40 : vector<2x32xf32>
    %42 = math.exp %41 : vector<2x32xf32>
    %cst_26 = arith.constant 1.000000e+00 : f32
    %43 = vector.broadcast %cst_26 : f32 to vector<2x32xf32>
    %44 = arith.addf %43, %42 : vector<2x32xf32>
    %45 = arith.divf %43, %44 : vector<2x32xf32>
    %46 = arith.mulf %37, %20 : vector<2x32xf32>
    %47 = arith.mulf %31, %39 : vector<2x32xf32>
    %48 = arith.addf %46, %47 : vector<2x32xf32>
    %49 = math.tanh %48 : vector<2x32xf32>
    %50 = arith.mulf %45, %49 : vector<2x32xf32>
    %c0_27 = arith.constant 0 : index
    %c0_28 = arith.constant 0 : index
    %51 = vector.load %arg4[%c0_27, %c0_28] : memref<16x64xf32, #tpu.memory_space<vmem>>, vector<2x32xf32>
    tpu.vector_store %arg4[%c0_27, %c0_28], %50 {strides = array<i32>} : memref<16x64xf32, #tpu.memory_space<vmem>>, vector<2x32xf32>,
    %52 = vector.extract_strided_slice %14 {offsets = [14, 0], sizes = [2, 128], strides = [1, 1]} : vector<16x128xf32> to vector<2x128xf32>
    %cst_29 = arith.constant dense<0.000000e+00> : vector<2x128xf32>
    %53 = tpu.matmul %21, %18, %cst_29 {dimension_numbers = #tpu.dot_dimension_numbers<[1], [0], [0], [1], [0, 0, 1, 1], [], []>} : vector<2x32xf32>, vector<32x128xf32>, vector<2x128xf32> -> vector<2x128xf32>
    %54 = arith.addf %52, %53 : vector<2x128xf32>
    %55 = vector.extract_strided_slice %54 {offsets = [0, 0], sizes = [2, 32], strides = [1, 1]} : vector<2x128xf32> to vector<2x32xf32>
    %56 = arith.negf %55 : vector<2x32xf32>
    %57 = math.exp %56 : vector<2x32xf32>
    %cst_30 = arith.constant 1.000000e+00 : f32
    %58 = vector.broadcast %cst_30 : f32 to vector<2x32xf32>
    %59 = arith.addf %58, %57 : vector<2x32xf32>
    %60 = arith.divf %58, %59 : vector<2x32xf32>
    %61 = vector.extract_strided_slice %54 {offsets = [0, 32], sizes = [2, 32], strides = [1, 1]} : vector<2x128xf32> to vector<2x32xf32>
    %62 = arith.negf %61 : vector<2x32xf32>
    %63 = math.exp %62 : vector<2x32xf32>
    %cst_31 = arith.constant 1.000000e+00 : f32
    %64 = vector.broadcast %cst_31 : f32 to vector<2x32xf32>
    %65 = arith.addf %64, %63 : vector<2x32xf32>
    %66 = arith.divf %64, %65 : vector<2x32xf32>
    %67 = vector.extract_strided_slice %54 {offsets = [0, 64], sizes = [2, 32], strides = [1, 1]} : vector<2x128xf32> to vector<2x32xf32>
    %68 = math.tanh %67 : vector<2x32xf32>
    %69 = vector.extract_strided_slice %54 {offsets = [0, 96], sizes = [2, 32], strides = [1, 1]} : vector<2x128xf32> to vector<2x32xf32>
    %70 = arith.negf %69 : vector<2x32xf32>
    %71 = math.exp %70 : vector<2x32xf32>
    %cst_32 = arith.constant 1.000000e+00 : f32
    %72 = vector.broadcast %cst_32 : f32 to vector<2x32xf32>
    %73 = arith.addf %72, %71 : vector<2x32xf32>
    %74 = arith.divf %72, %73 : vector<2x32xf32>
    %75 = arith.mulf %66, %22 : vector<2x32xf32>
    %76 = arith.mulf %60, %68 : vector<2x32xf32>
    %77 = arith.addf %75, %76 : vector<2x32xf32>
    %78 = math.tanh %77 : vector<2x32xf32>
    %79 = arith.mulf %74, %78 : vector<2x32xf32>
    %c14 = arith.constant 14 : index
    %c32 = arith.constant 32 : index
    %80 = vector.load %arg4[%c14, %c32] : memref<16x64xf32, #tpu.memory_space<vmem>>, vector<2x32xf32>
    tpu.vector_store %arg4[%c14, %c32], %79 {strides = array<i32>} : memref<16x64xf32, #tpu.memory_space<vmem>>, vector<2x32xf32>,
    %81 = vector.extract_strided_slice %7 {offsets = [2, 0], sizes = [2, 128], strides = [1, 1]} : vector<16x128xf32> to vector<2x128xf32>
    %cst_33 = arith.constant dense<0.000000e+00> : vector<2x128xf32>
    %82 = tpu.matmul %50, %16, %cst_33 {dimension_numbers = #tpu.dot_dimension_numbers<[1], [0], [0], [1], [0, 0, 1, 1], [], []>} : vector<2x32xf32>, vector<32x128xf32>, vector<2x128xf32> -> vector<2x128xf32>
    %83 = arith.addf %81, %82 : vector<2x128xf32>
    %84 = vector.extract_strided_slice %83 {offsets = [0, 0], sizes = [2, 32], strides = [1, 1]} : vector<2x128xf32> to vector<2x32xf32>
    %85 = arith.negf %84 : vector<2x32xf32>
    %86 = math.exp %85 : vector<2x32xf32>
    %cst_34 = arith.constant 1.000000e+00 : f32
    %87 = vector.broadcast %cst_34 : f32 to vector<2x32xf32>
    %88 = arith.addf %87, %86 : vector<2x32xf32>
    %89 = arith.divf %87, %88 : vector<2x32xf32>
    %90 = vector.extract_strided_slice %83 {offsets = [0, 32], sizes = [2, 32], strides = [1, 1]} : vector<2x128xf32> to vector<2x32xf32>
    %91 = arith.negf %90 : vector<2x32xf32>
    %92 = math.exp %91 : vector<2x32xf32>
    %cst_35 = arith.constant 1.000000e+00 : f32
    %93 = vector.broadcast %cst_35 : f32 to vector<2x32xf32>
    %94 = arith.addf %93, %92 : vector<2x32xf32>
    %95 = arith.divf %93, %94 : vector<2x32xf32>
    %96 = vector.extract_strided_slice %83 {offsets = [0, 64], sizes = [2, 32], strides = [1, 1]} : vector<2x128xf32> to vector<2x32xf32>
    %97 = math.tanh %96 : vector<2x32xf32>
    %98 = vector.extract_strided_slice %83 {offsets = [0, 96], sizes = [2, 32], strides = [1, 1]} : vector<2x128xf32> to vector<2x32xf32>
    %99 = arith.negf %98 : vector<2x32xf32>
    %100 = math.exp %99 : vector<2x32xf32>
    %cst_36 = arith.constant 1.000000e+00 : f32
    %101 = vector.broadcast %cst_36 : f32 to vector<2x32xf32>
    %102 = arith.addf %101, %100 : vector<2x32xf32>
    %103 = arith.divf %101, %102 : vector<2x32xf32>
    %104 = arith.mulf %95, %48 : vector<2x32xf32>
    %105 = arith.mulf %89, %97 : vector<2x32xf32>
    %106 = arith.addf %104, %105 : vector<2x32xf32>
    %107 = math.tanh %106 : vector<2x32xf32>
    %108 = arith.mulf %103, %107 : vector<2x32xf32>
    %c2 = arith.constant 2 : index
    %c0_37 = arith.constant 0 : index
    %109 = vector.load %arg4[%c2, %c0_37] : memref<16x64xf32, #tpu.memory_space<vmem>>, vector<2x32xf32>
    tpu.vector_store %arg4[%c2, %c0_37], %108 {strides = array<i32>} : memref<16x64xf32, #tpu.memory_space<vmem>>, vector<2x32xf32>,
    %110 = vector.extract_strided_slice %14 {offsets = [12, 0], sizes = [2, 128], strides = [1, 1]} : vector<16x128xf32> to vector<2x128xf32>
    %cst_38 = arith.constant dense<0.000000e+00> : vector<2x128xf32>
    %111 = tpu.matmul %79, %18, %cst_38 {dimension_numbers = #tpu.dot_dimension_numbers<[1], [0], [0], [1], [0, 0, 1, 1], [], []>} : vector<2x32xf32>, vector<32x128xf32>, vector<2x128xf32> -> vector<2x128xf32>
    %112 = arith.addf %110, %111 : vector<2x128xf32>
    %113 = vector.extract_strided_slice %112 {offsets = [0, 0], sizes = [2, 32], strides = [1, 1]} : vector<2x128xf32> to vector<2x32xf32>
    %114 = arith.negf %113 : vector<2x32xf32>
    %115 = math.exp %114 : vector<2x32xf32>
    %cst_39 = arith.constant 1.000000e+00 : f32
    %116 = vector.broadcast %cst_39 : f32 to vector<2x32xf32>
    %117 = arith.addf %116, %115 : vector<2x32xf32>
    %118 = arith.divf %116, %117 : vector<2x32xf32>
    %119 = vector.extract_strided_slice %112 {offsets = [0, 32], sizes = [2, 32], strides = [1, 1]} : vector<2x128xf32> to vector<2x32xf32>
    %120 = arith.negf %119 : vector<2x32xf32>
    %121 = math.exp %120 : vector<2x32xf32>
    %cst_40 = arith.constant 1.000000e+00 : f32
    %122 = vector.broadcast %cst_40 : f32 to vector<2x32xf32>
    %123 = arith.addf %122, %121 : vector<2x32xf32>
    %124 = arith.divf %122, %123 : vector<2x32xf32>
    %125 = vector.extract_strided_slice %112 {offsets = [0, 64], sizes = [2, 32], strides = [1, 1]} : vector<2x128xf32> to vector<2x32xf32>
    %126 = math.tanh %125 : vector<2x32xf32>
    %127 = vector.extract_strided_slice %112 {offsets = [0, 96], sizes = [2, 32], strides = [1, 1]} : vector<2x128xf32> to vector<2x32xf32>
    %128 = arith.negf %127 : vector<2x32xf32>
    %129 = math.exp %128 : vector<2x32xf32>
    %cst_41 = arith.constant 1.000000e+00 : f32
    %130 = vector.broadcast %cst_41 : f32 to vector<2x32xf32>
    %131 = arith.addf %130, %129 : vector<2x32xf32>
    %132 = arith.divf %130, %131 : vector<2x32xf32>
    %133 = arith.mulf %124, %77 : vector<2x32xf32>
    %134 = arith.mulf %118, %126 : vector<2x32xf32>
    %135 = arith.addf %133, %134 : vector<2x32xf32>
    %136 = math.tanh %135 : vector<2x32xf32>
    %137 = arith.mulf %132, %136 : vector<2x32xf32>
    %c12 = arith.constant 12 : index
    %c32_42 = arith.constant 32 : index
    %138 = vector.load %arg4[%c12, %c32_42] : memref<16x64xf32, #tpu.memory_space<vmem>>, vector<2x32xf32>
    tpu.vector_store %arg4[%c12, %c32_42], %137 {strides = array<i32>} : memref<16x64xf32, #tpu.memory_space<vmem>>, vector<2x32xf32>,
    %139 = vector.extract_strided_slice %7 {offsets = [4, 0], sizes = [2, 128], strides = [1, 1]} : vector<16x128xf32> to vector<2x128xf32>
    %cst_43 = arith.constant dense<0.000000e+00> : vector<2x128xf32>
    %140 = tpu.matmul %108, %16, %cst_43 {dimension_numbers = #tpu.dot_dimension_numbers<[1], [0], [0], [1], [0, 0, 1, 1], [], []>} : vector<2x32xf32>, vector<32x128xf32>, vector<2x128xf32> -> vector<2x128xf32>
    %141 = arith.addf %139, %140 : vector<2x128xf32>
    %142 = vector.extract_strided_slice %141 {offsets = [0, 0], sizes = [2, 32], strides = [1, 1]} : vector<2x128xf32> to vector<2x32xf32>
    %143 = arith.negf %142 : vector<2x32xf32>
    %144 = math.exp %143 : vector<2x32xf32>
    %cst_44 = arith.constant 1.000000e+00 : f32
    %145 = vector.broadcast %cst_44 : f32 to vector<2x32xf32>
    %146 = arith.addf %145, %144 : vector<2x32xf32>
    %147 = arith.divf %145, %146 : vector<2x32xf32>
    %148 = vector.extract_strided_slice %141 {offsets = [0, 32], sizes = [2, 32], strides = [1, 1]} : vector<2x128xf32> to vector<2x32xf32>
    %149 = arith.negf %148 : vector<2x32xf32>
    %150 = math.exp %149 : vector<2x32xf32>
    %cst_45 = arith.constant 1.000000e+00 : f32
    %151 = vector.broadcast %cst_45 : f32 to vector<2x32xf32>
    %152 = arith.addf %151, %150 : vector<2x32xf32>
    %153 = arith.divf %151, %152 : vector<2x32xf32>
    %154 = vector.extract_strided_slice %141 {offsets = [0, 64], sizes = [2, 32], strides = [1, 1]} : vector<2x128xf32> to vector<2x32xf32>
    %155 = math.tanh %154 : vector<2x32xf32>
    %156 = vector.extract_strided_slice %141 {offsets = [0, 96], sizes = [2, 32], strides = [1, 1]} : vector<2x128xf32> to vector<2x32xf32>
    %157 = arith.negf %156 : vector<2x32xf32>
    %158 = math.exp %157 : vector<2x32xf32>
    %cst_46 = arith.constant 1.000000e+00 : f32
    %159 = vector.broadcast %cst_46 : f32 to vector<2x32xf32>
    %160 = arith.addf %159, %158 : vector<2x32xf32>
    %161 = arith.divf %159, %160 : vector<2x32xf32>
    %162 = arith.mulf %153, %106 : vector<2x32xf32>
    %163 = arith.mulf %147, %155 : vector<2x32xf32>
    %164 = arith.addf %162, %163 : vector<2x32xf32>
    %165 = math.tanh %164 : vector<2x32xf32>
    %166 = arith.mulf %161, %165 : vector<2x32xf32>
    %c4 = arith.constant 4 : index
    %c0_47 = arith.constant 0 : index
    %167 = vector.load %arg4[%c4, %c0_47] : memref<16x64xf32, #tpu.memory_space<vmem>>, vector<2x32xf32>
    tpu.vector_store %arg4[%c4, %c0_47], %166 {strides = array<i32>} : memref<16x64xf32, #tpu.memory_space<vmem>>, vector<2x32xf32>,
    %168 = vector.extract_strided_slice %14 {offsets = [10, 0], sizes = [2, 128], strides = [1, 1]} : vector<16x128xf32> to vector<2x128xf32>
    %cst_48 = arith.constant dense<0.000000e+00> : vector<2x128xf32>
    %169 = tpu.matmul %137, %18, %cst_48 {dimension_numbers = #tpu.dot_dimension_numbers<[1], [0], [0], [1], [0, 0, 1, 1], [], []>} : vector<2x32xf32>, vector<32x128xf32>, vector<2x128xf32> -> vector<2x128xf32>
    %170 = arith.addf %168, %169 : vector<2x128xf32>
    %171 = vector.extract_strided_slice %170 {offsets = [0, 0], sizes = [2, 32], strides = [1, 1]} : vector<2x128xf32> to vector<2x32xf32>
    %172 = arith.negf %171 : vector<2x32xf32>
    %173 = math.exp %172 : vector<2x32xf32>
    %cst_49 = arith.constant 1.000000e+00 : f32
    %174 = vector.broadcast %cst_49 : f32 to vector<2x32xf32>
    %175 = arith.addf %174, %173 : vector<2x32xf32>
    %176 = arith.divf %174, %175 : vector<2x32xf32>
    %177 = vector.extract_strided_slice %170 {offsets = [0, 32], sizes = [2, 32], strides = [1, 1]} : vector<2x128xf32> to vector<2x32xf32>
    %178 = arith.negf %177 : vector<2x32xf32>
    %179 = math.exp %178 : vector<2x32xf32>
    %cst_50 = arith.constant 1.000000e+00 : f32
    %180 = vector.broadcast %cst_50 : f32 to vector<2x32xf32>
    %181 = arith.addf %180, %179 : vector<2x32xf32>
    %182 = arith.divf %180, %181 : vector<2x32xf32>
    %183 = vector.extract_strided_slice %170 {offsets = [0, 64], sizes = [2, 32], strides = [1, 1]} : vector<2x128xf32> to vector<2x32xf32>
    %184 = math.tanh %183 : vector<2x32xf32>
    %185 = vector.extract_strided_slice %170 {offsets = [0, 96], sizes = [2, 32], strides = [1, 1]} : vector<2x128xf32> to vector<2x32xf32>
    %186 = arith.negf %185 : vector<2x32xf32>
    %187 = math.exp %186 : vector<2x32xf32>
    %cst_51 = arith.constant 1.000000e+00 : f32
    %188 = vector.broadcast %cst_51 : f32 to vector<2x32xf32>
    %189 = arith.addf %188, %187 : vector<2x32xf32>
    %190 = arith.divf %188, %189 : vector<2x32xf32>
    %191 = arith.mulf %182, %135 : vector<2x32xf32>
    %192 = arith.mulf %176, %184 : vector<2x32xf32>
    %193 = arith.addf %191, %192 : vector<2x32xf32>
    %194 = math.tanh %193 : vector<2x32xf32>
    %195 = arith.mulf %190, %194 : vector<2x32xf32>
    %c10 = arith.constant 10 : index
    %c32_52 = arith.constant 32 : index
    %196 = vector.load %arg4[%c10, %c32_52] : memref<16x64xf32, #tpu.memory_space<vmem>>, vector<2x32xf32>
    tpu.vector_store %arg4[%c10, %c32_52], %195 {strides = array<i32>} : memref<16x64xf32, #tpu.memory_space<vmem>>, vector<2x32xf32>,
    %197 = vector.extract_strided_slice %7 {offsets = [6, 0], sizes = [2, 128], strides = [1, 1]} : vector<16x128xf32> to vector<2x128xf32>
    %cst_53 = arith.constant dense<0.000000e+00> : vector<2x128xf32>
    %198 = tpu.matmul %166, %16, %cst_53 {dimension_numbers = #tpu.dot_dimension_numbers<[1], [0], [0], [1], [0, 0, 1, 1], [], []>} : vector<2x32xf32>, vector<32x128xf32>, vector<2x128xf32> -> vector<2x128xf32>
    %199 = arith.addf %197, %198 : vector<2x128xf32>
    %200 = vector.extract_strided_slice %199 {offsets = [0, 0], sizes = [2, 32], strides = [1, 1]} : vector<2x128xf32> to vector<2x32xf32>
    %201 = arith.negf %200 : vector<2x32xf32>
    %202 = math.exp %201 : vector<2x32xf32>
    %cst_54 = arith.constant 1.000000e+00 : f32
    %203 = vector.broadcast %cst_54 : f32 to vector<2x32xf32>
    %204 = arith.addf %203, %202 : vector<2x32xf32>
    %205 = arith.divf %203, %204 : vector<2x32xf32>
    %206 = vector.extract_strided_slice %199 {offsets = [0, 32], sizes = [2, 32], strides = [1, 1]} : vector<2x128xf32> to vector<2x32xf32>
    %207 = arith.negf %206 : vector<2x32xf32>
    %208 = math.exp %207 : vector<2x32xf32>
    %cst_55 = arith.constant 1.000000e+00 : f32
    %209 = vector.broadcast %cst_55 : f32 to vector<2x32xf32>
    %210 = arith.addf %209, %208 : vector<2x32xf32>
    %211 = arith.divf %209, %210 : vector<2x32xf32>
    %212 = vector.extract_strided_slice %199 {offsets = [0, 64], sizes = [2, 32], strides = [1, 1]} : vector<2x128xf32> to vector<2x32xf32>
    %213 = math.tanh %212 : vector<2x32xf32>
    %214 = vector.extract_strided_slice %199 {offsets = [0, 96], sizes = [2, 32], strides = [1, 1]} : vector<2x128xf32> to vector<2x32xf32>
    %215 = arith.negf %214 : vector<2x32xf32>
    %216 = math.exp %215 : vector<2x32xf32>
    %cst_56 = arith.constant 1.000000e+00 : f32
    %217 = vector.broadcast %cst_56 : f32 to vector<2x32xf32>
    %218 = arith.addf %217, %216 : vector<2x32xf32>
    %219 = arith.divf %217, %218 : vector<2x32xf32>
    %220 = arith.mulf %211, %164 : vector<2x32xf32>
    %221 = arith.mulf %205, %213 : vector<2x32xf32>
    %222 = arith.addf %220, %221 : vector<2x32xf32>
    %223 = math.tanh %222 : vector<2x32xf32>
    %224 = arith.mulf %219, %223 : vector<2x32xf32>
    %c6 = arith.constant 6 : index
    %c0_57 = arith.constant 0 : index
    %225 = vector.load %arg4[%c6, %c0_57] : memref<16x64xf32, #tpu.memory_space<vmem>>, vector<2x32xf32>
    tpu.vector_store %arg4[%c6, %c0_57], %224 {strides = array<i32>} : memref<16x64xf32, #tpu.memory_space<vmem>>, vector<2x32xf32>,
    %226 = vector.extract_strided_slice %14 {offsets = [8, 0], sizes = [2, 128], strides = [1, 1]} : vector<16x128xf32> to vector<2x128xf32>
    %cst_58 = arith.constant dense<0.000000e+00> : vector<2x128xf32>
    %227 = tpu.matmul %195, %18, %cst_58 {dimension_numbers = #tpu.dot_dimension_numbers<[1], [0], [0], [1], [0, 0, 1, 1], [], []>} : vector<2x32xf32>, vector<32x128xf32>, vector<2x128xf32> -> vector<2x128xf32>
    %228 = arith.addf %226, %227 : vector<2x128xf32>
    %229 = vector.extract_strided_slice %228 {offsets = [0, 0], sizes = [2, 32], strides = [1, 1]} : vector<2x128xf32> to vector<2x32xf32>
    %230 = arith.negf %229 : vector<2x32xf32>
    %231 = math.exp %230 : vector<2x32xf32>
    %cst_59 = arith.constant 1.000000e+00 : f32
    %232 = vector.broadcast %cst_59 : f32 to vector<2x32xf32>
    %233 = arith.addf %232, %231 : vector<2x32xf32>
    %234 = arith.divf %232, %233 : vector<2x32xf32>
    %235 = vector.extract_strided_slice %228 {offsets = [0, 32], sizes = [2, 32], strides = [1, 1]} : vector<2x128xf32> to vector<2x32xf32>
    %236 = arith.negf %235 : vector<2x32xf32>
    %237 = math.exp %236 : vector<2x32xf32>
    %cst_60 = arith.constant 1.000000e+00 : f32
    %238 = vector.broadcast %cst_60 : f32 to vector<2x32xf32>
    %239 = arith.addf %238, %237 : vector<2x32xf32>
    %240 = arith.divf %238, %239 : vector<2x32xf32>
    %241 = vector.extract_strided_slice %228 {offsets = [0, 64], sizes = [2, 32], strides = [1, 1]} : vector<2x128xf32> to vector<2x32xf32>
    %242 = math.tanh %241 : vector<2x32xf32>
    %243 = vector.extract_strided_slice %228 {offsets = [0, 96], sizes = [2, 32], strides = [1, 1]} : vector<2x128xf32> to vector<2x32xf32>
    %244 = arith.negf %243 : vector<2x32xf32>
    %245 = math.exp %244 : vector<2x32xf32>
    %cst_61 = arith.constant 1.000000e+00 : f32
    %246 = vector.broadcast %cst_61 : f32 to vector<2x32xf32>
    %247 = arith.addf %246, %245 : vector<2x32xf32>
    %248 = arith.divf %246, %247 : vector<2x32xf32>
    %249 = arith.mulf %240, %193 : vector<2x32xf32>
    %250 = arith.mulf %234, %242 : vector<2x32xf32>
    %251 = arith.addf %249, %250 : vector<2x32xf32>
    %252 = math.tanh %251 : vector<2x32xf32>
    %253 = arith.mulf %248, %252 : vector<2x32xf32>
    %c8 = arith.constant 8 : index
    %c32_62 = arith.constant 32 : index
    %254 = vector.load %arg4[%c8, %c32_62] : memref<16x64xf32, #tpu.memory_space<vmem>>, vector<2x32xf32>
    tpu.vector_store %arg4[%c8, %c32_62], %253 {strides = array<i32>} : memref<16x64xf32, #tpu.memory_space<vmem>>, vector<2x32xf32>,
    %255 = vector.extract_strided_slice %7 {offsets = [8, 0], sizes = [2, 128], strides = [1, 1]} : vector<16x128xf32> to vector<2x128xf32>
    %cst_63 = arith.constant dense<0.000000e+00> : vector<2x128xf32>
    %256 = tpu.matmul %224, %16, %cst_63 {dimension_numbers = #tpu.dot_dimension_numbers<[1], [0], [0], [1], [0, 0, 1, 1], [], []>} : vector<2x32xf32>, vector<32x128xf32>, vector<2x128xf32> -> vector<2x128xf32>
    %257 = arith.addf %255, %256 : vector<2x128xf32>
    %258 = vector.extract_strided_slice %257 {offsets = [0, 0], sizes = [2, 32], strides = [1, 1]} : vector<2x128xf32> to vector<2x32xf32>
    %259 = arith.negf %258 : vector<2x32xf32>
    %260 = math.exp %259 : vector<2x32xf32>
    %cst_64 = arith.constant 1.000000e+00 : f32
    %261 = vector.broadcast %cst_64 : f32 to vector<2x32xf32>
    %262 = arith.addf %261, %260 : vector<2x32xf32>
    %263 = arith.divf %261, %262 : vector<2x32xf32>
    %264 = vector.extract_strided_slice %257 {offsets = [0, 32], sizes = [2, 32], strides = [1, 1]} : vector<2x128xf32> to vector<2x32xf32>
    %265 = arith.negf %264 : vector<2x32xf32>
    %266 = math.exp %265 : vector<2x32xf32>
    %cst_65 = arith.constant 1.000000e+00 : f32
    %267 = vector.broadcast %cst_65 : f32 to vector<2x32xf32>
    %268 = arith.addf %267, %266 : vector<2x32xf32>
    %269 = arith.divf %267, %268 : vector<2x32xf32>
    %270 = vector.extract_strided_slice %257 {offsets = [0, 64], sizes = [2, 32], strides = [1, 1]} : vector<2x128xf32> to vector<2x32xf32>
    %271 = math.tanh %270 : vector<2x32xf32>
    %272 = vector.extract_strided_slice %257 {offsets = [0, 96], sizes = [2, 32], strides = [1, 1]} : vector<2x128xf32> to vector<2x32xf32>
    %273 = arith.negf %272 : vector<2x32xf32>
    %274 = math.exp %273 : vector<2x32xf32>
    %cst_66 = arith.constant 1.000000e+00 : f32
    %275 = vector.broadcast %cst_66 : f32 to vector<2x32xf32>
    %276 = arith.addf %275, %274 : vector<2x32xf32>
    %277 = arith.divf %275, %276 : vector<2x32xf32>
    %278 = arith.mulf %269, %222 : vector<2x32xf32>
    %279 = arith.mulf %263, %271 : vector<2x32xf32>
    %280 = arith.addf %278, %279 : vector<2x32xf32>
    %281 = math.tanh %280 : vector<2x32xf32>
    %282 = arith.mulf %277, %281 : vector<2x32xf32>
    %c8_67 = arith.constant 8 : index
    %c0_68 = arith.constant 0 : index
    %283 = vector.load %arg4[%c8_67, %c0_68] : memref<16x64xf32, #tpu.memory_space<vmem>>, vector<2x32xf32>
    tpu.vector_store %arg4[%c8_67, %c0_68], %282 {strides = array<i32>} : memref<16x64xf32, #tpu.memory_space<vmem>>, vector<2x32xf32>,
    %284 = vector.extract_strided_slice %14 {offsets = [6, 0], sizes = [2, 128], strides = [1, 1]} : vector<16x128xf32> to vector<2x128xf32>
    %cst_69 = arith.constant dense<0.000000e+00> : vector<2x128xf32>
    %285 = tpu.matmul %253, %18, %cst_69 {dimension_numbers = #tpu.dot_dimension_numbers<[1], [0], [0], [1], [0, 0, 1, 1], [], []>} : vector<2x32xf32>, vector<32x128xf32>, vector<2x128xf32> -> vector<2x128xf32>
    %286 = arith.addf %284, %285 : vector<2x128xf32>
    %287 = vector.extract_strided_slice %286 {offsets = [0, 0], sizes = [2, 32], strides = [1, 1]} : vector<2x128xf32> to vector<2x32xf32>
    %288 = arith.negf %287 : vector<2x32xf32>
    %289 = math.exp %288 : vector<2x32xf32>
    %cst_70 = arith.constant 1.000000e+00 : f32
    %290 = vector.broadcast %cst_70 : f32 to vector<2x32xf32>
    %291 = arith.addf %290, %289 : vector<2x32xf32>
    %292 = arith.divf %290, %291 : vector<2x32xf32>
    %293 = vector.extract_strided_slice %286 {offsets = [0, 32], sizes = [2, 32], strides = [1, 1]} : vector<2x128xf32> to vector<2x32xf32>
    %294 = arith.negf %293 : vector<2x32xf32>
    %295 = math.exp %294 : vector<2x32xf32>
    %cst_71 = arith.constant 1.000000e+00 : f32
    %296 = vector.broadcast %cst_71 : f32 to vector<2x32xf32>
    %297 = arith.addf %296, %295 : vector<2x32xf32>
    %298 = arith.divf %296, %297 : vector<2x32xf32>
    %299 = vector.extract_strided_slice %286 {offsets = [0, 64], sizes = [2, 32], strides = [1, 1]} : vector<2x128xf32> to vector<2x32xf32>
    %300 = math.tanh %299 : vector<2x32xf32>
    %301 = vector.extract_strided_slice %286 {offsets = [0, 96], sizes = [2, 32], strides = [1, 1]} : vector<2x128xf32> to vector<2x32xf32>
    %302 = arith.negf %301 : vector<2x32xf32>
    %303 = math.exp %302 : vector<2x32xf32>
    %cst_72 = arith.constant 1.000000e+00 : f32
    %304 = vector.broadcast %cst_72 : f32 to vector<2x32xf32>
    %305 = arith.addf %304, %303 : vector<2x32xf32>
    %306 = arith.divf %304, %305 : vector<2x32xf32>
    %307 = arith.mulf %298, %251 : vector<2x32xf32>
    %308 = arith.mulf %292, %300 : vector<2x32xf32>
    %309 = arith.addf %307, %308 : vector<2x32xf32>
    %310 = math.tanh %309 : vector<2x32xf32>
    %311 = arith.mulf %306, %310 : vector<2x32xf32>
    %c6_73 = arith.constant 6 : index
    %c32_74 = arith.constant 32 : index
    %312 = vector.load %arg4[%c6_73, %c32_74] : memref<16x64xf32, #tpu.memory_space<vmem>>, vector<2x32xf32>
    tpu.vector_store %arg4[%c6_73, %c32_74], %311 {strides = array<i32>} : memref<16x64xf32, #tpu.memory_space<vmem>>, vector<2x32xf32>,
    %313 = vector.extract_strided_slice %7 {offsets = [10, 0], sizes = [2, 128], strides = [1, 1]} : vector<16x128xf32> to vector<2x128xf32>
    %cst_75 = arith.constant dense<0.000000e+00> : vector<2x128xf32>
    %314 = tpu.matmul %282, %16, %cst_75 {dimension_numbers = #tpu.dot_dimension_numbers<[1], [0], [0], [1], [0, 0, 1, 1], [], []>} : vector<2x32xf32>, vector<32x128xf32>, vector<2x128xf32> -> vector<2x128xf32>
    %315 = arith.addf %313, %314 : vector<2x128xf32>
    %316 = vector.extract_strided_slice %315 {offsets = [0, 0], sizes = [2, 32], strides = [1, 1]} : vector<2x128xf32> to vector<2x32xf32>
    %317 = arith.negf %316 : vector<2x32xf32>
    %318 = math.exp %317 : vector<2x32xf32>
    %cst_76 = arith.constant 1.000000e+00 : f32
    %319 = vector.broadcast %cst_76 : f32 to vector<2x32xf32>
    %320 = arith.addf %319, %318 : vector<2x32xf32>
    %321 = arith.divf %319, %320 : vector<2x32xf32>
    %322 = vector.extract_strided_slice %315 {offsets = [0, 32], sizes = [2, 32], strides = [1, 1]} : vector<2x128xf32> to vector<2x32xf32>
    %323 = arith.negf %322 : vector<2x32xf32>
    %324 = math.exp %323 : vector<2x32xf32>
    %cst_77 = arith.constant 1.000000e+00 : f32
    %325 = vector.broadcast %cst_77 : f32 to vector<2x32xf32>
    %326 = arith.addf %325, %324 : vector<2x32xf32>
    %327 = arith.divf %325, %326 : vector<2x32xf32>
    %328 = vector.extract_strided_slice %315 {offsets = [0, 64], sizes = [2, 32], strides = [1, 1]} : vector<2x128xf32> to vector<2x32xf32>
    %329 = math.tanh %328 : vector<2x32xf32>
    %330 = vector.extract_strided_slice %315 {offsets = [0, 96], sizes = [2, 32], strides = [1, 1]} : vector<2x128xf32> to vector<2x32xf32>
    %331 = arith.negf %330 : vector<2x32xf32>
    %332 = math.exp %331 : vector<2x32xf32>
    %cst_78 = arith.constant 1.000000e+00 : f32
    %333 = vector.broadcast %cst_78 : f32 to vector<2x32xf32>
    %334 = arith.addf %333, %332 : vector<2x32xf32>
    %335 = arith.divf %333, %334 : vector<2x32xf32>
    %336 = arith.mulf %327, %280 : vector<2x32xf32>
    %337 = arith.mulf %321, %329 : vector<2x32xf32>
    %338 = arith.addf %336, %337 : vector<2x32xf32>
    %339 = math.tanh %338 : vector<2x32xf32>
    %340 = arith.mulf %335, %339 : vector<2x32xf32>
    %c10_79 = arith.constant 10 : index
    %c0_80 = arith.constant 0 : index
    %341 = vector.load %arg4[%c10_79, %c0_80] : memref<16x64xf32, #tpu.memory_space<vmem>>, vector<2x32xf32>
    tpu.vector_store %arg4[%c10_79, %c0_80], %340 {strides = array<i32>} : memref<16x64xf32, #tpu.memory_space<vmem>>, vector<2x32xf32>,
    %342 = vector.extract_strided_slice %14 {offsets = [4, 0], sizes = [2, 128], strides = [1, 1]} : vector<16x128xf32> to vector<2x128xf32>
    %cst_81 = arith.constant dense<0.000000e+00> : vector<2x128xf32>
    %343 = tpu.matmul %311, %18, %cst_81 {dimension_numbers = #tpu.dot_dimension_numbers<[1], [0], [0], [1], [0, 0, 1, 1], [], []>} : vector<2x32xf32>, vector<32x128xf32>, vector<2x128xf32> -> vector<2x128xf32>
    %344 = arith.addf %342, %343 : vector<2x128xf32>
    %345 = vector.extract_strided_slice %344 {offsets = [0, 0], sizes = [2, 32], strides = [1, 1]} : vector<2x128xf32> to vector<2x32xf32>
    %346 = arith.negf %345 : vector<2x32xf32>
    %347 = math.exp %346 : vector<2x32xf32>
    %cst_82 = arith.constant 1.000000e+00 : f32
    %348 = vector.broadcast %cst_82 : f32 to vector<2x32xf32>
    %349 = arith.addf %348, %347 : vector<2x32xf32>
    %350 = arith.divf %348, %349 : vector<2x32xf32>
    %351 = vector.extract_strided_slice %344 {offsets = [0, 32], sizes = [2, 32], strides = [1, 1]} : vector<2x128xf32> to vector<2x32xf32>
    %352 = arith.negf %351 : vector<2x32xf32>
    %353 = math.exp %352 : vector<2x32xf32>
    %cst_83 = arith.constant 1.000000e+00 : f32
    %354 = vector.broadcast %cst_83 : f32 to vector<2x32xf32>
    %355 = arith.addf %354, %353 : vector<2x32xf32>
    %356 = arith.divf %354, %355 : vector<2x32xf32>
    %357 = vector.extract_strided_slice %344 {offsets = [0, 64], sizes = [2, 32], strides = [1, 1]} : vector<2x128xf32> to vector<2x32xf32>
    %358 = math.tanh %357 : vector<2x32xf32>
    %359 = vector.extract_strided_slice %344 {offsets = [0, 96], sizes = [2, 32], strides = [1, 1]} : vector<2x128xf32> to vector<2x32xf32>
    %360 = arith.negf %359 : vector<2x32xf32>
    %361 = math.exp %360 : vector<2x32xf32>
    %cst_84 = arith.constant 1.000000e+00 : f32
    %362 = vector.broadcast %cst_84 : f32 to vector<2x32xf32>
    %363 = arith.addf %362, %361 : vector<2x32xf32>
    %364 = arith.divf %362, %363 : vector<2x32xf32>
    %365 = arith.mulf %356, %309 : vector<2x32xf32>
    %366 = arith.mulf %350, %358 : vector<2x32xf32>
    %367 = arith.addf %365, %366 : vector<2x32xf32>
    %368 = math.tanh %367 : vector<2x32xf32>
    %369 = arith.mulf %364, %368 : vector<2x32xf32>
    %c4_85 = arith.constant 4 : index
    %c32_86 = arith.constant 32 : index
    %370 = vector.load %arg4[%c4_85, %c32_86] : memref<16x64xf32, #tpu.memory_space<vmem>>, vector<2x32xf32>
    tpu.vector_store %arg4[%c4_85, %c32_86], %369 {strides = array<i32>} : memref<16x64xf32, #tpu.memory_space<vmem>>, vector<2x32xf32>,
    %371 = vector.extract_strided_slice %7 {offsets = [12, 0], sizes = [2, 128], strides = [1, 1]} : vector<16x128xf32> to vector<2x128xf32>
    %cst_87 = arith.constant dense<0.000000e+00> : vector<2x128xf32>
    %372 = tpu.matmul %340, %16, %cst_87 {dimension_numbers = #tpu.dot_dimension_numbers<[1], [0], [0], [1], [0, 0, 1, 1], [], []>} : vector<2x32xf32>, vector<32x128xf32>, vector<2x128xf32> -> vector<2x128xf32>
    %373 = arith.addf %371, %372 : vector<2x128xf32>
    %374 = vector.extract_strided_slice %373 {offsets = [0, 0], sizes = [2, 32], strides = [1, 1]} : vector<2x128xf32> to vector<2x32xf32>
    %375 = arith.negf %374 : vector<2x32xf32>
    %376 = math.exp %375 : vector<2x32xf32>
    %cst_88 = arith.constant 1.000000e+00 : f32
    %377 = vector.broadcast %cst_88 : f32 to vector<2x32xf32>
    %378 = arith.addf %377, %376 : vector<2x32xf32>
    %379 = arith.divf %377, %378 : vector<2x32xf32>
    %380 = vector.extract_strided_slice %373 {offsets = [0, 32], sizes = [2, 32], strides = [1, 1]} : vector<2x128xf32> to vector<2x32xf32>
    %381 = arith.negf %380 : vector<2x32xf32>
    %382 = math.exp %381 : vector<2x32xf32>
    %cst_89 = arith.constant 1.000000e+00 : f32
    %383 = vector.broadcast %cst_89 : f32 to vector<2x32xf32>
    %384 = arith.addf %383, %382 : vector<2x32xf32>
    %385 = arith.divf %383, %384 : vector<2x32xf32>
    %386 = vector.extract_strided_slice %373 {offsets = [0, 64], sizes = [2, 32], strides = [1, 1]} : vector<2x128xf32> to vector<2x32xf32>
    %387 = math.tanh %386 : vector<2x32xf32>
    %388 = vector.extract_strided_slice %373 {offsets = [0, 96], sizes = [2, 32], strides = [1, 1]} : vector<2x128xf32> to vector<2x32xf32>
    %389 = arith.negf %388 : vector<2x32xf32>
    %390 = math.exp %389 : vector<2x32xf32>
    %cst_90 = arith.constant 1.000000e+00 : f32
    %391 = vector.broadcast %cst_90 : f32 to vector<2x32xf32>
    %392 = arith.addf %391, %390 : vector<2x32xf32>
    %393 = arith.divf %391, %392 : vector<2x32xf32>
    %394 = arith.mulf %385, %338 : vector<2x32xf32>
    %395 = arith.mulf %379, %387 : vector<2x32xf32>
    %396 = arith.addf %394, %395 : vector<2x32xf32>
    %397 = math.tanh %396 : vector<2x32xf32>
    %398 = arith.mulf %393, %397 : vector<2x32xf32>
    %c12_91 = arith.constant 12 : index
    %c0_92 = arith.constant 0 : index
    %399 = vector.load %arg4[%c12_91, %c0_92] : memref<16x64xf32, #tpu.memory_space<vmem>>, vector<2x32xf32>
    tpu.vector_store %arg4[%c12_91, %c0_92], %398 {strides = array<i32>} : memref<16x64xf32, #tpu.memory_space<vmem>>, vector<2x32xf32>,
    %400 = vector.extract_strided_slice %14 {offsets = [2, 0], sizes = [2, 128], strides = [1, 1]} : vector<16x128xf32> to vector<2x128xf32>
    %cst_93 = arith.constant dense<0.000000e+00> : vector<2x128xf32>
    %401 = tpu.matmul %369, %18, %cst_93 {dimension_numbers = #tpu.dot_dimension_numbers<[1], [0], [0], [1], [0, 0, 1, 1], [], []>} : vector<2x32xf32>, vector<32x128xf32>, vector<2x128xf32> -> vector<2x128xf32>
    %402 = arith.addf %400, %401 : vector<2x128xf32>
    %403 = vector.extract_strided_slice %402 {offsets = [0, 0], sizes = [2, 32], strides = [1, 1]} : vector<2x128xf32> to vector<2x32xf32>
    %404 = arith.negf %403 : vector<2x32xf32>
    %405 = math.exp %404 : vector<2x32xf32>
    %cst_94 = arith.constant 1.000000e+00 : f32
    %406 = vector.broadcast %cst_94 : f32 to vector<2x32xf32>
    %407 = arith.addf %406, %405 : vector<2x32xf32>
    %408 = arith.divf %406, %407 : vector<2x32xf32>
    %409 = vector.extract_strided_slice %402 {offsets = [0, 32], sizes = [2, 32], strides = [1, 1]} : vector<2x128xf32> to vector<2x32xf32>
    %410 = arith.negf %409 : vector<2x32xf32>
    %411 = math.exp %410 : vector<2x32xf32>
    %cst_95 = arith.constant 1.000000e+00 : f32
    %412 = vector.broadcast %cst_95 : f32 to vector<2x32xf32>
    %413 = arith.addf %412, %411 : vector<2x32xf32>
    %414 = arith.divf %412, %413 : vector<2x32xf32>
    %415 = vector.extract_strided_slice %402 {offsets = [0, 64], sizes = [2, 32], strides = [1, 1]} : vector<2x128xf32> to vector<2x32xf32>
    %416 = math.tanh %415 : vector<2x32xf32>
    %417 = vector.extract_strided_slice %402 {offsets = [0, 96], sizes = [2, 32], strides = [1, 1]} : vector<2x128xf32> to vector<2x32xf32>
    %418 = arith.negf %417 : vector<2x32xf32>
    %419 = math.exp %418 : vector<2x32xf32>
    %cst_96 = arith.constant 1.000000e+00 : f32
    %420 = vector.broadcast %cst_96 : f32 to vector<2x32xf32>
    %421 = arith.addf %420, %419 : vector<2x32xf32>
    %422 = arith.divf %420, %421 : vector<2x32xf32>
    %423 = arith.mulf %414, %367 : vector<2x32xf32>
    %424 = arith.mulf %408, %416 : vector<2x32xf32>
    %425 = arith.addf %423, %424 : vector<2x32xf32>
    %426 = math.tanh %425 : vector<2x32xf32>
    %427 = arith.mulf %422, %426 : vector<2x32xf32>
    %c2_97 = arith.constant 2 : index
    %c32_98 = arith.constant 32 : index
    %428 = vector.load %arg4[%c2_97, %c32_98] : memref<16x64xf32, #tpu.memory_space<vmem>>, vector<2x32xf32>
    tpu.vector_store %arg4[%c2_97, %c32_98], %427 {strides = array<i32>} : memref<16x64xf32, #tpu.memory_space<vmem>>, vector<2x32xf32>,
    %429 = vector.extract_strided_slice %7 {offsets = [14, 0], sizes = [2, 128], strides = [1, 1]} : vector<16x128xf32> to vector<2x128xf32>
    %cst_99 = arith.constant dense<0.000000e+00> : vector<2x128xf32>
    %430 = tpu.matmul %398, %16, %cst_99 {dimension_numbers = #tpu.dot_dimension_numbers<[1], [0], [0], [1], [0, 0, 1, 1], [], []>} : vector<2x32xf32>, vector<32x128xf32>, vector<2x128xf32> -> vector<2x128xf32>
    %431 = arith.addf %429, %430 : vector<2x128xf32>
    %432 = vector.extract_strided_slice %431 {offsets = [0, 0], sizes = [2, 32], strides = [1, 1]} : vector<2x128xf32> to vector<2x32xf32>
    %433 = arith.negf %432 : vector<2x32xf32>
    %434 = math.exp %433 : vector<2x32xf32>
    %cst_100 = arith.constant 1.000000e+00 : f32
    %435 = vector.broadcast %cst_100 : f32 to vector<2x32xf32>
    %436 = arith.addf %435, %434 : vector<2x32xf32>
    %437 = arith.divf %435, %436 : vector<2x32xf32>
    %438 = vector.extract_strided_slice %431 {offsets = [0, 32], sizes = [2, 32], strides = [1, 1]} : vector<2x128xf32> to vector<2x32xf32>
    %439 = arith.negf %438 : vector<2x32xf32>
    %440 = math.exp %439 : vector<2x32xf32>
    %cst_101 = arith.constant 1.000000e+00 : f32
    %441 = vector.broadcast %cst_101 : f32 to vector<2x32xf32>
    %442 = arith.addf %441, %440 : vector<2x32xf32>
    %443 = arith.divf %441, %442 : vector<2x32xf32>
    %444 = vector.extract_strided_slice %431 {offsets = [0, 64], sizes = [2, 32], strides = [1, 1]} : vector<2x128xf32> to vector<2x32xf32>
    %445 = math.tanh %444 : vector<2x32xf32>
    %446 = vector.extract_strided_slice %431 {offsets = [0, 96], sizes = [2, 32], strides = [1, 1]} : vector<2x128xf32> to vector<2x32xf32>
    %447 = arith.negf %446 : vector<2x32xf32>
    %448 = math.exp %447 : vector<2x32xf32>
    %cst_102 = arith.constant 1.000000e+00 : f32
    %449 = vector.broadcast %cst_102 : f32 to vector<2x32xf32>
    %450 = arith.addf %449, %448 : vector<2x32xf32>
    %451 = arith.divf %449, %450 : vector<2x32xf32>
    %452 = arith.mulf %443, %396 : vector<2x32xf32>
    %453 = arith.mulf %437, %445 : vector<2x32xf32>
    %454 = arith.addf %452, %453 : vector<2x32xf32>
    %455 = math.tanh %454 : vector<2x32xf32>
    %456 = arith.mulf %451, %455 : vector<2x32xf32>
    %c14_103 = arith.constant 14 : index
    %c0_104 = arith.constant 0 : index
    %457 = vector.load %arg4[%c14_103, %c0_104] : memref<16x64xf32, #tpu.memory_space<vmem>>, vector<2x32xf32>
    tpu.vector_store %arg4[%c14_103, %c0_104], %456 {strides = array<i32>} : memref<16x64xf32, #tpu.memory_space<vmem>>, vector<2x32xf32>,
    %458 = vector.extract_strided_slice %14 {offsets = [0, 0], sizes = [2, 128], strides = [1, 1]} : vector<16x128xf32> to vector<2x128xf32>
    %cst_105 = arith.constant dense<0.000000e+00> : vector<2x128xf32>
    %459 = tpu.matmul %427, %18, %cst_105 {dimension_numbers = #tpu.dot_dimension_numbers<[1], [0], [0], [1], [0, 0, 1, 1], [], []>} : vector<2x32xf32>, vector<32x128xf32>, vector<2x128xf32> -> vector<2x128xf32>
    %460 = arith.addf %458, %459 : vector<2x128xf32>
    %461 = vector.extract_strided_slice %460 {offsets = [0, 0], sizes = [2, 32], strides = [1, 1]} : vector<2x128xf32> to vector<2x32xf32>
    %462 = arith.negf %461 : vector<2x32xf32>
    %463 = math.exp %462 : vector<2x32xf32>
    %cst_106 = arith.constant 1.000000e+00 : f32
    %464 = vector.broadcast %cst_106 : f32 to vector<2x32xf32>
    %465 = arith.addf %464, %463 : vector<2x32xf32>
    %466 = arith.divf %464, %465 : vector<2x32xf32>
    %467 = vector.extract_strided_slice %460 {offsets = [0, 32], sizes = [2, 32], strides = [1, 1]} : vector<2x128xf32> to vector<2x32xf32>
    %468 = arith.negf %467 : vector<2x32xf32>
    %469 = math.exp %468 : vector<2x32xf32>
    %cst_107 = arith.constant 1.000000e+00 : f32
    %470 = vector.broadcast %cst_107 : f32 to vector<2x32xf32>
    %471 = arith.addf %470, %469 : vector<2x32xf32>
    %472 = arith.divf %470, %471 : vector<2x32xf32>
    %473 = vector.extract_strided_slice %460 {offsets = [0, 64], sizes = [2, 32], strides = [1, 1]} : vector<2x128xf32> to vector<2x32xf32>
    %474 = math.tanh %473 : vector<2x32xf32>
    %475 = vector.extract_strided_slice %460 {offsets = [0, 96], sizes = [2, 32], strides = [1, 1]} : vector<2x128xf32> to vector<2x32xf32>
    %476 = arith.negf %475 : vector<2x32xf32>
    %477 = math.exp %476 : vector<2x32xf32>
    %cst_108 = arith.constant 1.000000e+00 : f32
    %478 = vector.broadcast %cst_108 : f32 to vector<2x32xf32>
    %479 = arith.addf %478, %477 : vector<2x32xf32>
    %480 = arith.divf %478, %479 : vector<2x32xf32>
    %481 = arith.mulf %472, %425 : vector<2x32xf32>
    %482 = arith.mulf %466, %474 : vector<2x32xf32>
    %483 = arith.addf %481, %482 : vector<2x32xf32>
    %484 = math.tanh %483 : vector<2x32xf32>
    %485 = arith.mulf %480, %484 : vector<2x32xf32>
    %c0_109 = arith.constant 0 : index
    %c32_110 = arith.constant 32 : index
    %486 = vector.load %arg4[%c0_109, %c32_110] : memref<16x64xf32, #tpu.memory_space<vmem>>, vector<2x32xf32>
    tpu.vector_store %arg4[%c0_109, %c32_110], %485 {strides = array<i32>} : memref<16x64xf32, #tpu.memory_space<vmem>>, vector<2x32xf32>,
    return
  }
}

module attributes {stable_mosaic.version = 11 : i64} {
  func.func @_bn_ln_attn_fc_kernel(%arg0: memref<16x64xf32, #tpu.memory_space<vmem>>, %arg1: memref<1x64xf32, #tpu.memory_space<vmem>>, %arg2: memref<1x64xf32, #tpu.memory_space<vmem>>, %arg3: memref<1x64xf32, #tpu.memory_space<vmem>>, %arg4: memref<1x64xf32, #tpu.memory_space<vmem>>, %arg5: memref<64x192xf32, #tpu.memory_space<vmem>>, %arg6: memref<1x192xf32, #tpu.memory_space<vmem>>, %arg7: memref<64x64xf32, #tpu.memory_space<vmem>>, %arg8: memref<1x64xf32, #tpu.memory_space<vmem>>, %arg9: memref<64x8xf32, #tpu.memory_space<vmem>>, %arg10: memref<8x64xf32, #tpu.memory_space<vmem>>, %arg11: memref<64x5xf32, #tpu.memory_space<vmem>>, %arg12: memref<1x5xf32, #tpu.memory_space<vmem>>, %arg13: memref<1x5xf32, #tpu.memory_space<vmem>>, %arg14: memref<1x5xf32, #tpu.memory_space<vmem>>, %arg15: memref<2x5xf32, #tpu.memory_space<vmem>>) attributes {dimension_semantics = [], scalar_prefetch = 0 : i64, scratch_operands = 0 : i64, tpu.core_type = #tpu.core_type<tc>} {
    %c0 = arith.constant 0 : index
    %c0_0 = arith.constant 0 : index
    %0 = vector.load %arg0[%c0, %c0_0] : memref<16x64xf32, #tpu.memory_space<vmem>>, vector<16x64xf32>
    %c0_1 = arith.constant 0 : index
    %c0_2 = arith.constant 0 : index
    %1 = vector.load %arg1[%c0_1, %c0_2] : memref<1x64xf32, #tpu.memory_space<vmem>>, vector<1x64xf32>
    %2 = vector.broadcast %1 : vector<1x64xf32> to vector<16x64xf32>
    %3 = arith.mulf %0, %2 : vector<16x64xf32>
    %c0_3 = arith.constant 0 : index
    %c0_4 = arith.constant 0 : index
    %4 = vector.load %arg2[%c0_3, %c0_4] : memref<1x64xf32, #tpu.memory_space<vmem>>, vector<1x64xf32>
    %5 = vector.broadcast %4 : vector<1x64xf32> to vector<16x64xf32>
    %6 = arith.addf %3, %5 : vector<16x64xf32>
    %cst = arith.constant dense<0.000000e+00> : vector<16xf32>
    %7 = vector.multi_reduction <add>, %6, %cst [1] : vector<16x64xf32> to vector<16xf32>
    %8 = vector.shape_cast %7 : vector<16xf32> to vector<16x1xf32>
    %cst_5 = arith.constant 6.400000e+01 : f32
    %9 = vector.broadcast %cst_5 : f32 to vector<16x1xf32>
    %10 = arith.divf %8, %9 : vector<16x1xf32>
    %11 = vector.broadcast %10 : vector<16x1xf32> to vector<16x64xf32>
    %12 = arith.subf %6, %11 : vector<16x64xf32>
    %13 = arith.mulf %12, %12 : vector<16x64xf32>
    %cst_6 = arith.constant dense<0.000000e+00> : vector<16xf32>
    %14 = vector.multi_reduction <add>, %13, %cst_6 [1] : vector<16x64xf32> to vector<16xf32>
    %15 = vector.shape_cast %14 : vector<16xf32> to vector<16x1xf32>
    %cst_7 = arith.constant 6.400000e+01 : f32
    %16 = vector.broadcast %cst_7 : f32 to vector<16x1xf32>
    %17 = arith.divf %15, %16 : vector<16x1xf32>
    %cst_8 = arith.constant 9.99999974E-6 : f32
    %18 = vector.broadcast %cst_8 : f32 to vector<16x1xf32>
    %19 = arith.addf %17, %18 : vector<16x1xf32>
    %20 = math.rsqrt %19 : vector<16x1xf32>
    %21 = vector.broadcast %20 : vector<16x1xf32> to vector<16x64xf32>
    %22 = arith.mulf %12, %21 : vector<16x64xf32>
    %c0_9 = arith.constant 0 : index
    %c0_10 = arith.constant 0 : index
    %23 = vector.load %arg3[%c0_9, %c0_10] : memref<1x64xf32, #tpu.memory_space<vmem>>, vector<1x64xf32>
    %24 = vector.broadcast %23 : vector<1x64xf32> to vector<16x64xf32>
    %25 = arith.mulf %22, %24 : vector<16x64xf32>
    %c0_11 = arith.constant 0 : index
    %c0_12 = arith.constant 0 : index
    %26 = vector.load %arg4[%c0_11, %c0_12] : memref<1x64xf32, #tpu.memory_space<vmem>>, vector<1x64xf32>
    %27 = vector.broadcast %26 : vector<1x64xf32> to vector<16x64xf32>
    %28 = arith.addf %25, %27 : vector<16x64xf32>
    %c0_13 = arith.constant 0 : index
    %c0_14 = arith.constant 0 : index
    %29 = vector.load %arg5[%c0_13, %c0_14] : memref<64x192xf32, #tpu.memory_space<vmem>>, vector<64x192xf32>
    %cst_15 = arith.constant dense<0.000000e+00> : vector<16x192xf32>
    %30 = tpu.matmul %28, %29, %cst_15 {dimension_numbers = #tpu.dot_dimension_numbers<[1], [0], [0], [1], [0, 0, 1, 1], [], []>} : vector<16x64xf32>, vector<64x192xf32>, vector<16x192xf32> -> vector<16x192xf32>
    %c0_16 = arith.constant 0 : index
    %c0_17 = arith.constant 0 : index
    %31 = vector.load %arg6[%c0_16, %c0_17] : memref<1x192xf32, #tpu.memory_space<vmem>>, vector<1x192xf32>
    %32 = vector.broadcast %31 : vector<1x192xf32> to vector<16x192xf32>
    %33 = arith.addf %30, %32 : vector<16x192xf32>
    %34 = vector.extract_strided_slice %33 {offsets = [14, 0], sizes = [2, 64], strides = [1, 1]} : vector<16x192xf32> to vector<2x64xf32>
    %cst_18 = arith.constant 0.353553385 : f32
    %35 = vector.broadcast %cst_18 : f32 to vector<2x64xf32>
    %36 = arith.mulf %34, %35 : vector<2x64xf32>
    %37 = vector.extract_strided_slice %33 {offsets = [0, 64], sizes = [16, 64], strides = [1, 1]} : vector<16x192xf32> to vector<16x64xf32>
    %38 = vector.extract_strided_slice %33 {offsets = [0, 128], sizes = [16, 64], strides = [1, 1]} : vector<16x192xf32> to vector<16x64xf32>
    %39 = vector.shape_cast %36 : vector<2x64xf32> to vector<1x2x64xf32>
    %40 = vector.shape_cast %39 : vector<1x2x64xf32> to vector<1x2x64xf32>
    %41 = vector.broadcast %40 : vector<1x2x64xf32> to vector<8x2x64xf32>
    %42 = vector.shape_cast %41 : vector<8x2x64xf32> to vector<16x64xf32>
    %43 = arith.mulf %42, %37 : vector<16x64xf32>
    %c0_19 = arith.constant 0 : index
    %c0_20 = arith.constant 0 : index
    %44 = vector.load %arg9[%c0_19, %c0_20] : memref<64x8xf32, #tpu.memory_space<vmem>>, vector<64x8xf32>
    %cst_21 = arith.constant dense<0.000000e+00> : vector<16x8xf32>
    %45 = tpu.matmul %43, %44, %cst_21 {dimension_numbers = #tpu.dot_dimension_numbers<[1], [0], [0], [1], [0, 0, 1, 1], [], []>} : vector<16x64xf32>, vector<64x8xf32>, vector<16x8xf32> -> vector<16x8xf32>
    %46 = vector.shape_cast %45 : vector<16x8xf32> to vector<8x2x8xf32>
    %cst_22 = arith.constant dense<0xFF800000> : vector<2x8xf32>
    %47 = vector.multi_reduction <maximumf>, %46, %cst_22 [0] : vector<8x2x8xf32> to vector<2x8xf32>
    %48 = vector.shape_cast %47 : vector<2x8xf32> to vector<1x2x8xf32>
    %49 = vector.broadcast %48 : vector<1x2x8xf32> to vector<8x2x8xf32>
    %50 = arith.subf %46, %49 : vector<8x2x8xf32>
    %51 = math.exp %50 : vector<8x2x8xf32>
    %cst_23 = arith.constant dense<0.000000e+00> : vector<2x8xf32>
    %52 = vector.multi_reduction <add>, %51, %cst_23 [0] : vector<8x2x8xf32> to vector<2x8xf32>
    %53 = vector.shape_cast %52 : vector<2x8xf32> to vector<1x2x8xf32>
    %54 = tpu.reciprocal %53 {approx = true} : vector<1x2x8xf32> -> vector<1x2x8xf32>
    %55 = vector.broadcast %54 : vector<1x2x8xf32> to vector<8x2x8xf32>
    %56 = arith.mulf %51, %55 : vector<8x2x8xf32>
    %57 = vector.shape_cast %56 : vector<8x2x8xf32> to vector<16x8xf32>
    %c0_24 = arith.constant 0 : index
    %c0_25 = arith.constant 0 : index
    %58 = vector.load %arg10[%c0_24, %c0_25] : memref<8x64xf32, #tpu.memory_space<vmem>>, vector<8x64xf32>
    %cst_26 = arith.constant dense<0.000000e+00> : vector<16x64xf32>
    %59 = tpu.matmul %57, %58, %cst_26 {dimension_numbers = #tpu.dot_dimension_numbers<[1], [0], [0], [1], [0, 0, 1, 1], [], []>} : vector<16x8xf32>, vector<8x64xf32>, vector<16x64xf32> -> vector<16x64xf32>
    %60 = arith.mulf %59, %38 : vector<16x64xf32>
    %61 = vector.shape_cast %60 : vector<16x64xf32> to vector<8x2x64xf32>
    %cst_27 = arith.constant dense<0.000000e+00> : vector<2x64xf32>
    %62 = vector.multi_reduction <add>, %61, %cst_27 [0] : vector<8x2x64xf32> to vector<2x64xf32>
    %c0_28 = arith.constant 0 : index
    %c0_29 = arith.constant 0 : index
    %63 = vector.load %arg7[%c0_28, %c0_29] : memref<64x64xf32, #tpu.memory_space<vmem>>, vector<64x64xf32>
    %cst_30 = arith.constant dense<0.000000e+00> : vector<2x64xf32>
    %64 = tpu.matmul %62, %63, %cst_30 {dimension_numbers = #tpu.dot_dimension_numbers<[1], [0], [0], [1], [0, 0, 1, 1], [], []>} : vector<2x64xf32>, vector<64x64xf32>, vector<2x64xf32> -> vector<2x64xf32>
    %c0_31 = arith.constant 0 : index
    %c0_32 = arith.constant 0 : index
    %65 = vector.load %arg8[%c0_31, %c0_32] : memref<1x64xf32, #tpu.memory_space<vmem>>, vector<1x64xf32>
    %66 = vector.broadcast %65 : vector<1x64xf32> to vector<2x64xf32>
    %67 = arith.addf %64, %66 : vector<2x64xf32>
    %c0_33 = arith.constant 0 : index
    %c0_34 = arith.constant 0 : index
    %68 = vector.load %arg11[%c0_33, %c0_34] : memref<64x5xf32, #tpu.memory_space<vmem>>, vector<64x5xf32>
    %cst_35 = arith.constant dense<0.000000e+00> : vector<2x5xf32>
    %69 = tpu.matmul %67, %68, %cst_35 {dimension_numbers = #tpu.dot_dimension_numbers<[1], [0], [0], [1], [0, 0, 1, 1], [], []>} : vector<2x64xf32>, vector<64x5xf32>, vector<2x5xf32> -> vector<2x5xf32>
    %c0_36 = arith.constant 0 : index
    %c0_37 = arith.constant 0 : index
    %70 = vector.load %arg12[%c0_36, %c0_37] : memref<1x5xf32, #tpu.memory_space<vmem>>, vector<1x5xf32>
    %71 = vector.broadcast %70 : vector<1x5xf32> to vector<2x5xf32>
    %72 = arith.addf %69, %71 : vector<2x5xf32>
    %cst_38 = arith.constant dense<0.000000e+00> : vector<2xf32>
    %73 = vector.multi_reduction <add>, %72, %cst_38 [1] : vector<2x5xf32> to vector<2xf32>
    %74 = vector.shape_cast %73 : vector<2xf32> to vector<2x1xf32>
    %cst_39 = arith.constant 5.000000e+00 : f32
    %75 = vector.broadcast %cst_39 : f32 to vector<2x1xf32>
    %76 = arith.divf %74, %75 : vector<2x1xf32>
    %77 = vector.broadcast %76 : vector<2x1xf32> to vector<2x5xf32>
    %78 = arith.subf %72, %77 : vector<2x5xf32>
    %79 = arith.mulf %78, %78 : vector<2x5xf32>
    %cst_40 = arith.constant dense<0.000000e+00> : vector<2xf32>
    %80 = vector.multi_reduction <add>, %79, %cst_40 [1] : vector<2x5xf32> to vector<2xf32>
    %81 = vector.shape_cast %80 : vector<2xf32> to vector<2x1xf32>
    %cst_41 = arith.constant 5.000000e+00 : f32
    %82 = vector.broadcast %cst_41 : f32 to vector<2x1xf32>
    %83 = arith.divf %81, %82 : vector<2x1xf32>
    %cst_42 = arith.constant 9.99999974E-6 : f32
    %84 = vector.broadcast %cst_42 : f32 to vector<2x1xf32>
    %85 = arith.addf %83, %84 : vector<2x1xf32>
    %86 = math.rsqrt %85 : vector<2x1xf32>
    %87 = vector.broadcast %86 : vector<2x1xf32> to vector<2x5xf32>
    %88 = arith.mulf %78, %87 : vector<2x5xf32>
    %c0_43 = arith.constant 0 : index
    %c0_44 = arith.constant 0 : index
    %89 = vector.load %arg13[%c0_43, %c0_44] : memref<1x5xf32, #tpu.memory_space<vmem>>, vector<1x5xf32>
    %90 = vector.broadcast %89 : vector<1x5xf32> to vector<2x5xf32>
    %91 = arith.mulf %88, %90 : vector<2x5xf32>
    %c0_45 = arith.constant 0 : index
    %c0_46 = arith.constant 0 : index
    %92 = vector.load %arg14[%c0_45, %c0_46] : memref<1x5xf32, #tpu.memory_space<vmem>>, vector<1x5xf32>
    %93 = vector.broadcast %92 : vector<1x5xf32> to vector<2x5xf32>
    %94 = arith.addf %91, %93 : vector<2x5xf32>
    %c0_47 = arith.constant 0 : index
    %c0_48 = arith.constant 0 : index
    %95 = vector.load %arg15[%c0_47, %c0_48] : memref<2x5xf32, #tpu.memory_space<vmem>>, vector<2x5xf32>
    tpu.vector_store %arg15[%c0_47, %c0_48], %94 {strides = array<i32>} : memref<2x5xf32, #tpu.memory_space<vmem>>, vector<2x5xf32>,
    return
  }
}

</mosaic_0001>

<llo_original>
// kernel: lstm_model_forward.4
$region0: #{lstm_model_forward.4}
  #allocation0 [shape = 'u32[]', space=smem, size = 0x4, offset = 0x4, fixed_abs, tag = 'smem constant byte address 0x4 - core index']
  #allocation1 [shape = 'u32[72,128]{1,0:T(1,128)}', space=vmem, size = 0x9000, scoped, tag = 'internal scratch']
  %s0 = inlined_call_operand.vmem [shape: f32[16,16], index: 0, kind: input, shape index: {}]
  %s1 = inlined_call_operand.hbm [shape: f32[16,32], index: 1, kind: input, shape index: {}]
  %s2 = inlined_call_operand.hbm [shape: f32[1,32], index: 2, kind: input, shape index: {}]
  %s3 = inlined_call_operand.vmem [shape: f32[16,32], index: 3, kind: output, shape index: {}]
  %s4 = sld [smem:[#allocation0]]
  $region30: #{lstm_model_forward.4} parent=0
    _
  %s6 = ssub.s32 1, %s4
  %s7 = scalar_select 0, %s6, %s4
  $region1: #{lstm_model_forward.4} parent=0
    #allocation2 [shape = 'u8[8192]{0}', space=vmem, size = 0x2000, scoped, tag = 'input window, operand 1, single buffered']
    #allocation3 [shape = 's32[1]{0}', space=sflag, size = 0x4, scoped, tag = 'scoped memory for lstm_model_forward.4']
    #allocation4 [shape = 'u8[512]{0}', space=vmem, size = 0x400, scoped, tag = 'input window, operand 2, single buffered']
    #allocation5 [shape = 's32[1]{0}', space=sflag, size = 0x4, scoped, tag = 'scoped memory for lstm_model_forward.4']
    %8 = vsyncpa [#allocation3], 0
    %9 = vsyncpa [#allocation5], 0
    // Predicated region
    $region2: #{lstm_model_forward.4} parent=1 // pred_check
      _
    $region3: #{lstm_model_forward.4} parent=1 // pred_check_branch
      %11 = sbr.rel (0) target = $region5
    $region4: #{lstm_model_forward.4} parent=1 // pred_region
      _
    $region5: #{lstm_model_forward.4} parent=1 // pred_fallthru
      _
    // Predicated region
    $region6: #{lstm_model_forward.4} parent=1 // pred_check
      _
    $region7: #{lstm_model_forward.4} parent=1 // pred_check_branch
      %13 = sbr.rel (0) target = $region9
    $region8: #{lstm_model_forward.4} parent=1 // pred_region
      %15 = vsyncadd [#allocation3], 0
      %s16 = sshll.u32 %s1, 4
      %s17 = int_to_ptr.hbm [resolvable:$true] %s16
      %s18 = sshll.u32 [#allocation2], 4
      %s19 = int_to_ptr.vmem [resolvable:$true] %s18
      %24 = dma.hbm_to_vmem [thread:$0]  %s17, 256, %s19, [#allocation3], 128, 128, 8
    $region9: #{lstm_model_forward.4} parent=1 // pred_fallthru
      _
    // Predicated region
    $region10: #{lstm_model_forward.4} parent=1 // pred_check
      _
    $region11: #{lstm_model_forward.4} parent=1 // pred_check_branch
      %26 = sbr.rel (0) target = $region13
    $region12: #{lstm_model_forward.4} parent=1 // pred_region
      %28 = vsyncadd [#allocation5], 0
      %s30 = sshll.u32 %s2, 4
      %s31 = int_to_ptr.hbm [resolvable:$true] %s30
      %s32 = sshll.u32 [#allocation4], 4
      %s33 = int_to_ptr.vmem [resolvable:$true] %s32
      %35 = dma.hbm_to_vmem [thread:$0]  %s31, 16, %s33, [#allocation5]
    $region13: #{lstm_model_forward.4} parent=1 // pred_fallthru
      _
    // Predicated region
    $region14: #{lstm_model_forward.4} parent=1 // pred_check
      _
    $region15: #{lstm_model_forward.4} parent=1 // pred_check_branch
      %37 = sbr.rel (0) target = $region17
    $region16: #{lstm_model_forward.4} parent=1 // pred_region
      %39 = dma.done [#allocation3], 256
    $region17: #{lstm_model_forward.4} parent=1 // pred_fallthru
      _
    // Predicated region
    $region18: #{lstm_model_forward.4} parent=1 // pred_check
      _
    $region19: #{lstm_model_forward.4} parent=1 // pred_check_branch
      %41 = sbr.rel (0) target = $region21
    $region20: #{lstm_model_forward.4} parent=1 // pred_region
      %43 = dma.done [#allocation5], 16
    $region21: #{lstm_model_forward.4} parent=1 // pred_fallthru
      _
    %v44 = vld [vmem:[%s0] sm:$0xff]
    %v45 = vld [vmem:[%s0 + $0x8] sm:$0xff]
    %v46 = vld [vmem:[#allocation2] sm:$0xff]
    %v47 = vld [vmem:[#allocation2 + $0x8] sm:$0xff]
    %v48 = vld [vmem:[#allocation4] sm:$0x1]
    %v50 = vperm.slane %v48, 0
    %vm52 = vcmask 130048
    %v54 = vsel %vm52, %v44, 0
    %v57 = vsel %vm52, %v45, 0
    %59 = vmatpush.msra.mxu0 0.0
    %60 = vmatpush.msra.mxu0 0.0
    %61 = vmatpush.msra.mxu0 0.0
    %62 = vmatpush.msra.mxu0 0.0
    %63 = vmatpush.msra.mxu0 0.0
    %64 = vmatpush.msra.mxu0 0.0
    %65 = vmatpush.msra.mxu0 0.0
    %66 = vmatpush.msra.mxu0 0.0
    %67 = vmatpush.msra.mxu0 0.0
    %68 = vmatpush.msra.mxu0 0.0
    %69 = vmatpush.msra.mxu0 0.0
    %70 = vmatpush.msra.mxu0 0.0
    %71 = vmatpush.msra.mxu0 0.0
    %72 = vmatpush.msra.mxu0 0.0
    %73 = vmatpush.msra.mxu0 %v47
    %74 = vmatpush.msra.mxu0 %v46
    %75 = vmatmul.f32.gmra.mxu0 %v54
    %v76 = vpop.f32.mrf.mxu0
    %v77 = vadd.f32 %v50, %v76
    %78 = vmatmul.f32.gmra.mxu0 %v57
    %v79 = vpop.f32.mrf.mxu0
    %v80 = vadd.f32 %v50, %v79
    %81 = vdwg.mxu0
    %v82 = vmax.f32 %v77, 0.0
    %v83 = vmax.f32 %v80, 0.0
    %vm84 = vcmask 261120
    %85 = vst.msk [vmem:[%s3] sm:$0xff] %vm84, %v82
    %86 = vst.msk [vmem:[%s3 + $0x8] sm:$0xff] %vm84, %v83
    // Predicated region
    $region22: #{lstm_model_forward.4} parent=1 // pred_check
      _
    $region23: #{lstm_model_forward.4} parent=1 // pred_check_branch
      %88 = sbr.rel (0) target = $region25
    $region24: #{lstm_model_forward.4} parent=1 // pred_region
      _
    $region25: #{lstm_model_forward.4} parent=1 // pred_fallthru
      _
    // Predicated region
    $region26: #{lstm_model_forward.4} parent=1 // pred_check
      _
    $region27: #{lstm_model_forward.4} parent=1 // pred_check_branch
      %90 = sbr.rel (0) target = $region29
    $region28: #{lstm_model_forward.4} parent=1 // pred_region
      _
    $region29: #{lstm_model_forward.4} parent=1 // pred_fallthru
      _
    %91 = vsyncpa [#allocation3], 1
    %92 = vsyncpa [#allocation5], 1

// kernel: lstm_model_forward.7
$region0: #{lstm_model_forward.7}
  #allocation0 [shape = 'u32[]', space=smem, size = 0x4, offset = 0x4, fixed_abs, tag = 'smem constant byte address 0x4 - core index']
  #allocation1 [shape = 'u32[72,128]{1,0:T(1,128)}', space=vmem, size = 0x9000, scoped, tag = 'internal scratch']
  %s0 = inlined_call_operand.vmem [shape: f32[16,64], index: 0, kind: input, shape index: {}]
  %s1 = inlined_call_operand.hbm [shape: f32[1,64], index: 1, kind: input, shape index: {}]
  %s2 = inlined_call_operand.hbm [shape: f32[1,64], index: 2, kind: input, shape index: {}]
  %s3 = inlined_call_operand.hbm [shape: f32[1,64], index: 3, kind: input, shape index: {}]
  %s4 = inlined_call_operand.hbm [shape: f32[1,64], index: 4, kind: input, shape index: {}]
  %s5 = inlined_call_operand.vmem [shape: f32[64,192], index: 5, kind: input, shape index: {}]
  %s6 = inlined_call_operand.hbm [shape: f32[1,192], index: 6, kind: input, shape index: {}]
  %s7 = inlined_call_operand.hbm [shape: f32[64,64], index: 7, kind: input, shape index: {}]
  %s8 = inlined_call_operand.hbm [shape: f32[1,64], index: 8, kind: input, shape index: {}]
  %s9 = inlined_call_operand.vmem [shape: f32[64,8], index: 9, kind: input, shape index: {}]
  %s10 = inlined_call_operand.vmem [shape: f32[8,64], index: 10, kind: input, shape index: {}]
  %s11 = inlined_call_operand.vmem [shape: f32[64,5], index: 11, kind: input, shape index: {}]
  %s12 = inlined_call_operand.hbm [shape: f32[1,5], index: 12, kind: input, shape index: {}]
  %s13 = inlined_call_operand.hbm [shape: f32[1,5], index: 13, kind: input, shape index: {}]
  %s14 = inlined_call_operand.hbm [shape: f32[1,5], index: 14, kind: input, shape index: {}]
  %s15 = inlined_call_operand.hbm [shape: f32[2,5], index: 15, kind: output, shape index: {}]
  %s16 = sld [smem:[#allocation0]]
  $region110: #{lstm_model_forward.7} parent=0
    _
  %s18 = ssub.s32 1, %s16
  %s19 = scalar_select 0, %s18, %s16
  $region1: #{lstm_model_forward.7} parent=0
    #allocation2 [shape = 'u8[512]{0}', space=vmem, size = 0x400, scoped, tag = 'input window, operand 1, single buffered']
    #allocation3 [shape = 's32[1]{0}', space=sflag, size = 0x4, scoped, tag = 'scoped memory for lstm_model_forward.7']
    #allocation4 [shape = 's32[1]{0}', space=sflag, size = 0x4, scoped, tag = 'scoped memory for lstm_model_forward.7']
    #allocation5 [shape = 'u8[512]{0}', space=vmem, size = 0x400, scoped, tag = 'input window, operand 2, single buffered']
    #allocation6 [shape = 's32[1]{0}', space=sflag, size = 0x4, scoped, tag = 'scoped memory for lstm_model_forward.7']
    #allocation7 [shape = 'u8[512]{0}', space=vmem, size = 0x400, scoped, tag = 'input window, operand 3, single buffered']
    #allocation8 [shape = 'u8[512]{0}', space=vmem, size = 0x400, scoped, tag = 'input window, operand 4, single buffered']
    #allocation9 [shape = 's32[1]{0}', space=sflag, size = 0x4, scoped, tag = 'scoped memory for lstm_model_forward.7']
    #allocation10 [shape = 'u8[1024]{0}', space=vmem, size = 0x400, scoped, tag = 'input window, operand 6, single buffered']
    #allocation11 [shape = 'u8[32768]{0}', space=vmem, size = 0x8000, scoped, tag = 'input window, operand 7, single buffered']
    #allocation12 [shape = 's32[1]{0}', space=sflag, size = 0x4, scoped, tag = 'scoped memory for lstm_model_forward.7']
    #allocation13 [shape = 'u8[512]{0}', space=vmem, size = 0x400, scoped, tag = 'input window, operand 8, single buffered']
    #allocation14 [shape = 'u8[512]{0}', space=vmem, size = 0x400, scoped, tag = 'input window, operand 12, single buffered']
    #allocation15 [shape = 's32[1]{0}', space=sflag, size = 0x4, scoped, tag = 'scoped memory for lstm_model_forward.7']
    #allocation16 [shape = 'u8[512]{0}', space=vmem, size = 0x400, scoped, tag = 'input window, operand 13, single buffered']
    #allocation17 [shape = 'u8[512]{0}', space=vmem, size = 0x400, scoped, tag = 'input window, operand 14, single buffered']
    #allocation18 [shape = 's32[1]{0}', space=sflag, size = 0x4, scoped, tag = 'scoped memory for lstm_model_forward.7']
    #allocation19 [shape = 'u8[1024]{0}', space=vmem, size = 0x400, scoped, tag = 'output window, operand 0, single buffered']
    %20 = vsyncpa [#allocation3], 0
    %21 = vsyncpa [#allocation6], 0
    %22 = vsyncpa [#allocation9], 0
    %23 = vsyncpa [#allocation12], 0
    %24 = vsyncpa [#allocation15], 0
    %25 = vsyncpa [#allocation18], 0
    %26 = vsyncpa [#allocation4], 0
    // Predicated region
    $region2: #{lstm_model_forward.7} parent=1 // pred_check
      _
    $region3: #{lstm_model_forward.7} parent=1 // pred_check_branch
      %28 = sbr.rel (0) target = $region5
    $region4: #{lstm_model_forward.7} parent=1 // pred_region
      _
    $region5: #{lstm_model_forward.7} parent=1 // pred_fallthru
      _
    // Predicated region
    $region6: #{lstm_model_forward.7} parent=1 // pred_check
      _
    $region7: #{lstm_model_forward.7} parent=1 // pred_check_branch
      %30 = sbr.rel (0) target = $region9
    $region8: #{lstm_model_forward.7} parent=1 // pred_region
      %32 = vsyncadd [#allocation3], 0
      %s34 = sshll.u32 %s1, 4
      %s35 = int_to_ptr.hbm [resolvable:$true] %s34
      %s36 = sshll.u32 [#allocation2], 4
      %s37 = int_to_ptr.vmem [resolvable:$true] %s36
      %39 = dma.hbm_to_vmem [thread:$0]  %s35, 16, %s37, [#allocation3]
    $region9: #{lstm_model_forward.7} parent=1 // pred_fallthru
      _
    // Predicated region
    $region10: #{lstm_model_forward.7} parent=1 // pred_check
      _
    $region11: #{lstm_model_forward.7} parent=1 // pred_check_branch
      %41 = sbr.rel (0) target = $region13
    $region12: #{lstm_model_forward.7} parent=1 // pred_region
      %43 = vsyncadd [#allocation6], 0
      %s45 = sshll.u32 %s2, 4
      %s46 = int_to_ptr.hbm [resolvable:$true] %s45
      %s47 = sshll.u32 [#allocation5], 4
      %s48 = int_to_ptr.vmem [resolvable:$true] %s47
      %50 = dma.hbm_to_vmem [thread:$0]  %s46, 16, %s48, [#allocation6]
    $region13: #{lstm_model_forward.7} parent=1 // pred_fallthru
      _
    // Predicated region
    $region14: #{lstm_model_forward.7} parent=1 // pred_check
      _
    $region15: #{lstm_model_forward.7} parent=1 // pred_check_branch
      %52 = sbr.rel (0) target = $region17
    $region16: #{lstm_model_forward.7} parent=1 // pred_region
      %54 = vsyncadd [#allocation6], 0
      %s56 = sshll.u32 %s3, 4
      %s57 = int_to_ptr.hbm [resolvable:$true] %s56
      %s58 = sshll.u32 [#allocation7], 4
      %s59 = int_to_ptr.vmem [resolvable:$true] %s58
      %61 = dma.hbm_to_vmem [thread:$0]  %s57, 16, %s59, [#allocation6]
    $region17: #{lstm_model_forward.7} parent=1 // pred_fallthru
      _
    // Predicated region
    $region18: #{lstm_model_forward.7} parent=1 // pred_check
      _
    $region19: #{lstm_model_forward.7} parent=1 // pred_check_branch
      %63 = sbr.rel (0) target = $region21
    $region20: #{lstm_model_forward.7} parent=1 // pred_region
      %65 = vsyncadd [#allocation9], 0
      %s67 = sshll.u32 %s4, 4
      %s68 = int_to_ptr.hbm [resolvable:$true] %s67
      %s69 = sshll.u32 [#allocation8], 4
      %s70 = int_to_ptr.vmem [resolvable:$true] %s69
      %72 = dma.hbm_to_vmem [thread:$0]  %s68, 16, %s70, [#allocation9]
    $region21: #{lstm_model_forward.7} parent=1 // pred_fallthru
      _
    // Predicated region
    $region22: #{lstm_model_forward.7} parent=1 // pred_check
      _
    $region23: #{lstm_model_forward.7} parent=1 // pred_check_branch
      %74 = sbr.rel (0) target = $region25
    $region24: #{lstm_model_forward.7} parent=1 // pred_region
      _
    $region25: #{lstm_model_forward.7} parent=1 // pred_fallthru
      _
    // Predicated region
    $region26: #{lstm_model_forward.7} parent=1 // pred_check
      _
    $region27: #{lstm_model_forward.7} parent=1 // pred_check_branch
      %76 = sbr.rel (0) target = $region29
    $region28: #{lstm_model_forward.7} parent=1 // pred_region
      %78 = vsyncadd [#allocation9], 0
      %s80 = sshll.u32 %s6, 4
      %s81 = int_to_ptr.hbm [resolvable:$true] %s80
      %s82 = sshll.u32 [#allocation10], 4
      %s83 = int_to_ptr.vmem [resolvable:$true] %s82
      %85 = dma.hbm_to_vmem [thread:$0]  %s81, 32, %s83, [#allocation9]
    $region29: #{lstm_model_forward.7} parent=1 // pred_fallthru
      _
    // Predicated region
    $region30: #{lstm_model_forward.7} parent=1 // pred_check
      _
    $region31: #{lstm_model_forward.7} parent=1 // pred_check_branch
      %87 = sbr.rel (0) target = $region33
    $region32: #{lstm_model_forward.7} parent=1 // pred_region
      %89 = vsyncadd [#allocation12], 0
      %s90 = sshll.u32 %s7, 4
      %s91 = int_to_ptr.hbm [resolvable:$true] %s90
      %s92 = sshll.u32 [#allocation11], 4
      %s93 = int_to_ptr.vmem [resolvable:$true] %s92
      %98 = dma.hbm_to_vmem [thread:$0]  %s91, 1024, %s93, [#allocation12], 128, 128, 8
    $region33: #{lstm_model_forward.7} parent=1 // pred_fallthru
      _
    // Predicated region
    $region34: #{lstm_model_forward.7} parent=1 // pred_check
      _
    $region35: #{lstm_model_forward.7} parent=1 // pred_check_branch
      %100 = sbr.rel (0) target = $region37
    $region36: #{lstm_model_forward.7} parent=1 // pred_region
      %102 = vsyncadd [#allocation12], 0
      %s104 = sshll.u32 %s8, 4
      %s105 = int_to_ptr.hbm [resolvable:$true] %s104
      %s106 = sshll.u32 [#allocation13], 4
      %s107 = int_to_ptr.vmem [resolvable:$true] %s106
      %109 = dma.hbm_to_vmem [thread:$0]  %s105, 16, %s107, [#allocation12]
    $region37: #{lstm_model_forward.7} parent=1 // pred_fallthru
      _
    // Predicated region
    $region38: #{lstm_model_forward.7} parent=1 // pred_check
      _
    $region39: #{lstm_model_forward.7} parent=1 // pred_check_branch
      %111 = sbr.rel (0) target = $region41
    $region40: #{lstm_model_forward.7} parent=1 // pred_region
      _
    $region41: #{lstm_model_forward.7} parent=1 // pred_fallthru
      _
    // Predicated region
    $region42: #{lstm_model_forward.7} parent=1 // pred_check
      _
    $region43: #{lstm_model_forward.7} parent=1 // pred_check_branch
      %113 = sbr.rel (0) target = $region45
    $region44: #{lstm_model_forward.7} parent=1 // pred_region
      _
    $region45: #{lstm_model_forward.7} parent=1 // pred_fallthru
      _
    // Predicated region
    $region46: #{lstm_model_forward.7} parent=1 // pred_check
      _
    $region47: #{lstm_model_forward.7} parent=1 // pred_check_branch
      %115 = sbr.rel (0) target = $region49
    $region48: #{lstm_model_forward.7} parent=1 // pred_region
      _
    $region49: #{lstm_model_forward.7} parent=1 // pred_fallthru
      _
    // Predicated region
    $region50: #{lstm_model_forward.7} parent=1 // pred_check
      _
    $region51: #{lstm_model_forward.7} parent=1 // pred_check_branch
      %117 = sbr.rel (0) target = $region53
    $region52: #{lstm_model_forward.7} parent=1 // pred_region
      %119 = vsyncadd [#allocation15], 0
      %s121 = sshll.u32 %s12, 4
      %s122 = int_to_ptr.hbm [resolvable:$true] %s121
      %s123 = sshll.u32 [#allocation14], 4
      %s124 = int_to_ptr.vmem [resolvable:$true] %s123
      %126 = dma.hbm_to_vmem [thread:$0]  %s122, 16, %s124, [#allocation15]
    $region53: #{lstm_model_forward.7} parent=1 // pred_fallthru
      _
    // Predicated region
    $region54: #{lstm_model_forward.7} parent=1 // pred_check
      _
    $region55: #{lstm_model_forward.7} parent=1 // pred_check_branch
      %128 = sbr.rel (0) target = $region57
    $region56: #{lstm_model_forward.7} parent=1 // pred_region
      %130 = vsyncadd [#allocation15], 0
      %s132 = sshll.u32 %s13, 4
      %s133 = int_to_ptr.hbm [resolvable:$true] %s132
      %s134 = sshll.u32 [#allocation16], 4
      %s135 = int_to_ptr.vmem [resolvable:$true] %s134
      %137 = dma.hbm_to_vmem [thread:$0]  %s133, 16, %s135, [#allocation15]
    $region57: #{lstm_model_forward.7} parent=1 // pred_fallthru
      _
    // Predicated region
    $region58: #{lstm_model_forward.7} parent=1 // pred_check
      _
    $region59: #{lstm_model_forward.7} parent=1 // pred_check_branch
      %139 = sbr.rel (0) target = $region61
    $region60: #{lstm_model_forward.7} parent=1 // pred_region
      %141 = vsyncadd [#allocation18], 0
      %s143 = sshll.u32 %s14, 4
      %s144 = int_to_ptr.hbm [resolvable:$true] %s143
      %s145 = sshll.u32 [#allocation17], 4
      %s146 = int_to_ptr.vmem [resolvable:$true] %s145
      %148 = dma.hbm_to_vmem [thread:$0]  %s144, 16, %s146, [#allocation18]
    $region61: #{lstm_model_forward.7} parent=1 // pred_fallthru
      _
    // Predicated region
    $region62: #{lstm_model_forward.7} parent=1 // pred_check
      _
    $region63: #{lstm_model_forward.7} parent=1 // pred_check_branch
      %150 = sbr.rel (0) target = $region65
    $region64: #{lstm_model_forward.7} parent=1 // pred_region
      %152 = dma.done [#allocation3], 16
    $region65: #{lstm_model_forward.7} parent=1 // pred_fallthru
      _
    // Predicated region
    $region66: #{lstm_model_forward.7} parent=1 // pred_check
      _
    $region67: #{lstm_model_forward.7} parent=1 // pred_check_branch
      %154 = sbr.rel (0) target = $region69
    $region68: #{lstm_model_forward.7} parent=1 // pred_region
      %156 = dma.done [#allocation6], 16
    $region69: #{lstm_model_forward.7} parent=1 // pred_fallthru
      _
    // Predicated region
    $region70: #{lstm_model_forward.7} parent=1 // pred_check
      _
    $region71: #{lstm_model_forward.7} parent=1 // pred_check_branch
      %158 = sbr.rel (0) target = $region73
    $region72: #{lstm_model_forward.7} parent=1 // pred_region
      %160 = dma.done [#allocation6], 16
    $region73: #{lstm_model_forward.7} parent=1 // pred_fallthru
      _
    // Predicated region
    $region74: #{lstm_model_forward.7} parent=1 // pred_check
      _
    $region75: #{lstm_model_forward.7} parent=1 // pred_check_branch
      %162 = sbr.rel (0) target = $region77
    $region76: #{lstm_model_forward.7} parent=1 // pred_region
      %164 = dma.done [#allocation9], 16
    $region77: #{lstm_model_forward.7} parent=1 // pred_fallthru
      _
    // Predicated region
    $region78: #{lstm_model_forward.7} parent=1 // pred_check
      _
    $region79: #{lstm_model_forward.7} parent=1 // pred_check_branch
      %166 = sbr.rel (0) target = $region81
    $region80: #{lstm_model_forward.7} parent=1 // pred_region
      %168 = dma.done [#allocation9], 32
    $region81: #{lstm_model_forward.7} parent=1 // pred_fallthru
      _
    // Predicated region
    $region82: #{lstm_model_forward.7} parent=1 // pred_check
      _
    $region83: #{lstm_model_forward.7} parent=1 // pred_check_branch
      %170 = sbr.rel (0) target = $region85
    $region84: #{lstm_model_forward.7} parent=1 // pred_region
      %172 = dma.done [#allocation12], 1024
    $region85: #{lstm_model_forward.7} parent=1 // pred_fallthru
      _
    // Predicated region
    $region86: #{lstm_model_forward.7} parent=1 // pred_check
      _
    $region87: #{lstm_model_forward.7} parent=1 // pred_check_branch
      %174 = sbr.rel (0) target = $region89
    $region88: #{lstm_model_forward.7} parent=1 // pred_region
      %176 = dma.done [#allocation12], 16
    $region89: #{lstm_model_forward.7} parent=1 // pred_fallthru
      _
    // Predicated region
    $region90: #{lstm_model_forward.7} parent=1 // pred_check
      _
    $region91: #{lstm_model_forward.7} parent=1 // pred_check_branch
      %178 = sbr.rel (0) target = $region93
    $region92: #{lstm_model_forward.7} parent=1 // pred_region
      %180 = dma.done [#allocation15], 16
    $region93: #{lstm_model_forward.7} parent=1 // pred_fallthru
      _
    // Predicated region
    $region94: #{lstm_model_forward.7} parent=1 // pred_check
      _
    $region95: #{lstm_model_forward.7} parent=1 // pred_check_branch
      %182 = sbr.rel (0) target = $region97
    $region96: #{lstm_model_forward.7} parent=1 // pred_region
      %184 = dma.done [#allocation15], 16
    $region97: #{lstm_model_forward.7} parent=1 // pred_fallthru
      _
    // Predicated region
    $region98: #{lstm_model_forward.7} parent=1 // pred_check
      _
    $region99: #{lstm_model_forward.7} parent=1 // pred_check_branch
      %186 = sbr.rel (0) target = $region101
    $region100: #{lstm_model_forward.7} parent=1 // pred_region
      %188 = dma.done [#allocation18], 16
    $region101: #{lstm_model_forward.7} parent=1 // pred_fallthru
      _
    %v189 = vld [vmem:[%s0] sm:$0xff]
    %v190 = vld [vmem:[%s0 + $0x8] sm:$0xff]
    %v191 = vld [vmem:[#allocation2] sm:$0x1]
    %v193 = vperm.slane %v191, 0
    %v195 = vmul.f32 %v189, %v193
    %v196 = vmul.f32 %v190, %v193
    %v197 = vld [vmem:[#allocation5] sm:$0x1]
    %v199 = vperm.slane %v197, 0
    %v201 = vadd.f32 %v195, %v199
    %v202 = vadd.f32 %v196, %v199
    %vm203 = vcmask 523264
    %v204 = vsel %vm203, %v201, 0.0
    %205 = vadd.xlane.f32.xlu0 %v204
    %v206 = vpop.xlane.xlu0 %205
    %v207 = vsel %vm203, %v202, 0.0
    %208 = vadd.xlane.f32.xlu0 %v207
    %v209 = vpop.xlane.xlu0 %208
    %v210 = vrcp.pop 64.0
    %v211 = vmul.f32 64.0, %v210
    %v212 = vsub.f32 1.0, %v211
    %v213 = vmul.f32 %v210, %v212
    %v214 = vadd.f32 %v210, %v213
    %vm215 = vweird.f32 %v210
    %v216 = vsel %vm215, %v210, %v214
    %v217 = vmul.f32 %v206, %v216
    %v218 = vmul.f32 %v209, %v216
    %v219 = vsub.f32 %v201, %v217
    %v220 = vsub.f32 %v202, %v218
    %v221 = vmul.f32 %v219, %v219
    %v222 = vmul.f32 %v220, %v220
    %v223 = vsel %vm203, %v221, 0.0
    %224 = vadd.xlane.f32.xlu0 %v223
    %v225 = vpop.xlane.xlu0 %224
    %v226 = vsel %vm203, %v222, 0.0
    %227 = vadd.xlane.f32.xlu0 %v226
    %v228 = vpop.xlane.xlu0 %227
    %v229 = vmul.f32 %v225, %v216
    %v230 = vmul.f32 %v228, %v216
    %v231 = vadd.f32 %v229, 1e-05
    %v232 = vadd.f32 %v230, 1e-05
    %v233 = vrsqrt.pop %v231
    %v234 = vmul.f32 %v233, %v231
    %v235 = vmul.f32 %v234, %v233
    %v236 = vmul.f32 0.5, %v235
    %v237 = vsub.f32 1.5, %v236
    %v238 = vmul.f32 %v233, %v237
    %vm239 = vweird.f32 %v231
    %vm240 = vweird.f32 %v233
    %vm241 = vmor %vm239, %vm240
    %v242 = vsel %vm241, %v233, %v238
    %v243 = vrsqrt.pop %v232
    %v244 = vmul.f32 %v243, %v232
    %v245 = vmul.f32 %v244, %v243
    %v246 = vmul.f32 0.5, %v245
    %v247 = vsub.f32 1.5, %v246
    %v248 = vmul.f32 %v243, %v247
    %vm249 = vweird.f32 %v232
    %vm250 = vweird.f32 %v243
    %vm251 = vmor %vm249, %vm250
    %v252 = vsel %vm251, %v243, %v248
    %v253 = vmul.f32 %v219, %v242
    %v254 = vmul.f32 %v220, %v252
    %v255 = vld [vmem:[#allocation7] sm:$0x1]
    %v257 = vperm.slane %v255, 0
    %v259 = vmul.f32 %v253, %v257
    %v260 = vmul.f32 %v254, %v257
    %v261 = vld [vmem:[#allocation8] sm:$0x1]
    %v263 = vperm.slane %v261, 0
    %v265 = vadd.f32 %v259, %v263
    %v266 = vadd.f32 %v260, %v263
    %v267 = vld [vmem:[%s5] sm:$0xff]
    %v268 = vld [vmem:[%s5 + $0x8] sm:$0xff]
    %v269 = vld [vmem:[%s5 + $0x10] sm:$0xff]
    %v270 = vld [vmem:[%s5 + $0x18] sm:$0xff]
    %v271 = vld [vmem:[%s5 + $0x20] sm:$0xff]
    %v272 = vld [vmem:[%s5 + $0x28] sm:$0xff]
    %v273 = vld [vmem:[%s5 + $0x30] sm:$0xff]
    %v274 = vld [vmem:[%s5 + $0x38] sm:$0xff]
    %v275 = vld [vmem:[%s5 + $0x40] sm:$0xff]
    %v276 = vld [vmem:[%s5 + $0x48] sm:$0xff]
    %v277 = vld [vmem:[%s5 + $0x50] sm:$0xff]
    %v278 = vld [vmem:[%s5 + $0x58] sm:$0xff]
    %v279 = vld [vmem:[%s5 + $0x60] sm:$0xff]
    %v280 = vld [vmem:[%s5 + $0x68] sm:$0xff]
    %v281 = vld [vmem:[%s5 + $0x70] sm:$0xff]
    %v282 = vld [vmem:[%s5 + $0x78] sm:$0xff]
    %v283 = vld [vmem:[#allocation10] sm:$0x3]
    %v285 = vperm.slane %v283, 0
    %v286 = vperm.slane %v283, 1
    %v290 = vsel %vm203, %v265, 0
    %v293 = vsel %vm203, %v266, 0
    %295 = vmatpush.msra.mxu0 0.0
    %296 = vmatpush.msra.mxu0 0.0
    %297 = vmatpush.msra.mxu0 0.0
    %298 = vmatpush.msra.mxu0 0.0
    %299 = vmatpush.msra.mxu0 0.0
    %300 = vmatpush.msra.mxu0 0.0
    %301 = vmatpush.msra.mxu0 0.0
    %302 = vmatpush.msra.mxu0 0.0
    %303 = vmatpush.msra.mxu0 %v281
    %304 = vmatpush.msra.mxu0 %v279
    %305 = vmatpush.msra.mxu0 %v277
    %306 = vmatpush.msra.mxu0 %v275
    %307 = vmatpush.msra.mxu0 %v273
    %308 = vmatpush.msra.mxu0 %v271
    %309 = vmatpush.msra.mxu0 %v269
    %310 = vmatpush.msra.mxu0 %v267
    %311 = vmatmul.f32.gmra.mxu0 %v290
    %v312 = vpop.f32.mrf.mxu0
    %v313 = vadd.f32 %v285, %v312
    %314 = vmatmul.f32.gmra.mxu0 %v293
    %v315 = vpop.f32.mrf.mxu0
    %v316 = vadd.f32 %v285, %v315
    %317 = vdwg.mxu0
    %318 = vmatpush.msra.mxu0 0.0
    %319 = vmatpush.msra.mxu0 0.0
    %320 = vmatpush.msra.mxu0 0.0
    %321 = vmatpush.msra.mxu0 0.0
    %322 = vmatpush.msra.mxu0 0.0
    %323 = vmatpush.msra.mxu0 0.0
    %324 = vmatpush.msra.mxu0 0.0
    %325 = vmatpush.msra.mxu0 0.0
    %326 = vmatpush.msra.mxu0 %v282
    %327 = vmatpush.msra.mxu0 %v280
    %328 = vmatpush.msra.mxu0 %v278
    %329 = vmatpush.msra.mxu0 %v276
    %330 = vmatpush.msra.mxu0 %v274
    %331 = vmatpush.msra.mxu0 %v272
    %332 = vmatpush.msra.mxu0 %v270
    %333 = vmatpush.msra.mxu0 %v268
    %334 = vmatmul.f32.gmra.mxu0 %v290
    %v335 = vpop.f32.mrf.mxu0
    %v336 = vadd.f32 %v286, %v335
    %337 = vmatmul.f32.gmra.mxu0 %v293
    %v338 = vpop.f32.mrf.mxu0
    %v339 = vadd.f32 %v286, %v338
    %340 = vdwg.mxu0
    %v341 = vmul.f32 %v316, 0.35355338
    %343 = vst.sshfl [vmem:[#allocation1] sm:$0xff pattern:$0x73625140] %v341
    %s344 = scalar_lea.vmem [#allocation1], 3
    %v345 = vld [vmem:[%s344] ss:$4 sm:$0xff]
    %346 = vst.sshfl [vmem:[#allocation1 + $0x20] sm:$0xff pattern:$0x73625140] %v341
    %s347 = scalar_lea.vmem [#allocation1], 35
    %v348 = vld [vmem:[%s347] ss:$4 sm:$0xff]
    %349 = vst.sshfl [vmem:[#allocation1] sm:$0xff pattern:$0x73625140] %v341
    %v350 = vld [vmem:[%s344] ss:$4 sm:$0xff]
    %351 = vst.sshfl [vmem:[#allocation1 + $0x20] sm:$0xff pattern:$0x73625140] %v341
    %v352 = vld [vmem:[%s347] ss:$4 sm:$0xff]
    %353 = vst.sshfl [vmem:[#allocation1] sm:$0xff pattern:$0x73625140] %v341
    %v354 = vld [vmem:[%s344] ss:$4 sm:$0xff]
    %355 = vst.sshfl [vmem:[#allocation1 + $0x20] sm:$0xff pattern:$0x73625140] %v341
    %v356 = vld [vmem:[%s347] ss:$4 sm:$0xff]
    %357 = vst.sshfl [vmem:[#allocation1] sm:$0xff pattern:$0x73625140] %v341
    %v358 = vld [vmem:[%s344] ss:$4 sm:$0xff]
    %359 = vst.sshfl [vmem:[#allocation1 + $0x20] sm:$0xff pattern:$0x73625140] %v341
    %v360 = vld [vmem:[%s347] ss:$4 sm:$0xff]
    %v371 = vrot.slane %v313, 2
    %v372 = vrot.slane %v313, 4
    %v373 = vrot.slane %v313, 6
    %v374 = vrot.slane %v316, 2
    %v375 = vrot.slane %v316, 4
    %v376 = vrot.slane %v316, 6
    %377 = vrot.lane.b32.xlu0 %v313, 64
    %v378 = vpop.permute.xlu0 %377
    %379 = vrot.lane.b32.xlu0 %v371, 64
    %v380 = vpop.permute.xlu0 %379
    %381 = vrot.lane.b32.xlu0 %v372, 64
    %v382 = vpop.permute.xlu0 %381
    %383 = vrot.lane.b32.xlu0 %v373, 64
    %v384 = vpop.permute.xlu0 %383
    %385 = vrot.lane.b32.xlu0 %v316, 64
    %v386 = vpop.permute.xlu0 %385
    %387 = vrot.lane.b32.xlu0 %v374, 64
    %v388 = vpop.permute.xlu0 %387
    %389 = vrot.lane.b32.xlu0 %v375, 64
    %v390 = vpop.permute.xlu0 %389
    %391 = vrot.lane.b32.xlu0 %v376, 64
    %v392 = vpop.permute.xlu0 %391
    %v401 = vmul.f32 %v345, %v378
    %v402 = vmul.f32 %v348, %v380
    %v403 = vmul.f32 %v350, %v382
    %v404 = vmul.f32 %v352, %v384
    %v405 = vmul.f32 %v354, %v386
    %v406 = vmul.f32 %v356, %v388
    %v407 = vmul.f32 %v358, %v390
    %v408 = vmul.f32 %v360, %v392
    %v409 = vld [vmem:[%s9] sm:$0xff]
    %v410 = vld [vmem:[%s9 + $0x8] sm:$0xff]
    %v411 = vld [vmem:[%s9 + $0x10] sm:$0xff]
    %v412 = vld [vmem:[%s9 + $0x18] sm:$0xff]
    %v413 = vld [vmem:[%s9 + $0x20] sm:$0xff]
    %v414 = vld [vmem:[%s9 + $0x28] sm:$0xff]
    %v415 = vld [vmem:[%s9 + $0x30] sm:$0xff]
    %v416 = vld [vmem:[%s9 + $0x38] sm:$0xff]
    %425 = vst [vmem:[#allocation1] ss:$4 sm:$0xff] %v401
    %s426 = scalar_lea.vmem [#allocation1], 1
    %427 = vst [vmem:[%s426] ss:$4 sm:$0xff] %v402
    %s428 = scalar_lea.vmem [#allocation1], 2
    %429 = vst [vmem:[%s428] ss:$4 sm:$0xff] %v403
    %s430 = scalar_lea.vmem [#allocation1], 3
    %431 = vst [vmem:[%s430] ss:$4 sm:$0xff] %v404
    %s432 = scalar_lea.vmem [#allocation1], 32
    %433 = vst [vmem:[%s432] ss:$4 sm:$0xff] %v405
    %s434 = scalar_lea.vmem [#allocation1], 33
    %435 = vst [vmem:[%s434] ss:$4 sm:$0xff] %v406
    %s436 = scalar_lea.vmem [#allocation1], 34
    %437 = vst [vmem:[%s436] ss:$4 sm:$0xff] %v407
    %s438 = scalar_lea.vmem [#allocation1], 35
    %439 = vst [vmem:[%s438] ss:$4 sm:$0xff] %v408
    %v440 = vld.sshfl [vmem:[#allocation1] sm:$0xff pattern:$0x73625140]
    %v441 = vld.sshfl [vmem:[#allocation1 + $0x20] sm:$0xff pattern:$0x73625140]
    %v442 = vsel %vm203, %v440, 0
    %v444 = vsel %vm203, %v441, 0
    %446 = vmatpush.msra.mxu0 0.0
    %447 = vmatpush.msra.mxu0 0.0
    %448 = vmatpush.msra.mxu0 0.0
    %449 = vmatpush.msra.mxu0 0.0
    %450 = vmatpush.msra.mxu0 0.0
    %451 = vmatpush.msra.mxu0 0.0
    %452 = vmatpush.msra.mxu0 0.0
    %453 = vmatpush.msra.mxu0 0.0
    %454 = vmatpush.msra.mxu0 %v416
    %455 = vmatpush.msra.mxu0 %v415
    %456 = vmatpush.msra.mxu0 %v414
    %457 = vmatpush.msra.mxu0 %v413
    %458 = vmatpush.msra.mxu0 %v412
    %459 = vmatpush.msra.mxu0 %v411
    %460 = vmatpush.msra.mxu0 %v410
    %461 = vmatpush.msra.mxu0 %v409
    %462 = vmatmul.f32.gmra.mxu0 %v442
    %v463 = vpop.f32.mrf.mxu0
    %v464 = vadd.f32 0.0, %v463
    %465 = vmatmul.f32.gmra.mxu0 %v444
    %v466 = vpop.f32.mrf.mxu0
    %v467 = vadd.f32 0.0, %v466
    %468 = vdwg.mxu0
    %v471 = vrot.slane %v464, 2
    %v472 = vrot.slane %v464, 4
    %v473 = vrot.slane %v464, 6
    %v474 = vrot.slane %v467, 2
    %v475 = vrot.slane %v467, 4
    %v476 = vrot.slane %v467, 6
    %vm483 = vcmask 58368
    %v484 = vsel %vm483, %v464, -inf
    %v485 = vsel %vm483, %v471, -inf
    %v486 = vsel %vm483, %v472, -inf
    %v487 = vsel %vm483, %v473, -inf
    %v488 = vsel %vm483, %v467, -inf
    %v489 = vmax.f32 %v484, %v488
    %v490 = vsel %vm483, %v474, -inf
    %v491 = vmax.f32 %v485, %v490
    %v492 = vsel %vm483, %v475, -inf
    %v493 = vmax.f32 %v486, %v492
    %v494 = vsel %vm483, %v476, -inf
    %v495 = vmax.f32 %v487, %v494
    %v496 = vmax.f32 %v489, %v491
    %v497 = vmax.f32 %v493, %v495
    %v498 = vmax.f32 %v496, %v497
    %v499 = vsub.f32 %v464, %v498
    %v500 = vsub.f32 %v471, %v498
    %v501 = vsub.f32 %v472, %v498
    %v502 = vsub.f32 %v473, %v498
    %v503 = vsub.f32 %v467, %v498
    %v504 = vsub.f32 %v474, %v498
    %v505 = vsub.f32 %v475, %v498
    %v506 = vsub.f32 %v476, %v498
    %v507 = vmul.f32 %v499, 1.442695
    %v508 = vpow.pop %v507
    %v509 = vmul.f32 %v500, 1.442695
    %v510 = vpow.pop %v509
    %v511 = vmul.f32 %v501, 1.442695
    %v512 = vpow.pop %v511
    %v513 = vmul.f32 %v502, 1.442695
    %v514 = vpow.pop %v513
    %v515 = vmul.f32 %v503, 1.442695
    %v516 = vpow.pop %v515
    %v517 = vmul.f32 %v504, 1.442695
    %v518 = vpow.pop %v517
    %v519 = vmul.f32 %v505, 1.442695
    %v520 = vpow.pop %v519
    %v521 = vmul.f32 %v506, 1.442695
    %v522 = vpow.pop %v521
    %v523 = vsel %vm483, %v508, 0.0
    %v524 = vsel %vm483, %v510, 0.0
    %v525 = vadd.f32 %v523, %v524
    %v526 = vsel %vm483, %v512, 0.0
    %v527 = vadd.f32 %v525, %v526
    %v528 = vsel %vm483, %v514, 0.0
    %v529 = vadd.f32 %v527, %v528
    %v530 = vsel %vm483, %v516, 0.0
    %v531 = vadd.f32 %v529, %v530
    %v532 = vsel %vm483, %v518, 0.0
    %v533 = vadd.f32 %v531, %v532
    %v534 = vsel %vm483, %v520, 0.0
    %v535 = vadd.f32 %v533, %v534
    %v536 = vsel %vm483, %v522, 0.0
    %v537 = vadd.f32 %v535, %v536
    %v538 = vrcp.pop %v537
    %v539 = vmul.f32 %v508, %v538
    %v540 = vmul.f32 %v510, %v538
    %v541 = vmul.f32 %v512, %v538
    %v542 = vmul.f32 %v514, %v538
    %v543 = vmul.f32 %v516, %v538
    %v544 = vmul.f32 %v518, %v538
    %v545 = vmul.f32 %v520, %v538
    %v546 = vmul.f32 %v522, %v538
    %v547 = vld [vmem:[%s10] sm:$0xff]
    %556 = vst [vmem:[#allocation1] ss:$4 sm:$0xff] %v539
    %s557 = scalar_lea.vmem [#allocation1], 1
    %558 = vst [vmem:[%s557] ss:$4 sm:$0xff] %v540
    %s559 = scalar_lea.vmem [#allocation1], 2
    %560 = vst [vmem:[%s559] ss:$4 sm:$0xff] %v541
    %s561 = scalar_lea.vmem [#allocation1], 3
    %562 = vst [vmem:[%s561] ss:$4 sm:$0xff] %v542
    %s563 = scalar_lea.vmem [#allocation1], 32
    %564 = vst [vmem:[%s563] ss:$4 sm:$0xff] %v543
    %s565 = scalar_lea.vmem [#allocation1], 33
    %566 = vst [vmem:[%s565] ss:$4 sm:$0xff] %v544
    %s567 = scalar_lea.vmem [#allocation1], 34
    %568 = vst [vmem:[%s567] ss:$4 sm:$0xff] %v545
    %s569 = scalar_lea.vmem [#allocation1], 35
    %570 = vst [vmem:[%s569] ss:$4 sm:$0xff] %v546
    %v571 = vld.sshfl [vmem:[#allocation1] sm:$0xff pattern:$0x73625140]
    %v572 = vld.sshfl [vmem:[#allocation1 + $0x20] sm:$0xff pattern:$0x73625140]
    %vm573 = vcmask 64512
    %v574 = vsel %vm573, %v571, 0
    %v576 = vsel %vm573, %v572, 0
    %578 = vmatpush.msra.mxu0 0.0
    %579 = vmatpush.msra.mxu0 0.0
    %580 = vmatpush.msra.mxu0 0.0
    %581 = vmatpush.msra.mxu0 0.0
    %582 = vmatpush.msra.mxu0 0.0
    %583 = vmatpush.msra.mxu0 0.0
    %584 = vmatpush.msra.mxu0 0.0
    %585 = vmatpush.msra.mxu0 0.0
    %586 = vmatpush.msra.mxu0 0.0
    %587 = vmatpush.msra.mxu0 0.0
    %588 = vmatpush.msra.mxu0 0.0
    %589 = vmatpush.msra.mxu0 0.0
    %590 = vmatpush.msra.mxu0 0.0
    %591 = vmatpush.msra.mxu0 0.0
    %592 = vmatpush.msra.mxu0 0.0
    %593 = vmatpush.msra.mxu0 %v547
    %594 = vmatmul.f32.gmra.mxu0 %v574
    %v595 = vpop.f32.mrf.mxu0
    %v596 = vadd.f32 0.0, %v595
    %597 = vmatmul.f32.gmra.mxu0 %v576
    %v598 = vpop.f32.mrf.mxu0
    %v599 = vadd.f32 0.0, %v598
    %600 = vdwg.mxu0
    %v601 = vmul.f32 %v596, %v336
    %v602 = vmul.f32 %v599, %v339
    %v605 = vrot.slane %v601, 2
    %v606 = vrot.slane %v601, 4
    %v607 = vrot.slane %v601, 6
    %v608 = vrot.slane %v602, 2
    %v609 = vrot.slane %v602, 4
    %v610 = vrot.slane %v602, 6
    %vm617 = vcmask 517120
    %v618 = vsel %vm617, %v601, 0.0
    %v619 = vsel %vm617, %v605, 0.0
    %v620 = vadd.f32 %v618, %v619
    %v621 = vsel %vm617, %v606, 0.0
    %v622 = vadd.f32 %v620, %v621
    %v623 = vsel %vm617, %v607, 0.0
    %v624 = vadd.f32 %v622, %v623
    %v625 = vsel %vm617, %v602, 0.0
    %v626 = vadd.f32 %v624, %v625
    %v627 = vsel %vm617, %v608, 0.0
    %v628 = vadd.f32 %v626, %v627
    %v629 = vsel %vm617, %v609, 0.0
    %v630 = vadd.f32 %v628, %v629
    %v631 = vsel %vm617, %v610, 0.0
    %v632 = vadd.f32 %v630, %v631
    %v633 = vld [vmem:[#allocation11] sm:$0xff]
    %v634 = vld [vmem:[#allocation11 + $0x8] sm:$0xff]
    %v635 = vld [vmem:[#allocation11 + $0x10] sm:$0xff]
    %v636 = vld [vmem:[#allocation11 + $0x18] sm:$0xff]
    %v637 = vld [vmem:[#allocation11 + $0x20] sm:$0xff]
    %v638 = vld [vmem:[#allocation11 + $0x28] sm:$0xff]
    %v639 = vld [vmem:[#allocation11 + $0x30] sm:$0xff]
    %v640 = vld [vmem:[#allocation11 + $0x38] sm:$0xff]
    %v641 = vld [vmem:[#allocation13] sm:$0x1]
    %v643 = vperm.slane %v641, 0
    %v646 = vsel %vm203, %v632, 0
    %648 = vmatpush.msra.mxu0 0.0
    %649 = vmatpush.msra.mxu0 0.0
    %650 = vmatpush.msra.mxu0 0.0
    %651 = vmatpush.msra.mxu0 0.0
    %652 = vmatpush.msra.mxu0 0.0
    %653 = vmatpush.msra.mxu0 0.0
    %654 = vmatpush.msra.mxu0 0.0
    %655 = vmatpush.msra.mxu0 0.0
    %656 = vmatpush.msra.mxu0 %v640
    %657 = vmatpush.msra.mxu0 %v639
    %658 = vmatpush.msra.mxu0 %v638
    %659 = vmatpush.msra.mxu0 %v637
    %660 = vmatpush.msra.mxu0 %v636
    %661 = vmatpush.msra.mxu0 %v635
    %662 = vmatpush.msra.mxu0 %v634
    %663 = vmatpush.msra.mxu0 %v633
    %664 = vmatmul.f32.gmra.mxu0 %v646
    %v665 = vpop.f32.mrf.mxu0
    %v666 = vadd.f32 %v643, %v665
    %667 = vdwg.mxu0
    %v668 = vld [vmem:[%s11] sm:$0xff]
    %v669 = vld [vmem:[%s11 + $0x8] sm:$0xff]
    %v670 = vld [vmem:[%s11 + $0x10] sm:$0xff]
    %v671 = vld [vmem:[%s11 + $0x18] sm:$0xff]
    %v672 = vld [vmem:[%s11 + $0x20] sm:$0xff]
    %v673 = vld [vmem:[%s11 + $0x28] sm:$0xff]
    %v674 = vld [vmem:[%s11 + $0x30] sm:$0xff]
    %v675 = vld [vmem:[%s11 + $0x38] sm:$0xff]
    %v676 = vld [vmem:[#allocation14] sm:$0x1]
    %v678 = vperm.slane %v676, 0
    %v681 = vsel %vm203, %v666, 0
    %683 = vmatpush.msra.mxu0 0.0
    %684 = vmatpush.msra.mxu0 0.0
    %685 = vmatpush.msra.mxu0 0.0
    %686 = vmatpush.msra.mxu0 0.0
    %687 = vmatpush.msra.mxu0 0.0
    %688 = vmatpush.msra.mxu0 0.0
    %689 = vmatpush.msra.mxu0 0.0
    %690 = vmatpush.msra.mxu0 0.0
    %691 = vmatpush.msra.mxu0 %v675
    %692 = vmatpush.msra.mxu0 %v674
    %693 = vmatpush.msra.mxu0 %v673
    %694 = vmatpush.msra.mxu0 %v672
    %695 = vmatpush.msra.mxu0 %v671
    %696 = vmatpush.msra.mxu0 %v670
    %697 = vmatpush.msra.mxu0 %v669
    %698 = vmatpush.msra.mxu0 %v668
    %699 = vmatmul.f32.gmra.mxu0 %v681
    %v700 = vpop.f32.mrf.mxu0
    %v701 = vadd.f32 %v678, %v700
    %702 = vdwg.mxu0
    %vm703 = vcmask 33792
    %v704 = vsel %vm703, %v701, 0.0
    %705 = vadd.xlane.f32.xlu0 %v704
    %v706 = vpop.xlane.xlu0 %705
    %v707 = vrcp.pop 5.0
    %v708 = vmul.f32 5.0, %v707
    %v709 = vsub.f32 1.0, %v708
    %v710 = vmul.f32 %v707, %v709
    %v711 = vadd.f32 %v707, %v710
    %vm712 = vweird.f32 %v707
    %v713 = vsel %vm712, %v707, %v711
    %v714 = vmul.f32 %v706, %v713
    %v715 = vsub.f32 %v701, %v714
    %v716 = vmul.f32 %v715, %v715
    %v717 = vsel %vm703, %v716, 0.0
    %718 = vadd.xlane.f32.xlu0 %v717
    %v719 = vpop.xlane.xlu0 %718
    %v720 = vmul.f32 %v719, %v713
    %v721 = vadd.f32 %v720, 1e-05
    %v722 = vrsqrt.pop %v721
    %v723 = vmul.f32 %v722, %v721
    %v724 = vmul.f32 %v723, %v722
    %v725 = vmul.f32 0.5, %v724
    %v726 = vsub.f32 1.5, %v725
    %v727 = vmul.f32 %v722, %v726
    %vm728 = vweird.f32 %v721
    %vm729 = vweird.f32 %v722
    %vm730 = vmor %vm728, %vm729
    %v731 = vsel %vm730, %v722, %v727
    %v732 = vmul.f32 %v715, %v731
    %v733 = vld [vmem:[#allocation16] sm:$0x1]
    %v735 = vperm.slane %v733, 0
    %v737 = vmul.f32 %v732, %v735
    %v738 = vld [vmem:[#allocation17] sm:$0x1]
    %v740 = vperm.slane %v738, 0
    %v742 = vadd.f32 %v737, %v740
    %743 = vst.msk [vmem:[#allocation19] sm:$0x3] %vm703, %v742
    // Predicated region
    $region102: #{lstm_model_forward.7} parent=1 // pred_check
      _
    $region103: #{lstm_model_forward.7} parent=1 // pred_check_branch
      %745 = sbr.rel (0) target = $region105
    $region104: #{lstm_model_forward.7} parent=1 // pred_region
      %747 = vsyncadd [#allocation4], 0
      %s749 = sshll.u32 [#allocation19], 4
      %s750 = int_to_ptr.vmem [resolvable:$true] %s749
      %s751 = sshll.u32 %s15, 4
      %s752 = int_to_ptr.hbm [resolvable:$true] %s751
      %754 = dma.vmem_to_hbm [thread:$0]  %s750, 32, %s752, [#allocation4]
    $region105: #{lstm_model_forward.7} parent=1 // pred_fallthru
      _
    // Predicated region
    $region106: #{lstm_model_forward.7} parent=1 // pred_check
      _
    $region107: #{lstm_model_forward.7} parent=1 // pred_check_branch
      %756 = sbr.rel (0) target = $region109
    $region108: #{lstm_model_forward.7} parent=1 // pred_region
      %758 = dma.done [#allocation4], 32
    $region109: #{lstm_model_forward.7} parent=1 // pred_fallthru
      _
    %759 = vsyncpa [#allocation3], 1
    %760 = vsyncpa [#allocation6], 1
    %761 = vsyncpa [#allocation9], 1
    %762 = vsyncpa [#allocation12], 1
    %763 = vsyncpa [#allocation15], 1
    %764 = vsyncpa [#allocation18], 1
    %765 = vsyncpa [#allocation4], 1

// kernel: lstm_model_forward.5
$region0: #{lstm_model_forward.5}
  #allocation0 [shape = 'u32[]', space=smem, size = 0x4, offset = 0x4, fixed_abs, tag = 'smem constant byte address 0x4 - core index']
  #allocation1 [shape = 'u32[72,128]{1,0:T(1,128)}', space=vmem, size = 0x9000, scoped, tag = 'internal scratch']
  %s0 = inlined_call_operand.vmem [shape: f32[16,32], index: 0, kind: input, shape index: {}]
  %s1 = inlined_call_operand.hbm [shape: f32[2,32,128], index: 1, kind: input, shape index: {}]
  %s2 = inlined_call_operand.hbm [shape: f32[2,32,128], index: 2, kind: input, shape index: {}]
  %s3 = inlined_call_operand.hbm [shape: f32[2,1,128], index: 3, kind: input, shape index: {}]
  %s4 = inlined_call_operand.vmem [shape: f32[16,64], index: 4, kind: output, shape index: {}]
  %s5 = sld [smem:[#allocation0]]
  $region38: #{lstm_model_forward.5} parent=0
    _
  %s7 = ssub.s32 1, %s5
  %s8 = scalar_select 0, %s7, %s5
  $region1: #{lstm_model_forward.5} parent=0
    #allocation2 [shape = 'u8[32768]{0}', space=vmem, size = 0x8000, scoped, tag = 'input window, operand 1, single buffered']
    #allocation3 [shape = 's32[1]{0}', space=sflag, size = 0x4, scoped, tag = 'scoped memory for lstm_model_forward.5']
    #allocation4 [shape = 'u8[32768]{0}', space=vmem, size = 0x8000, scoped, tag = 'input window, operand 2, single buffered']
    #allocation5 [shape = 's32[1]{0}', space=sflag, size = 0x4, scoped, tag = 'scoped memory for lstm_model_forward.5']
    #allocation6 [shape = 'u8[1024]{0}', space=vmem, size = 0x400, scoped, tag = 'input window, operand 3, single buffered']
    %9 = vsyncpa [#allocation3], 0
    %10 = vsyncpa [#allocation5], 0
    // Predicated region
    $region2: #{lstm_model_forward.5} parent=1 // pred_check
      _
    $region3: #{lstm_model_forward.5} parent=1 // pred_check_branch
      %12 = sbr.rel (0) target = $region5
    $region4: #{lstm_model_forward.5} parent=1 // pred_region
      _
    $region5: #{lstm_model_forward.5} parent=1 // pred_fallthru
      _
    // Predicated region
    $region6: #{lstm_model_forward.5} parent=1 // pred_check
      _
    $region7: #{lstm_model_forward.5} parent=1 // pred_check_branch
      %14 = sbr.rel (0) target = $region9
    $region8: #{lstm_model_forward.5} parent=1 // pred_region
      %16 = vsyncadd [#allocation3], 0
      %s17 = sshll.u32 %s1, 4
      %s18 = int_to_ptr.hbm [resolvable:$true] %s17
      %s19 = sshll.u32 [#allocation2], 4
      %s20 = int_to_ptr.vmem [resolvable:$true] %s19
      %25 = dma.hbm_to_vmem [thread:$0]  %s18, 1024, %s20, [#allocation3], 128, 128, 8
    $region9: #{lstm_model_forward.5} parent=1 // pred_fallthru
      _
    // Predicated region
    $region10: #{lstm_model_forward.5} parent=1 // pred_check
      _
    $region11: #{lstm_model_forward.5} parent=1 // pred_check_branch
      %27 = sbr.rel (0) target = $region13
    $region12: #{lstm_model_forward.5} parent=1 // pred_region
      %29 = vsyncadd [#allocation5], 0
      %s30 = sshll.u32 %s2, 4
      %s31 = int_to_ptr.hbm [resolvable:$true] %s30
      %s32 = sshll.u32 [#allocation4], 4
      %s33 = int_to_ptr.vmem [resolvable:$true] %s32
      %38 = dma.hbm_to_vmem [thread:$0]  %s31, 1024, %s33, [#allocation5], 128, 128, 8
    $region13: #{lstm_model_forward.5} parent=1 // pred_fallthru
      _
    // Predicated region
    $region14: #{lstm_model_forward.5} parent=1 // pred_check
      _
    $region15: #{lstm_model_forward.5} parent=1 // pred_check_branch
      %40 = sbr.rel (0) target = $region17
    $region16: #{lstm_model_forward.5} parent=1 // pred_region
      %42 = vsyncadd [#allocation5], 0
      %s43 = sshll.u32 %s3, 4
      %s44 = int_to_ptr.hbm [resolvable:$true] %s43
      %s45 = sshll.u32 [#allocation6], 4
      %s46 = int_to_ptr.vmem [resolvable:$true] %s45
      %51 = dma.hbm_to_vmem [thread:$0]  %s44, 32, %s46, [#allocation5], 16, 16, 1
    $region17: #{lstm_model_forward.5} parent=1 // pred_fallthru
      _
    // Predicated region
    $region18: #{lstm_model_forward.5} parent=1 // pred_check
      _
    $region19: #{lstm_model_forward.5} parent=1 // pred_check_branch
      %53 = sbr.rel (0) target = $region21
    $region20: #{lstm_model_forward.5} parent=1 // pred_region
      %55 = dma.done [#allocation3], 1024
    $region21: #{lstm_model_forward.5} parent=1 // pred_fallthru
      _
    // Predicated region
    $region22: #{lstm_model_forward.5} parent=1 // pred_check
      _
    $region23: #{lstm_model_forward.5} parent=1 // pred_check_branch
      %57 = sbr.rel (0) target = $region25
    $region24: #{lstm_model_forward.5} parent=1 // pred_region
      %59 = dma.done [#allocation5], 1024
    $region25: #{lstm_model_forward.5} parent=1 // pred_fallthru
      _
    // Predicated region
    $region26: #{lstm_model_forward.5} parent=1 // pred_check
      _
    $region27: #{lstm_model_forward.5} parent=1 // pred_check_branch
      %61 = sbr.rel (0) target = $region29
    $region28: #{lstm_model_forward.5} parent=1 // pred_region
      %63 = dma.done [#allocation5], 32
    $region29: #{lstm_model_forward.5} parent=1 // pred_fallthru
      _
    %v64 = vld [vmem:[%s0] sm:$0xff]
    %v65 = vld [vmem:[%s0 + $0x8] sm:$0xff]
    %v66 = vld [vmem:[#allocation2] sm:$0xff]
    %v67 = vld [vmem:[#allocation2 + $0x8] sm:$0xff]
    %v68 = vld [vmem:[#allocation2 + $0x10] sm:$0xff]
    %v69 = vld [vmem:[#allocation2 + $0x18] sm:$0xff]
    %v70 = vld [vmem:[#allocation6] sm:$0x1]
    %v72 = vperm.slane %v70, 0
    %vm74 = vcmask 261120
    %v76 = vsel %vm74, %v64, 0
    %v79 = vsel %vm74, %v65, 0
    %81 = vmatpush.msra.mxu0 0.0
    %82 = vmatpush.msra.mxu0 0.0
    %83 = vmatpush.msra.mxu0 0.0
    %84 = vmatpush.msra.mxu0 0.0
    %85 = vmatpush.msra.mxu0 0.0
    %86 = vmatpush.msra.mxu0 0.0
    %87 = vmatpush.msra.mxu0 0.0
    %88 = vmatpush.msra.mxu0 0.0
    %89 = vmatpush.msra.mxu0 0.0
    %90 = vmatpush.msra.mxu0 0.0
    %91 = vmatpush.msra.mxu0 0.0
    %92 = vmatpush.msra.mxu0 0.0
    %93 = vmatpush.msra.mxu0 %v69
    %94 = vmatpush.msra.mxu0 %v68
    %95 = vmatpush.msra.mxu0 %v67
    %96 = vmatpush.msra.mxu0 %v66
    %97 = vmatmul.f32.gmra.mxu0 %v76
    %v98 = vpop.f32.mrf.mxu0
    %v99 = vadd.f32 %v72, %v98
    %100 = vmatmul.f32.gmra.mxu0 %v79
    %v101 = vpop.f32.mrf.mxu0
    %v102 = vadd.f32 %v72, %v101
    %103 = vdwg.mxu0
    %s104 = scalar_lea.vmem [#allocation2], 32
    %v105 = vld [vmem:[%s104] sm:$0xff]
    %v106 = vld [vmem:[%s104 + $0x8] sm:$0xff]
    %v107 = vld [vmem:[%s104 + $0x10] sm:$0xff]
    %v108 = vld [vmem:[%s104 + $0x18] sm:$0xff]
    %s109 = scalar_lea.vmem [#allocation6], 1
    %v110 = vld [vmem:[%s109] sm:$0x1]
    %v112 = vperm.slane %v110, 0
    %114 = vmatpush.msra.mxu0 0.0
    %115 = vmatpush.msra.mxu0 0.0
    %116 = vmatpush.msra.mxu0 0.0
    %117 = vmatpush.msra.mxu0 0.0
    %118 = vmatpush.msra.mxu0 0.0
    %119 = vmatpush.msra.mxu0 0.0
    %120 = vmatpush.msra.mxu0 0.0
    %121 = vmatpush.msra.mxu0 0.0
    %122 = vmatpush.msra.mxu0 0.0
    %123 = vmatpush.msra.mxu0 0.0
    %124 = vmatpush.msra.mxu0 0.0
    %125 = vmatpush.msra.mxu0 0.0
    %126 = vmatpush.msra.mxu0 %v108
    %127 = vmatpush.msra.mxu0 %v107
    %128 = vmatpush.msra.mxu0 %v106
    %129 = vmatpush.msra.mxu0 %v105
    %130 = vmatmul.f32.gmra.mxu0 %v76
    %v131 = vpop.f32.mrf.mxu0
    %v132 = vadd.f32 %v112, %v131
    %133 = vmatmul.f32.gmra.mxu0 %v79
    %v134 = vpop.f32.mrf.mxu0
    %v135 = vadd.f32 %v112, %v134
    %136 = vdwg.mxu0
    %v137 = vld [vmem:[#allocation4] sm:$0xff]
    %v138 = vld [vmem:[#allocation4 + $0x8] sm:$0xff]
    %v139 = vld [vmem:[#allocation4 + $0x10] sm:$0xff]
    %v140 = vld [vmem:[#allocation4 + $0x18] sm:$0xff]
    %s141 = scalar_lea.vmem [#allocation4], 32
    %v142 = vld [vmem:[%s141] sm:$0xff]
    %v143 = vld [vmem:[%s141 + $0x8] sm:$0xff]
    %v144 = vld [vmem:[%s141 + $0x10] sm:$0xff]
    %v145 = vld [vmem:[%s141 + $0x18] sm:$0xff]
    %v147 = vsel %vm74, 0.0, 0
    %149 = vmatpush.msra.mxu0 0.0
    %150 = vmatpush.msra.mxu0 0.0
    %151 = vmatpush.msra.mxu0 0.0
    %152 = vmatpush.msra.mxu0 0.0
    %153 = vmatpush.msra.mxu0 0.0
    %154 = vmatpush.msra.mxu0 0.0
    %155 = vmatpush.msra.mxu0 0.0
    %156 = vmatpush.msra.mxu0 0.0
    %157 = vmatpush.msra.mxu0 0.0
    %158 = vmatpush.msra.mxu0 0.0
    %159 = vmatpush.msra.mxu0 0.0
    %160 = vmatpush.msra.mxu0 0.0
    %161 = vmatpush.msra.mxu0 %v140
    %162 = vmatpush.msra.mxu0 %v139
    %163 = vmatpush.msra.mxu0 %v138
    %164 = vmatpush.msra.mxu0 %v137
    %165 = vmatmul.f32.gmra.mxu0 %v147
    %v166 = vpop.f32.mrf.mxu0
    %v167 = vadd.f32 0.0, %v166
    %168 = vdwg.mxu0
    %v169 = vadd.f32 %v99, %v167
    %v170 = vxor.u32 %v169, 2147483648
    %v171 = vmul.f32 %v170, 1.442695
    %v172 = vpow.pop %v171
    %v173 = vadd.f32 %v172, 1.0
    %v174 = vrcp.pop %v173
    %v175 = vmul.f32 %v173, %v174
    %v176 = vsub.f32 1.0, %v175
    %v177 = vmul.f32 %v174, %v176
    %v178 = vadd.f32 %v174, %v177
    %vm179 = vweird.f32 %v173
    %vm180 = vweird.f32 %v174
    %vm181 = vmor %vm179, %vm180
    %v182 = vsel %vm181, %v174, %v178
    %v183 = vand.u32 2147483647, %v173
    %vm184 = vcmp.eq.f32.partialorder %v183, 8.507059e+37
    %v185 = vand.u32 %v173, 2147483648
    %v186 = vor.u32 1.1754944e-38, %v185
    %v187 = vsel %vm184, %v186, %v182
    %v188 = vmul.f32 1.0, %v187
    %v189 = vtanh.pop %v169
    %v190 = vmul.f32 %v188, 0.0
    %192 = vrot.lane.b32.xlu0 %v189, 64
    %v193 = vpop.permute.xlu0 %192
    %v195 = vmul.f32 %v188, %v193
    %197 = vrot.lane.b32.xlu0 %v195, 32
    %v198 = vpop.permute.xlu0 %197
    %v200 = vadd.f32 %v190, %v198
    %v201 = vtanh.pop %v200
    %203 = vrot.lane.b32.xlu0 %v201, 64
    %v204 = vpop.permute.xlu0 %203
    %v206 = vmul.f32 %v188, %v204
    %208 = vrot.lane.b32.xlu0 %v206, 32
    %v209 = vpop.permute.xlu0 %208
    %vm211 = vcmask 254976
    %212 = vst.msk [vmem:[%s4] sm:$0x3] %vm211, %v209
    %213 = vmatpush.msra.mxu0 0.0
    %214 = vmatpush.msra.mxu0 0.0
    %215 = vmatpush.msra.mxu0 0.0
    %216 = vmatpush.msra.mxu0 0.0
    %217 = vmatpush.msra.mxu0 0.0
    %218 = vmatpush.msra.mxu0 0.0
    %219 = vmatpush.msra.mxu0 0.0
    %220 = vmatpush.msra.mxu0 0.0
    %221 = vmatpush.msra.mxu0 0.0
    %222 = vmatpush.msra.mxu0 0.0
    %223 = vmatpush.msra.mxu0 0.0
    %224 = vmatpush.msra.mxu0 0.0
    %225 = vmatpush.msra.mxu0 %v145
    %226 = vmatpush.msra.mxu0 %v144
    %227 = vmatpush.msra.mxu0 %v143
    %228 = vmatpush.msra.mxu0 %v142
    %229 = vmatmul.f32.gmra.mxu0 %v147
    %v230 = vpop.f32.mrf.mxu0
    %v231 = vadd.f32 0.0, %v230
    %232 = vdwg.mxu0
    %v234 = vrot.slane %v231, 2
    %v236 = vadd.f32 %v135, %v234
    %v237 = vxor.u32 %v236, 2147483648
    %v238 = vmul.f32 %v237, 1.442695
    %v239 = vpow.pop %v238
    %v240 = vadd.f32 %v239, 1.0
    %v241 = vrcp.pop %v240
    %v242 = vmul.f32 %v240, %v241
    %v243 = vsub.f32 1.0, %v242
    %v244 = vmul.f32 %v241, %v243
    %v245 = vadd.f32 %v241, %v244
    %vm246 = vweird.f32 %v240
    %vm247 = vweird.f32 %v241
    %vm248 = vmor %vm246, %vm247
    %v249 = vsel %vm248, %v241, %v245
    %v250 = vand.u32 2147483647, %v240
    %vm251 = vcmp.eq.f32.partialorder %v250, 8.507059e+37
    %v252 = vand.u32 %v240, 2147483648
    %v253 = vor.u32 1.1754944e-38, %v252
    %v254 = vsel %vm251, %v253, %v249
    %v255 = vmul.f32 1.0, %v254
    %v256 = vtanh.pop %v236
    %v257 = vmul.f32 %v255, 0.0
    %259 = vrot.lane.b32.xlu0 %v256, 64
    %v260 = vpop.permute.xlu0 %259
    %v262 = vmul.f32 %v255, %v260
    %264 = vrot.lane.b32.xlu0 %v262, 32
    %v265 = vpop.permute.xlu0 %264
    %v267 = vadd.f32 %v257, %v265
    %v268 = vtanh.pop %v267
    %270 = vrot.lane.b32.xlu0 %v268, 64
    %v271 = vpop.permute.xlu0 %270
    %v273 = vmul.f32 %v255, %v271
    %275 = vrot.lane.b32.xlu0 %v273, 64
    %v276 = vpop.permute.xlu0 %275
    %vm278 = vcmask 523526
    %279 = vst.msk [vmem:[%s4 + $0x8] sm:$0xc0] %vm278, %v276
    %v280 = vsel %vm74, %v209, 0
    %282 = vmatpush.msra.mxu0 0.0
    %283 = vmatpush.msra.mxu0 0.0
    %284 = vmatpush.msra.mxu0 0.0
    %285 = vmatpush.msra.mxu0 0.0
    %286 = vmatpush.msra.mxu0 0.0
    %287 = vmatpush.msra.mxu0 0.0
    %288 = vmatpush.msra.mxu0 0.0
    %289 = vmatpush.msra.mxu0 0.0
    %290 = vmatpush.msra.mxu0 0.0
    %291 = vmatpush.msra.mxu0 0.0
    %292 = vmatpush.msra.mxu0 0.0
    %293 = vmatpush.msra.mxu0 0.0
    %294 = vmatpush.msra.mxu0 %v140
    %295 = vmatpush.msra.mxu0 %v139
    %296 = vmatpush.msra.mxu0 %v138
    %297 = vmatpush.msra.mxu0 %v137
    %298 = vmatmul.f32.gmra.mxu0 %v280
    %v299 = vpop.f32.mrf.mxu0
    %v300 = vadd.f32 0.0, %v299
    %301 = vdwg.mxu0
    %v303 = vrot.slane %v300, 6
    %v305 = vadd.f32 %v99, %v303
    %v306 = vxor.u32 %v305, 2147483648
    %v307 = vmul.f32 %v306, 1.442695
    %v308 = vpow.pop %v307
    %v309 = vadd.f32 %v308, 1.0
    %v310 = vrcp.pop %v309
    %v311 = vmul.f32 %v309, %v310
    %v312 = vsub.f32 1.0, %v311
    %v313 = vmul.f32 %v310, %v312
    %v314 = vadd.f32 %v310, %v313
    %vm315 = vweird.f32 %v309
    %vm316 = vweird.f32 %v310
    %vm317 = vmor %vm315, %vm316
    %v318 = vsel %vm317, %v310, %v314
    %v319 = vand.u32 2147483647, %v309
    %vm320 = vcmp.eq.f32.partialorder %v319, 8.507059e+37
    %v321 = vand.u32 %v309, 2147483648
    %v322 = vor.u32 1.1754944e-38, %v321
    %v323 = vsel %vm320, %v322, %v318
    %v324 = vmul.f32 1.0, %v323
    %v325 = vtanh.pop %v305
    %v327 = vrot.slane %v200, 6
    %v329 = vmul.f32 %v324, %v327
    %331 = vrot.lane.b32.xlu0 %v325, 64
    %v332 = vpop.permute.xlu0 %331
    %v334 = vmul.f32 %v324, %v332
    %336 = vrot.lane.b32.xlu0 %v334, 32
    %v337 = vpop.permute.xlu0 %336
    %v339 = vadd.f32 %v329, %v337
    %v340 = vtanh.pop %v339
    %342 = vrot.lane.b32.xlu0 %v340, 64
    %v343 = vpop.permute.xlu0 %342
    %v345 = vmul.f32 %v324, %v343
    %347 = vrot.lane.b32.xlu0 %v345, 32
    %v348 = vpop.permute.xlu0 %347
    %vm350 = vcmask 257026
    %351 = vst.msk [vmem:[%s4] sm:$0xc] %vm350, %v348
    %v352 = vrot.slane %v273, 6
    %353 = vrot.lane.b32.xlu0 %v352, 32
    %v354 = vpop.permute.xlu0 %353
    %v355 = vsel %vm74, %v354, 0
    %357 = vmatpush.msra.mxu0 0.0
    %358 = vmatpush.msra.mxu0 0.0
    %359 = vmatpush.msra.mxu0 0.0
    %360 = vmatpush.msra.mxu0 0.0
    %361 = vmatpush.msra.mxu0 0.0
    %362 = vmatpush.msra.mxu0 0.0
    %363 = vmatpush.msra.mxu0 0.0
    %364 = vmatpush.msra.mxu0 0.0
    %365 = vmatpush.msra.mxu0 0.0
    %366 = vmatpush.msra.mxu0 0.0
    %367 = vmatpush.msra.mxu0 0.0
    %368 = vmatpush.msra.mxu0 0.0
    %369 = vmatpush.msra.mxu0 %v145
    %370 = vmatpush.msra.mxu0 %v144
    %371 = vmatpush.msra.mxu0 %v143
    %372 = vmatpush.msra.mxu0 %v142
    %373 = vmatmul.f32.gmra.mxu0 %v355
    %v374 = vpop.f32.mrf.mxu0
    %v375 = vadd.f32 0.0, %v374
    %376 = vdwg.mxu0
    %v378 = vrot.slane %v375, 4
    %v380 = vadd.f32 %v135, %v378
    %v381 = vxor.u32 %v380, 2147483648
    %v382 = vmul.f32 %v381, 1.442695
    %v383 = vpow.pop %v382
    %v384 = vadd.f32 %v383, 1.0
    %v385 = vrcp.pop %v384
    %v386 = vmul.f32 %v384, %v385
    %v387 = vsub.f32 1.0, %v386
    %v388 = vmul.f32 %v385, %v387
    %v389 = vadd.f32 %v385, %v388
    %vm390 = vweird.f32 %v384
    %vm391 = vweird.f32 %v385
    %vm392 = vmor %vm390, %vm391
    %v393 = vsel %vm392, %v385, %v389
    %v394 = vand.u32 2147483647, %v384
    %vm395 = vcmp.eq.f32.partialorder %v394, 8.507059e+37
    %v396 = vand.u32 %v384, 2147483648
    %v397 = vor.u32 1.1754944e-38, %v396
    %v398 = vsel %vm395, %v397, %v393
    %v399 = vmul.f32 1.0, %v398
    %v400 = vtanh.pop %v380
    %v402 = vrot.slane %v267, 2
    %v404 = vmul.f32 %v399, %v402
    %406 = vrot.lane.b32.xlu0 %v400, 64
    %v407 = vpop.permute.xlu0 %406
    %v409 = vmul.f32 %v399, %v407
    %411 = vrot.lane.b32.xlu0 %v409, 32
    %v412 = vpop.permute.xlu0 %411
    %v414 = vadd.f32 %v404, %v412
    %v415 = vtanh.pop %v414
    %417 = vrot.lane.b32.xlu0 %v415, 64
    %v418 = vpop.permute.xlu0 %417
    %v420 = vmul.f32 %v399, %v418
    %422 = vrot.lane.b32.xlu0 %v420, 64
    %v423 = vpop.permute.xlu0 %422
    %vm425 = vcmask 521476
    %426 = vst.msk [vmem:[%s4 + $0x8] sm:$0x30] %vm425, %v423
    %v427 = vrot.slane %v345, 2
    %428 = vrot.lane.b32.xlu0 %v427, 32
    %v429 = vpop.permute.xlu0 %428
    %v430 = vsel %vm74, %v429, 0
    %432 = vmatpush.msra.mxu0 0.0
    %433 = vmatpush.msra.mxu0 0.0
    %434 = vmatpush.msra.mxu0 0.0
    %435 = vmatpush.msra.mxu0 0.0
    %436 = vmatpush.msra.mxu0 0.0
    %437 = vmatpush.msra.mxu0 0.0
    %438 = vmatpush.msra.mxu0 0.0
    %439 = vmatpush.msra.mxu0 0.0
    %440 = vmatpush.msra.mxu0 0.0
    %441 = vmatpush.msra.mxu0 0.0
    %442 = vmatpush.msra.mxu0 0.0
    %443 = vmatpush.msra.mxu0 0.0
    %444 = vmatpush.msra.mxu0 %v140
    %445 = vmatpush.msra.mxu0 %v139
    %446 = vmatpush.msra.mxu0 %v138
    %447 = vmatpush.msra.mxu0 %v137
    %448 = vmatmul.f32.gmra.mxu0 %v430
    %v449 = vpop.f32.mrf.mxu0
    %v450 = vadd.f32 0.0, %v449
    %451 = vdwg.mxu0
    %v453 = vrot.slane %v450, 4
    %v455 = vadd.f32 %v99, %v453
    %v456 = vxor.u32 %v455, 2147483648
    %v457 = vmul.f32 %v456, 1.442695
    %v458 = vpow.pop %v457
    %v459 = vadd.f32 %v458, 1.0
    %v460 = vrcp.pop %v459
    %v461 = vmul.f32 %v459, %v460
    %v462 = vsub.f32 1.0, %v461
    %v463 = vmul.f32 %v460, %v462
    %v464 = vadd.f32 %v460, %v463
    %vm465 = vweird.f32 %v459
    %vm466 = vweird.f32 %v460
    %vm467 = vmor %vm465, %vm466
    %v468 = vsel %vm467, %v460, %v464
    %v469 = vand.u32 2147483647, %v459
    %vm470 = vcmp.eq.f32.partialorder %v469, 8.507059e+37
    %v471 = vand.u32 %v459, 2147483648
    %v472 = vor.u32 1.1754944e-38, %v471
    %v473 = vsel %vm470, %v472, %v468
    %v474 = vmul.f32 1.0, %v473
    %v475 = vtanh.pop %v455
    %v477 = vrot.slane %v339, 6
    %v479 = vmul.f32 %v474, %v477
    %481 = vrot.lane.b32.xlu0 %v475, 64
    %v482 = vpop.permute.xlu0 %481
    %v484 = vmul.f32 %v474, %v482
    %486 = vrot.lane.b32.xlu0 %v484, 32
    %v487 = vpop.permute.xlu0 %486
    %v489 = vadd.f32 %v479, %v487
    %v490 = vtanh.pop %v489
    %492 = vrot.lane.b32.xlu0 %v490, 64
    %v493 = vpop.permute.xlu0 %492
    %v495 = vmul.f32 %v474, %v493
    %497 = vrot.lane.b32.xlu0 %v495, 32
    %v498 = vpop.permute.xlu0 %497
    %vm500 = vcmask 259076
    %501 = vst.msk [vmem:[%s4] sm:$0x30] %vm500, %v498
    %v502 = vrot.slane %v420, 4
    %503 = vrot.lane.b32.xlu0 %v502, 32
    %v504 = vpop.permute.xlu0 %503
    %v505 = vsel %vm74, %v504, 0
    %507 = vmatpush.msra.mxu0 0.0
    %508 = vmatpush.msra.mxu0 0.0
    %509 = vmatpush.msra.mxu0 0.0
    %510 = vmatpush.msra.mxu0 0.0
    %511 = vmatpush.msra.mxu0 0.0
    %512 = vmatpush.msra.mxu0 0.0
    %513 = vmatpush.msra.mxu0 0.0
    %514 = vmatpush.msra.mxu0 0.0
    %515 = vmatpush.msra.mxu0 0.0
    %516 = vmatpush.msra.mxu0 0.0
    %517 = vmatpush.msra.mxu0 0.0
    %518 = vmatpush.msra.mxu0 0.0
    %519 = vmatpush.msra.mxu0 %v145
    %520 = vmatpush.msra.mxu0 %v144
    %521 = vmatpush.msra.mxu0 %v143
    %522 = vmatpush.msra.mxu0 %v142
    %523 = vmatmul.f32.gmra.mxu0 %v505
    %v524 = vpop.f32.mrf.mxu0
    %v525 = vadd.f32 0.0, %v524
    %526 = vdwg.mxu0
    %v528 = vrot.slane %v525, 6
    %v530 = vadd.f32 %v135, %v528
    %v531 = vxor.u32 %v530, 2147483648
    %v532 = vmul.f32 %v531, 1.442695
    %v533 = vpow.pop %v532
    %v534 = vadd.f32 %v533, 1.0
    %v535 = vrcp.pop %v534
    %v536 = vmul.f32 %v534, %v535
    %v537 = vsub.f32 1.0, %v536
    %v538 = vmul.f32 %v535, %v537
    %v539 = vadd.f32 %v535, %v538
    %vm540 = vweird.f32 %v534
    %vm541 = vweird.f32 %v535
    %vm542 = vmor %vm540, %vm541
    %v543 = vsel %vm542, %v535, %v539
    %v544 = vand.u32 2147483647, %v534
    %vm545 = vcmp.eq.f32.partialorder %v544, 8.507059e+37
    %v546 = vand.u32 %v534, 2147483648
    %v547 = vor.u32 1.1754944e-38, %v546
    %v548 = vsel %vm545, %v547, %v543
    %v549 = vmul.f32 1.0, %v548
    %v550 = vtanh.pop %v530
    %v552 = vrot.slane %v414, 2
    %v554 = vmul.f32 %v549, %v552
    %556 = vrot.lane.b32.xlu0 %v550, 64
    %v557 = vpop.permute.xlu0 %556
    %v559 = vmul.f32 %v549, %v557
    %561 = vrot.lane.b32.xlu0 %v559, 32
    %v562 = vpop.permute.xlu0 %561
    %v564 = vadd.f32 %v554, %v562
    %v565 = vtanh.pop %v564
    %567 = vrot.lane.b32.xlu0 %v565, 64
    %v568 = vpop.permute.xlu0 %567
    %v570 = vmul.f32 %v549, %v568
    %572 = vrot.lane.b32.xlu0 %v570, 64
    %v573 = vpop.permute.xlu0 %572
    %vm575 = vcmask 519426
    %576 = vst.msk [vmem:[%s4 + $0x8] sm:$0xc] %vm575, %v573
    %v577 = vrot.slane %v495, 4
    %578 = vrot.lane.b32.xlu0 %v577, 32
    %v579 = vpop.permute.xlu0 %578
    %v580 = vsel %vm74, %v579, 0
    %582 = vmatpush.msra.mxu0 0.0
    %583 = vmatpush.msra.mxu0 0.0
    %584 = vmatpush.msra.mxu0 0.0
    %585 = vmatpush.msra.mxu0 0.0
    %586 = vmatpush.msra.mxu0 0.0
    %587 = vmatpush.msra.mxu0 0.0
    %588 = vmatpush.msra.mxu0 0.0
    %589 = vmatpush.msra.mxu0 0.0
    %590 = vmatpush.msra.mxu0 0.0
    %591 = vmatpush.msra.mxu0 0.0
    %592 = vmatpush.msra.mxu0 0.0
    %593 = vmatpush.msra.mxu0 0.0
    %594 = vmatpush.msra.mxu0 %v140
    %595 = vmatpush.msra.mxu0 %v139
    %596 = vmatpush.msra.mxu0 %v138
    %597 = vmatpush.msra.mxu0 %v137
    %598 = vmatmul.f32.gmra.mxu0 %v580
    %v599 = vpop.f32.mrf.mxu0
    %v600 = vadd.f32 0.0, %v599
    %601 = vdwg.mxu0
    %v603 = vrot.slane %v600, 2
    %v605 = vadd.f32 %v99, %v603
    %v606 = vxor.u32 %v605, 2147483648
    %v607 = vmul.f32 %v606, 1.442695
    %v608 = vpow.pop %v607
    %v609 = vadd.f32 %v608, 1.0
    %v610 = vrcp.pop %v609
    %v611 = vmul.f32 %v609, %v610
    %v612 = vsub.f32 1.0, %v611
    %v613 = vmul.f32 %v610, %v612
    %v614 = vadd.f32 %v610, %v613
    %vm615 = vweird.f32 %v609
    %vm616 = vweird.f32 %v610
    %vm617 = vmor %vm615, %vm616
    %v618 = vsel %vm617, %v610, %v614
    %v619 = vand.u32 2147483647, %v609
    %vm620 = vcmp.eq.f32.partialorder %v619, 8.507059e+37
    %v621 = vand.u32 %v609, 2147483648
    %v622 = vor.u32 1.1754944e-38, %v621
    %v623 = vsel %vm620, %v622, %v618
    %v624 = vmul.f32 1.0, %v623
    %v625 = vtanh.pop %v605
    %v627 = vrot.slane %v489, 6
    %v629 = vmul.f32 %v624, %v627
    %631 = vrot.lane.b32.xlu0 %v625, 64
    %v632 = vpop.permute.xlu0 %631
    %v634 = vmul.f32 %v624, %v632
    %636 = vrot.lane.b32.xlu0 %v634, 32
    %v637 = vpop.permute.xlu0 %636
    %v639 = vadd.f32 %v629, %v637
    %v640 = vtanh.pop %v639
    %642 = vrot.lane.b32.xlu0 %v640, 64
    %v643 = vpop.permute.xlu0 %642
    %v645 = vmul.f32 %v624, %v643
    %647 = vrot.lane.b32.xlu0 %v645, 32
    %v648 = vpop.permute.xlu0 %647
    %vm650 = vcmask 261126
    %651 = vst.msk [vmem:[%s4] sm:$0xc0] %vm650, %v648
    %v652 = vrot.slane %v570, 2
    %653 = vrot.lane.b32.xlu0 %v652, 32
    %v654 = vpop.permute.xlu0 %653
    %v655 = vsel %vm74, %v654, 0
    %657 = vmatpush.msra.mxu0 0.0
    %658 = vmatpush.msra.mxu0 0.0
    %659 = vmatpush.msra.mxu0 0.0
    %660 = vmatpush.msra.mxu0 0.0
    %661 = vmatpush.msra.mxu0 0.0
    %662 = vmatpush.msra.mxu0 0.0
    %663 = vmatpush.msra.mxu0 0.0
    %664 = vmatpush.msra.mxu0 0.0
    %665 = vmatpush.msra.mxu0 0.0
    %666 = vmatpush.msra.mxu0 0.0
    %667 = vmatpush.msra.mxu0 0.0
    %668 = vmatpush.msra.mxu0 0.0
    %669 = vmatpush.msra.mxu0 %v145
    %670 = vmatpush.msra.mxu0 %v144
    %671 = vmatpush.msra.mxu0 %v143
    %672 = vmatpush.msra.mxu0 %v142
    %673 = vmatmul.f32.gmra.mxu0 %v655
    %v674 = vpop.f32.mrf.mxu0
    %v675 = vadd.f32 0.0, %v674
    %676 = vdwg.mxu0
    %v677 = vadd.f32 %v135, %v675
    %v678 = vxor.u32 %v677, 2147483648
    %v679 = vmul.f32 %v678, 1.442695
    %v680 = vpow.pop %v679
    %v681 = vadd.f32 %v680, 1.0
    %v682 = vrcp.pop %v681
    %v683 = vmul.f32 %v681, %v682
    %v684 = vsub.f32 1.0, %v683
    %v685 = vmul.f32 %v682, %v684
    %v686 = vadd.f32 %v682, %v685
    %vm687 = vweird.f32 %v681
    %vm688 = vweird.f32 %v682
    %vm689 = vmor %vm687, %vm688
    %v690 = vsel %vm689, %v682, %v686
    %v691 = vand.u32 2147483647, %v681
    %vm692 = vcmp.eq.f32.partialorder %v691, 8.507059e+37
    %v693 = vand.u32 %v681, 2147483648
    %v694 = vor.u32 1.1754944e-38, %v693
    %v695 = vsel %vm692, %v694, %v690
    %v696 = vmul.f32 1.0, %v695
    %v697 = vtanh.pop %v677
    %v699 = vrot.slane %v564, 2
    %v701 = vmul.f32 %v696, %v699
    %703 = vrot.lane.b32.xlu0 %v697, 64
    %v704 = vpop.permute.xlu0 %703
    %v706 = vmul.f32 %v696, %v704
    %708 = vrot.lane.b32.xlu0 %v706, 32
    %v709 = vpop.permute.xlu0 %708
    %v711 = vadd.f32 %v701, %v709
    %v712 = vtanh.pop %v711
    %714 = vrot.lane.b32.xlu0 %v712, 64
    %v715 = vpop.permute.xlu0 %714
    %v717 = vmul.f32 %v696, %v715
    %719 = vrot.lane.b32.xlu0 %v717, 64
    %v720 = vpop.permute.xlu0 %719
    %vm722 = vcmask 517376
    %723 = vst.msk [vmem:[%s4 + $0x8] sm:$0x3] %vm722, %v720
    %v724 = vrot.slane %v645, 6
    %725 = vrot.lane.b32.xlu0 %v724, 32
    %v726 = vpop.permute.xlu0 %725
    %v727 = vsel %vm74, %v726, 0
    %729 = vmatpush.msra.mxu0 0.0
    %730 = vmatpush.msra.mxu0 0.0
    %731 = vmatpush.msra.mxu0 0.0
    %732 = vmatpush.msra.mxu0 0.0
    %733 = vmatpush.msra.mxu0 0.0
    %734 = vmatpush.msra.mxu0 0.0
    %735 = vmatpush.msra.mxu0 0.0
    %736 = vmatpush.msra.mxu0 0.0
    %737 = vmatpush.msra.mxu0 0.0
    %738 = vmatpush.msra.mxu0 0.0
    %739 = vmatpush.msra.mxu0 0.0
    %740 = vmatpush.msra.mxu0 0.0
    %741 = vmatpush.msra.mxu0 %v140
    %742 = vmatpush.msra.mxu0 %v139
    %743 = vmatpush.msra.mxu0 %v138
    %744 = vmatpush.msra.mxu0 %v137
    %745 = vmatmul.f32.gmra.mxu0 %v727
    %v746 = vpop.f32.mrf.mxu0
    %v747 = vadd.f32 0.0, %v746
    %748 = vdwg.mxu0
    %v749 = vadd.f32 %v102, %v747
    %v750 = vxor.u32 %v749, 2147483648
    %v751 = vmul.f32 %v750, 1.442695
    %v752 = vpow.pop %v751
    %v753 = vadd.f32 %v752, 1.0
    %v754 = vrcp.pop %v753
    %v755 = vmul.f32 %v753, %v754
    %v756 = vsub.f32 1.0, %v755
    %v757 = vmul.f32 %v754, %v756
    %v758 = vadd.f32 %v754, %v757
    %vm759 = vweird.f32 %v753
    %vm760 = vweird.f32 %v754
    %vm761 = vmor %vm759, %vm760
    %v762 = vsel %vm761, %v754, %v758
    %v763 = vand.u32 2147483647, %v753
    %vm764 = vcmp.eq.f32.partialorder %v763, 8.507059e+37
    %v765 = vand.u32 %v753, 2147483648
    %v766 = vor.u32 1.1754944e-38, %v765
    %v767 = vsel %vm764, %v766, %v762
    %v768 = vmul.f32 1.0, %v767
    %v769 = vtanh.pop %v749
    %v771 = vrot.slane %v639, 6
    %v773 = vmul.f32 %v768, %v771
    %775 = vrot.lane.b32.xlu0 %v769, 64
    %v776 = vpop.permute.xlu0 %775
    %v778 = vmul.f32 %v768, %v776
    %780 = vrot.lane.b32.xlu0 %v778, 32
    %v781 = vpop.permute.xlu0 %780
    %v783 = vadd.f32 %v773, %v781
    %v784 = vtanh.pop %v783
    %786 = vrot.lane.b32.xlu0 %v784, 64
    %v787 = vpop.permute.xlu0 %786
    %v789 = vmul.f32 %v768, %v787
    %791 = vrot.lane.b32.xlu0 %v789, 32
    %v792 = vpop.permute.xlu0 %791
    %794 = vst.msk [vmem:[%s4 + $0x8] sm:$0x3] %vm211, %v792
    %795 = vrot.lane.b32.xlu0 %v717, 32
    %v796 = vpop.permute.xlu0 %795
    %v797 = vsel %vm74, %v796, 0
    %799 = vmatpush.msra.mxu0 0.0
    %800 = vmatpush.msra.mxu0 0.0
    %801 = vmatpush.msra.mxu0 0.0
    %802 = vmatpush.msra.mxu0 0.0
    %803 = vmatpush.msra.mxu0 0.0
    %804 = vmatpush.msra.mxu0 0.0
    %805 = vmatpush.msra.mxu0 0.0
    %806 = vmatpush.msra.mxu0 0.0
    %807 = vmatpush.msra.mxu0 0.0
    %808 = vmatpush.msra.mxu0 0.0
    %809 = vmatpush.msra.mxu0 0.0
    %810 = vmatpush.msra.mxu0 0.0
    %811 = vmatpush.msra.mxu0 %v145
    %812 = vmatpush.msra.mxu0 %v144
    %813 = vmatpush.msra.mxu0 %v143
    %814 = vmatpush.msra.mxu0 %v142
    %815 = vmatmul.f32.gmra.mxu0 %v797
    %v816 = vpop.f32.mrf.mxu0
    %v817 = vadd.f32 0.0, %v816
    %818 = vdwg.mxu0
    %v820 = vrot.slane %v817, 2
    %v822 = vadd.f32 %v132, %v820
    %v823 = vxor.u32 %v822, 2147483648
    %v824 = vmul.f32 %v823, 1.442695
    %v825 = vpow.pop %v824
    %v826 = vadd.f32 %v825, 1.0
    %v827 = vrcp.pop %v826
    %v828 = vmul.f32 %v826, %v827
    %v829 = vsub.f32 1.0, %v828
    %v830 = vmul.f32 %v827, %v829
    %v831 = vadd.f32 %v827, %v830
    %vm832 = vweird.f32 %v826
    %vm833 = vweird.f32 %v827
    %vm834 = vmor %vm832, %vm833
    %v835 = vsel %vm834, %v827, %v831
    %v836 = vand.u32 2147483647, %v826
    %vm837 = vcmp.eq.f32.partialorder %v836, 8.507059e+37
    %v838 = vand.u32 %v826, 2147483648
    %v839 = vor.u32 1.1754944e-38, %v838
    %v840 = vsel %vm837, %v839, %v835
    %v841 = vmul.f32 1.0, %v840
    %v842 = vtanh.pop %v822
    %v844 = vrot.slane %v711, 2
    %v846 = vmul.f32 %v841, %v844
    %848 = vrot.lane.b32.xlu0 %v842, 64
    %v849 = vpop.permute.xlu0 %848
    %v851 = vmul.f32 %v841, %v849
    %853 = vrot.lane.b32.xlu0 %v851, 32
    %v854 = vpop.permute.xlu0 %853
    %v856 = vadd.f32 %v846, %v854
    %v857 = vtanh.pop %v856
    %859 = vrot.lane.b32.xlu0 %v857, 64
    %v860 = vpop.permute.xlu0 %859
    %v862 = vmul.f32 %v841, %v860
    %864 = vrot.lane.b32.xlu0 %v862, 64
    %v865 = vpop.permute.xlu0 %864
    %867 = vst.msk [vmem:[%s4] sm:$0xc0] %vm278, %v865
    %v868 = vsel %vm74, %v792, 0
    %870 = vmatpush.msra.mxu0 0.0
    %871 = vmatpush.msra.mxu0 0.0
    %872 = vmatpush.msra.mxu0 0.0
    %873 = vmatpush.msra.mxu0 0.0
    %874 = vmatpush.msra.mxu0 0.0
    %875 = vmatpush.msra.mxu0 0.0
    %876 = vmatpush.msra.mxu0 0.0
    %877 = vmatpush.msra.mxu0 0.0
    %878 = vmatpush.msra.mxu0 0.0
    %879 = vmatpush.msra.mxu0 0.0
    %880 = vmatpush.msra.mxu0 0.0
    %881 = vmatpush.msra.mxu0 0.0
    %882 = vmatpush.msra.mxu0 %v140
    %883 = vmatpush.msra.mxu0 %v139
    %884 = vmatpush.msra.mxu0 %v138
    %885 = vmatpush.msra.mxu0 %v137
    %886 = vmatmul.f32.gmra.mxu0 %v868
    %v887 = vpop.f32.mrf.mxu0
    %v888 = vadd.f32 0.0, %v887
    %889 = vdwg.mxu0
    %v891 = vrot.slane %v888, 6
    %v893 = vadd.f32 %v102, %v891
    %v894 = vxor.u32 %v893, 2147483648
    %v895 = vmul.f32 %v894, 1.442695
    %v896 = vpow.pop %v895
    %v897 = vadd.f32 %v896, 1.0
    %v898 = vrcp.pop %v897
    %v899 = vmul.f32 %v897, %v898
    %v900 = vsub.f32 1.0, %v899
    %v901 = vmul.f32 %v898, %v900
    %v902 = vadd.f32 %v898, %v901
    %vm903 = vweird.f32 %v897
    %vm904 = vweird.f32 %v898
    %vm905 = vmor %vm903, %vm904
    %v906 = vsel %vm905, %v898, %v902
    %v907 = vand.u32 2147483647, %v897
    %vm908 = vcmp.eq.f32.partialorder %v907, 8.507059e+37
    %v909 = vand.u32 %v897, 2147483648
    %v910 = vor.u32 1.1754944e-38, %v909
    %v911 = vsel %vm908, %v910, %v906
    %v912 = vmul.f32 1.0, %v911
    %v913 = vtanh.pop %v893
    %v915 = vrot.slane %v783, 6
    %v917 = vmul.f32 %v912, %v915
    %919 = vrot.lane.b32.xlu0 %v913, 64
    %v920 = vpop.permute.xlu0 %919
    %v922 = vmul.f32 %v912, %v920
    %924 = vrot.lane.b32.xlu0 %v922, 32
    %v925 = vpop.permute.xlu0 %924
    %v927 = vadd.f32 %v917, %v925
    %v928 = vtanh.pop %v927
    %930 = vrot.lane.b32.xlu0 %v928, 64
    %v931 = vpop.permute.xlu0 %930
    %v933 = vmul.f32 %v912, %v931
    %935 = vrot.lane.b32.xlu0 %v933, 32
    %v936 = vpop.permute.xlu0 %935
    %938 = vst.msk [vmem:[%s4 + $0x8] sm:$0xc] %vm350, %v936
    %v939 = vrot.slane %v862, 6
    %940 = vrot.lane.b32.xlu0 %v939, 32
    %v941 = vpop.permute.xlu0 %940
    %v942 = vsel %vm74, %v941, 0
    %944 = vmatpush.msra.mxu0 0.0
    %945 = vmatpush.msra.mxu0 0.0
    %946 = vmatpush.msra.mxu0 0.0
    %947 = vmatpush.msra.mxu0 0.0
    %948 = vmatpush.msra.mxu0 0.0
    %949 = vmatpush.msra.mxu0 0.0
    %950 = vmatpush.msra.mxu0 0.0
    %951 = vmatpush.msra.mxu0 0.0
    %952 = vmatpush.msra.mxu0 0.0
    %953 = vmatpush.msra.mxu0 0.0
    %954 = vmatpush.msra.mxu0 0.0
    %955 = vmatpush.msra.mxu0 0.0
    %956 = vmatpush.msra.mxu0 %v145
    %957 = vmatpush.msra.mxu0 %v144
    %958 = vmatpush.msra.mxu0 %v143
    %959 = vmatpush.msra.mxu0 %v142
    %960 = vmatmul.f32.gmra.mxu0 %v942
    %v961 = vpop.f32.mrf.mxu0
    %v962 = vadd.f32 0.0, %v961
    %963 = vdwg.mxu0
    %v965 = vrot.slane %v962, 4
    %v967 = vadd.f32 %v132, %v965
    %v968 = vxor.u32 %v967, 2147483648
    %v969 = vmul.f32 %v968, 1.442695
    %v970 = vpow.pop %v969
    %v971 = vadd.f32 %v970, 1.0
    %v972 = vrcp.pop %v971
    %v973 = vmul.f32 %v971, %v972
    %v974 = vsub.f32 1.0, %v973
    %v975 = vmul.f32 %v972, %v974
    %v976 = vadd.f32 %v972, %v975
    %vm977 = vweird.f32 %v971
    %vm978 = vweird.f32 %v972
    %vm979 = vmor %vm977, %vm978
    %v980 = vsel %vm979, %v972, %v976
    %v981 = vand.u32 2147483647, %v971
    %vm982 = vcmp.eq.f32.partialorder %v981, 8.507059e+37
    %v983 = vand.u32 %v971, 2147483648
    %v984 = vor.u32 1.1754944e-38, %v983
    %v985 = vsel %vm982, %v984, %v980
    %v986 = vmul.f32 1.0, %v985
    %v987 = vtanh.pop %v967
    %v989 = vrot.slane %v856, 2
    %v991 = vmul.f32 %v986, %v989
    %993 = vrot.lane.b32.xlu0 %v987, 64
    %v994 = vpop.permute.xlu0 %993
    %v996 = vmul.f32 %v986, %v994
    %998 = vrot.lane.b32.xlu0 %v996, 32
    %v999 = vpop.permute.xlu0 %998
    %v1001 = vadd.f32 %v991, %v999
    %v1002 = vtanh.pop %v1001
    %1004 = vrot.lane.b32.xlu0 %v1002, 64
    %v1005 = vpop.permute.xlu0 %1004
    %v1007 = vmul.f32 %v986, %v1005
    %1009 = vrot.lane.b32.xlu0 %v1007, 64
    %v1010 = vpop.permute.xlu0 %1009
    %1012 = vst.msk [vmem:[%s4] sm:$0x30] %vm425, %v1010
    %v1013 = vrot.slane %v933, 2
    %1014 = vrot.lane.b32.xlu0 %v1013, 32
    %v1015 = vpop.permute.xlu0 %1014
    %v1016 = vsel %vm74, %v1015, 0
    %1018 = vmatpush.msra.mxu0 0.0
    %1019 = vmatpush.msra.mxu0 0.0
    %1020 = vmatpush.msra.mxu0 0.0
    %1021 = vmatpush.msra.mxu0 0.0
    %1022 = vmatpush.msra.mxu0 0.0
    %1023 = vmatpush.msra.mxu0 0.0
    %1024 = vmatpush.msra.mxu0 0.0
    %1025 = vmatpush.msra.mxu0 0.0
    %1026 = vmatpush.msra.mxu0 0.0
    %1027 = vmatpush.msra.mxu0 0.0
    %1028 = vmatpush.msra.mxu0 0.0
    %1029 = vmatpush.msra.mxu0 0.0
    %1030 = vmatpush.msra.mxu0 %v140
    %1031 = vmatpush.msra.mxu0 %v139
    %1032 = vmatpush.msra.mxu0 %v138
    %1033 = vmatpush.msra.mxu0 %v137
    %1034 = vmatmul.f32.gmra.mxu0 %v1016
    %v1035 = vpop.f32.mrf.mxu0
    %v1036 = vadd.f32 0.0, %v1035
    %1037 = vdwg.mxu0
    %v1039 = vrot.slane %v1036, 4
    %v1041 = vadd.f32 %v102, %v1039
    %v1042 = vxor.u32 %v1041, 2147483648
    %v1043 = vmul.f32 %v1042, 1.442695
    %v1044 = vpow.pop %v1043
    %v1045 = vadd.f32 %v1044, 1.0
    %v1046 = vrcp.pop %v1045
    %v1047 = vmul.f32 %v1045, %v1046
    %v1048 = vsub.f32 1.0, %v1047
    %v1049 = vmul.f32 %v1046, %v1048
    %v1050 = vadd.f32 %v1046, %v1049
    %vm1051 = vweird.f32 %v1045
    %vm1052 = vweird.f32 %v1046
    %vm1053 = vmor %vm1051, %vm1052
    %v1054 = vsel %vm1053, %v1046, %v1050
    %v1055 = vand.u32 2147483647, %v1045
    %vm1056 = vcmp.eq.f32.partialorder %v1055, 8.507059e+37
    %v1057 = vand.u32 %v1045, 2147483648
    %v1058 = vor.u32 1.1754944e-38, %v1057
    %v1059 = vsel %vm1056, %v1058, %v1054
    %v1060 = vmul.f32 1.0, %v1059
    %v1061 = vtanh.pop %v1041
    %v1063 = vrot.slane %v927, 6
    %v1065 = vmul.f32 %v1060, %v1063
    %1067 = vrot.lane.b32.xlu0 %v1061, 64
    %v1068 = vpop.permute.xlu0 %1067
    %v1070 = vmul.f32 %v1060, %v1068
    %1072 = vrot.lane.b32.xlu0 %v1070, 32
    %v1073 = vpop.permute.xlu0 %1072
    %v1075 = vadd.f32 %v1065, %v1073
    %v1076 = vtanh.pop %v1075
    %1078 = vrot.lane.b32.xlu0 %v1076, 64
    %v1079 = vpop.permute.xlu0 %1078
    %v1081 = vmul.f32 %v1060, %v1079
    %1083 = vrot.lane.b32.xlu0 %v1081, 32
    %v1084 = vpop.permute.xlu0 %1083
    %1086 = vst.msk [vmem:[%s4 + $0x8] sm:$0x30] %vm500, %v1084
    %v1087 = vrot.slane %v1007, 4
    %1088 = vrot.lane.b32.xlu0 %v1087, 32
    %v1089 = vpop.permute.xlu0 %1088
    %v1090 = vsel %vm74, %v1089, 0
    %1092 = vmatpush.msra.mxu0 0.0
    %1093 = vmatpush.msra.mxu0 0.0
    %1094 = vmatpush.msra.mxu0 0.0
    %1095 = vmatpush.msra.mxu0 0.0
    %1096 = vmatpush.msra.mxu0 0.0
    %1097 = vmatpush.msra.mxu0 0.0
    %1098 = vmatpush.msra.mxu0 0.0
    %1099 = vmatpush.msra.mxu0 0.0
    %1100 = vmatpush.msra.mxu0 0.0
    %1101 = vmatpush.msra.mxu0 0.0
    %1102 = vmatpush.msra.mxu0 0.0
    %1103 = vmatpush.msra.mxu0 0.0
    %1104 = vmatpush.msra.mxu0 %v145
    %1105 = vmatpush.msra.mxu0 %v144
    %1106 = vmatpush.msra.mxu0 %v143
    %1107 = vmatpush.msra.mxu0 %v142
    %1108 = vmatmul.f32.gmra.mxu0 %v1090
    %v1109 = vpop.f32.mrf.mxu0
    %v1110 = vadd.f32 0.0, %v1109
    %1111 = vdwg.mxu0
    %v1113 = vrot.slane %v1110, 6
    %v1115 = vadd.f32 %v132, %v1113
    %v1116 = vxor.u32 %v1115, 2147483648
    %v1117 = vmul.f32 %v1116, 1.442695
    %v1118 = vpow.pop %v1117
    %v1119 = vadd.f32 %v1118, 1.0
    %v1120 = vrcp.pop %v1119
    %v1121 = vmul.f32 %v1119, %v1120
    %v1122 = vsub.f32 1.0, %v1121
    %v1123 = vmul.f32 %v1120, %v1122
    %v1124 = vadd.f32 %v1120, %v1123
    %vm1125 = vweird.f32 %v1119
    %vm1126 = vweird.f32 %v1120
    %vm1127 = vmor %vm1125, %vm1126
    %v1128 = vsel %vm1127, %v1120, %v1124
    %v1129 = vand.u32 2147483647, %v1119
    %vm1130 = vcmp.eq.f32.partialorder %v1129, 8.507059e+37
    %v1131 = vand.u32 %v1119, 2147483648
    %v1132 = vor.u32 1.1754944e-38, %v1131
    %v1133 = vsel %vm1130, %v1132, %v1128
    %v1134 = vmul.f32 1.0, %v1133
    %v1135 = vtanh.pop %v1115
    %v1137 = vrot.slane %v1001, 2
    %v1139 = vmul.f32 %v1134, %v1137
    %1141 = vrot.lane.b32.xlu0 %v1135, 64
    %v1142 = vpop.permute.xlu0 %1141
    %v1144 = vmul.f32 %v1134, %v1142
    %1146 = vrot.lane.b32.xlu0 %v1144, 32
    %v1147 = vpop.permute.xlu0 %1146
    %v1149 = vadd.f32 %v1139, %v1147
    %v1150 = vtanh.pop %v1149
    %1152 = vrot.lane.b32.xlu0 %v1150, 64
    %v1153 = vpop.permute.xlu0 %1152
    %v1155 = vmul.f32 %v1134, %v1153
    %1157 = vrot.lane.b32.xlu0 %v1155, 64
    %v1158 = vpop.permute.xlu0 %1157
    %1160 = vst.msk [vmem:[%s4] sm:$0xc] %vm575, %v1158
    %v1161 = vrot.slane %v1081, 4
    %1162 = vrot.lane.b32.xlu0 %v1161, 32
    %v1163 = vpop.permute.xlu0 %1162
    %v1164 = vsel %vm74, %v1163, 0
    %1166 = vmatpush.msra.mxu0 0.0
    %1167 = vmatpush.msra.mxu0 0.0
    %1168 = vmatpush.msra.mxu0 0.0
    %1169 = vmatpush.msra.mxu0 0.0
    %1170 = vmatpush.msra.mxu0 0.0
    %1171 = vmatpush.msra.mxu0 0.0
    %1172 = vmatpush.msra.mxu0 0.0
    %1173 = vmatpush.msra.mxu0 0.0
    %1174 = vmatpush.msra.mxu0 0.0
    %1175 = vmatpush.msra.mxu0 0.0
    %1176 = vmatpush.msra.mxu0 0.0
    %1177 = vmatpush.msra.mxu0 0.0
    %1178 = vmatpush.msra.mxu0 %v140
    %1179 = vmatpush.msra.mxu0 %v139
    %1180 = vmatpush.msra.mxu0 %v138
    %1181 = vmatpush.msra.mxu0 %v137
    %1182 = vmatmul.f32.gmra.mxu0 %v1164
    %v1183 = vpop.f32.mrf.mxu0
    %v1184 = vadd.f32 0.0, %v1183
    %1185 = vdwg.mxu0
    %v1187 = vrot.slane %v1184, 2
    %v1189 = vadd.f32 %v102, %v1187
    %v1190 = vxor.u32 %v1189, 2147483648
    %v1191 = vmul.f32 %v1190, 1.442695
    %v1192 = vpow.pop %v1191
    %v1193 = vadd.f32 %v1192, 1.0
    %v1194 = vrcp.pop %v1193
    %v1195 = vmul.f32 %v1193, %v1194
    %v1196 = vsub.f32 1.0, %v1195
    %v1197 = vmul.f32 %v1194, %v1196
    %v1198 = vadd.f32 %v1194, %v1197
    %vm1199 = vweird.f32 %v1193
    %vm1200 = vweird.f32 %v1194
    %vm1201 = vmor %vm1199, %vm1200
    %v1202 = vsel %vm1201, %v1194, %v1198
    %v1203 = vand.u32 2147483647, %v1193
    %vm1204 = vcmp.eq.f32.partialorder %v1203, 8.507059e+37
    %v1205 = vand.u32 %v1193, 2147483648
    %v1206 = vor.u32 1.1754944e-38, %v1205
    %v1207 = vsel %vm1204, %v1206, %v1202
    %v1208 = vmul.f32 1.0, %v1207
    %v1209 = vtanh.pop %v1189
    %v1211 = vrot.slane %v1075, 6
    %v1213 = vmul.f32 %v1208, %v1211
    %1215 = vrot.lane.b32.xlu0 %v1209, 64
    %v1216 = vpop.permute.xlu0 %1215
    %v1218 = vmul.f32 %v1208, %v1216
    %1220 = vrot.lane.b32.xlu0 %v1218, 32
    %v1221 = vpop.permute.xlu0 %1220
    %v1223 = vadd.f32 %v1213, %v1221
    %v1224 = vtanh.pop %v1223
    %1226 = vrot.lane.b32.xlu0 %v1224, 64
    %v1227 = vpop.permute.xlu0 %1226
    %v1229 = vmul.f32 %v1208, %v1227
    %1231 = vrot.lane.b32.xlu0 %v1229, 32
    %v1232 = vpop.permute.xlu0 %1231
    %1234 = vst.msk [vmem:[%s4 + $0x8] sm:$0xc0] %vm650, %v1232
    %v1235 = vrot.slane %v1155, 2
    %1236 = vrot.lane.b32.xlu0 %v1235, 32
    %v1237 = vpop.permute.xlu0 %1236
    %v1238 = vsel %vm74, %v1237, 0
    %1240 = vmatpush.msra.mxu0 0.0
    %1241 = vmatpush.msra.mxu0 0.0
    %1242 = vmatpush.msra.mxu0 0.0
    %1243 = vmatpush.msra.mxu0 0.0
    %1244 = vmatpush.msra.mxu0 0.0
    %1245 = vmatpush.msra.mxu0 0.0
    %1246 = vmatpush.msra.mxu0 0.0
    %1247 = vmatpush.msra.mxu0 0.0
    %1248 = vmatpush.msra.mxu0 0.0
    %1249 = vmatpush.msra.mxu0 0.0
    %1250 = vmatpush.msra.mxu0 0.0
    %1251 = vmatpush.msra.mxu0 0.0
    %1252 = vmatpush.msra.mxu0 %v145
    %1253 = vmatpush.msra.mxu0 %v144
    %1254 = vmatpush.msra.mxu0 %v143
    %1255 = vmatpush.msra.mxu0 %v142
    %1256 = vmatmul.f32.gmra.mxu0 %v1238
    %v1257 = vpop.f32.mrf.mxu0
    %v1258 = vadd.f32 0.0, %v1257
    %1259 = vdwg.mxu0
    %v1260 = vadd.f32 %v132, %v1258
    %v1261 = vxor.u32 %v1260, 2147483648
    %v1262 = vmul.f32 %v1261, 1.442695
    %v1263 = vpow.pop %v1262
    %v1264 = vadd.f32 %v1263, 1.0
    %v1265 = vrcp.pop %v1264
    %v1266 = vmul.f32 %v1264, %v1265
    %v1267 = vsub.f32 1.0, %v1266
    %v1268 = vmul.f32 %v1265, %v1267
    %v1269 = vadd.f32 %v1265, %v1268
    %vm1270 = vweird.f32 %v1264
    %vm1271 = vweird.f32 %v1265
    %vm1272 = vmor %vm1270, %vm1271
    %v1273 = vsel %vm1272, %v1265, %v1269
    %v1274 = vand.u32 2147483647, %v1264
    %vm1275 = vcmp.eq.f32.partialorder %v1274, 8.507059e+37
    %v1276 = vand.u32 %v1264, 2147483648
    %v1277 = vor.u32 1.1754944e-38, %v1276
    %v1278 = vsel %vm1275, %v1277, %v1273
    %v1279 = vmul.f32 1.0, %v1278
    %v1280 = vtanh.pop %v1260
    %v1282 = vrot.slane %v1149, 2
    %v1284 = vmul.f32 %v1279, %v1282
    %1286 = vrot.lane.b32.xlu0 %v1280, 64
    %v1287 = vpop.permute.xlu0 %1286
    %v1289 = vmul.f32 %v1279, %v1287
    %1291 = vrot.lane.b32.xlu0 %v1289, 32
    %v1292 = vpop.permute.xlu0 %1291
    %v1294 = vadd.f32 %v1284, %v1292
    %v1295 = vtanh.pop %v1294
    %1297 = vrot.lane.b32.xlu0 %v1295, 64
    %v1298 = vpop.permute.xlu0 %1297
    %v1300 = vmul.f32 %v1279, %v1298
    %1302 = vrot.lane.b32.xlu0 %v1300, 64
    %v1303 = vpop.permute.xlu0 %1302
    %1305 = vst.msk [vmem:[%s4] sm:$0x3] %vm722, %v1303
    // Predicated region
    $region30: #{lstm_model_forward.5} parent=1 // pred_check
      _
    $region31: #{lstm_model_forward.5} parent=1 // pred_check_branch
      %1307 = sbr.rel (0) target = $region33
    $region32: #{lstm_model_forward.5} parent=1 // pred_region
      _
    $region33: #{lstm_model_forward.5} parent=1 // pred_fallthru
      _
    // Predicated region
    $region34: #{lstm_model_forward.5} parent=1 // pred_check
      _
    $region35: #{lstm_model_forward.5} parent=1 // pred_check_branch
      %1309 = sbr.rel (0) target = $region37
    $region36: #{lstm_model_forward.5} parent=1 // pred_region
      _
    $region37: #{lstm_model_forward.5} parent=1 // pred_fallthru
      _
    %1310 = vsyncpa [#allocation3], 1
    %1311 = vsyncpa [#allocation5], 1

// kernel: lstm_model_forward.6
$region0: #{lstm_model_forward.6}
  #allocation0 [shape = 'u32[]', space=smem, size = 0x4, offset = 0x4, fixed_abs, tag = 'smem constant byte address 0x4 - core index']
  #allocation1 [shape = 'u32[72,128]{1,0:T(1,128)}', space=vmem, size = 0x9000, scoped, tag = 'internal scratch']
  %s0 = inlined_call_operand.vmem [shape: f32[16,64], index: 0, kind: input, shape index: {}]
  %s1 = inlined_call_operand.hbm [shape: f32[2,64,128], index: 1, kind: input, shape index: {}]
  %s2 = inlined_call_operand.vmem [shape: f32[2,32,128], index: 2, kind: input, shape index: {}]
  %s3 = inlined_call_operand.hbm [shape: f32[2,1,128], index: 3, kind: input, shape index: {}]
  %s4 = inlined_call_operand.vmem [shape: f32[16,64], index: 4, kind: output, shape index: {}]
  %s5 = sld [smem:[#allocation0]]
  $region34: #{lstm_model_forward.6} parent=0
    _
  %s7 = ssub.s32 1, %s5
  %s8 = scalar_select 0, %s7, %s5
  $region1: #{lstm_model_forward.6} parent=0
    #allocation2 [shape = 'u8[65536]{0}', space=vmem, size = 0x10000, scoped, tag = 'input window, operand 1, single buffered']
    #allocation3 [shape = 's32[1]{0}', space=sflag, size = 0x4, scoped, tag = 'scoped memory for lstm_model_forward.6']
    #allocation4 [shape = 'u8[1024]{0}', space=vmem, size = 0x400, scoped, tag = 'input window, operand 3, single buffered']
    #allocation5 [shape = 's32[1]{0}', space=sflag, size = 0x4, scoped, tag = 'scoped memory for lstm_model_forward.6']
    %9 = vsyncpa [#allocation3], 0
    %10 = vsyncpa [#allocation5], 0
    // Predicated region
    $region2: #{lstm_model_forward.6} parent=1 // pred_check
      _
    $region3: #{lstm_model_forward.6} parent=1 // pred_check_branch
      %12 = sbr.rel (0) target = $region5
    $region4: #{lstm_model_forward.6} parent=1 // pred_region
      _
    $region5: #{lstm_model_forward.6} parent=1 // pred_fallthru
      _
    // Predicated region
    $region6: #{lstm_model_forward.6} parent=1 // pred_check
      _
    $region7: #{lstm_model_forward.6} parent=1 // pred_check_branch
      %14 = sbr.rel (0) target = $region9
    $region8: #{lstm_model_forward.6} parent=1 // pred_region
      %16 = vsyncadd [#allocation3], 0
      %s17 = sshll.u32 %s1, 4
      %s18 = int_to_ptr.hbm [resolvable:$true] %s17
      %s19 = sshll.u32 [#allocation2], 4
      %s20 = int_to_ptr.vmem [resolvable:$true] %s19
      %25 = dma.hbm_to_vmem [thread:$0]  %s18, 2048, %s20, [#allocation3], 128, 128, 8
    $region9: #{lstm_model_forward.6} parent=1 // pred_fallthru
      _
    // Predicated region
    $region10: #{lstm_model_forward.6} parent=1 // pred_check
      _
    $region11: #{lstm_model_forward.6} parent=1 // pred_check_branch
      %27 = sbr.rel (0) target = $region13
    $region12: #{lstm_model_forward.6} parent=1 // pred_region
      _
    $region13: #{lstm_model_forward.6} parent=1 // pred_fallthru
      _
    // Predicated region
    $region14: #{lstm_model_forward.6} parent=1 // pred_check
      _
    $region15: #{lstm_model_forward.6} parent=1 // pred_check_branch
      %29 = sbr.rel (0) target = $region17
    $region16: #{lstm_model_forward.6} parent=1 // pred_region
      %31 = vsyncadd [#allocation5], 0
      %s32 = sshll.u32 %s3, 4
      %s33 = int_to_ptr.hbm [resolvable:$true] %s32
      %s34 = sshll.u32 [#allocation4], 4
      %s35 = int_to_ptr.vmem [resolvable:$true] %s34
      %40 = dma.hbm_to_vmem [thread:$0]  %s33, 32, %s35, [#allocation5], 16, 16, 1
    $region17: #{lstm_model_forward.6} parent=1 // pred_fallthru
      _
    // Predicated region
    $region18: #{lstm_model_forward.6} parent=1 // pred_check
      _
    $region19: #{lstm_model_forward.6} parent=1 // pred_check_branch
      %42 = sbr.rel (0) target = $region21
    $region20: #{lstm_model_forward.6} parent=1 // pred_region
      %44 = dma.done [#allocation3], 2048
    $region21: #{lstm_model_forward.6} parent=1 // pred_fallthru
      _
    // Predicated region
    $region22: #{lstm_model_forward.6} parent=1 // pred_check
      _
    $region23: #{lstm_model_forward.6} parent=1 // pred_check_branch
      %46 = sbr.rel (0) target = $region25
    $region24: #{lstm_model_forward.6} parent=1 // pred_region
      %48 = dma.done [#allocation5], 32
    $region25: #{lstm_model_forward.6} parent=1 // pred_fallthru
      _
    %v49 = vld [vmem:[%s0] sm:$0xff]
    %v50 = vld [vmem:[%s0 + $0x8] sm:$0xff]
    %v51 = vld [vmem:[#allocation2] sm:$0xff]
    %v52 = vld [vmem:[#allocation2 + $0x8] sm:$0xff]
    %v53 = vld [vmem:[#allocation2 + $0x10] sm:$0xff]
    %v54 = vld [vmem:[#allocation2 + $0x18] sm:$0xff]
    %v55 = vld [vmem:[#allocation2 + $0x20] sm:$0xff]
    %v56 = vld [vmem:[#allocation2 + $0x28] sm:$0xff]
    %v57 = vld [vmem:[#allocation2 + $0x30] sm:$0xff]
    %v58 = vld [vmem:[#allocation2 + $0x38] sm:$0xff]
    %v59 = vld [vmem:[#allocation4] sm:$0x1]
    %v61 = vperm.slane %v59, 0
    %vm63 = vcmask 523264
    %v65 = vsel %vm63, %v49, 0
    %v68 = vsel %vm63, %v50, 0
    %70 = vmatpush.msra.mxu0 0.0
    %71 = vmatpush.msra.mxu0 0.0
    %72 = vmatpush.msra.mxu0 0.0
    %73 = vmatpush.msra.mxu0 0.0
    %74 = vmatpush.msra.mxu0 0.0
    %75 = vmatpush.msra.mxu0 0.0
    %76 = vmatpush.msra.mxu0 0.0
    %77 = vmatpush.msra.mxu0 0.0
    %78 = vmatpush.msra.mxu0 %v58
    %79 = vmatpush.msra.mxu0 %v57
    %80 = vmatpush.msra.mxu0 %v56
    %81 = vmatpush.msra.mxu0 %v55
    %82 = vmatpush.msra.mxu0 %v54
    %83 = vmatpush.msra.mxu0 %v53
    %84 = vmatpush.msra.mxu0 %v52
    %85 = vmatpush.msra.mxu0 %v51
    %86 = vmatmul.f32.gmra.mxu0 %v65
    %v87 = vpop.f32.mrf.mxu0
    %v88 = vadd.f32 %v61, %v87
    %89 = vmatmul.f32.gmra.mxu0 %v68
    %v90 = vpop.f32.mrf.mxu0
    %v91 = vadd.f32 %v61, %v90
    %92 = vdwg.mxu0
    %s93 = scalar_lea.vmem [#allocation2], 64
    %v94 = vld [vmem:[%s93] sm:$0xff]
    %v95 = vld [vmem:[%s93 + $0x8] sm:$0xff]
    %v96 = vld [vmem:[%s93 + $0x10] sm:$0xff]
    %v97 = vld [vmem:[%s93 + $0x18] sm:$0xff]
    %v98 = vld [vmem:[%s93 + $0x20] sm:$0xff]
    %v99 = vld [vmem:[%s93 + $0x28] sm:$0xff]
    %v100 = vld [vmem:[%s93 + $0x30] sm:$0xff]
    %v101 = vld [vmem:[%s93 + $0x38] sm:$0xff]
    %s102 = scalar_lea.vmem [#allocation4], 1
    %v103 = vld [vmem:[%s102] sm:$0x1]
    %v105 = vperm.slane %v103, 0
    %107 = vmatpush.msra.mxu0 0.0
    %108 = vmatpush.msra.mxu0 0.0
    %109 = vmatpush.msra.mxu0 0.0
    %110 = vmatpush.msra.mxu0 0.0
    %111 = vmatpush.msra.mxu0 0.0
    %112 = vmatpush.msra.mxu0 0.0
    %113 = vmatpush.msra.mxu0 0.0
    %114 = vmatpush.msra.mxu0 0.0
    %115 = vmatpush.msra.mxu0 %v101
    %116 = vmatpush.msra.mxu0 %v100
    %117 = vmatpush.msra.mxu0 %v99
    %118 = vmatpush.msra.mxu0 %v98
    %119 = vmatpush.msra.mxu0 %v97
    %120 = vmatpush.msra.mxu0 %v96
    %121 = vmatpush.msra.mxu0 %v95
    %122 = vmatpush.msra.mxu0 %v94
    %123 = vmatmul.f32.gmra.mxu0 %v65
    %v124 = vpop.f32.mrf.mxu0
    %v125 = vadd.f32 %v105, %v124
    %126 = vmatmul.f32.gmra.mxu0 %v68
    %v127 = vpop.f32.mrf.mxu0
    %v128 = vadd.f32 %v105, %v127
    %129 = vdwg.mxu0
    %v130 = vld [vmem:[%s2] sm:$0xff]
    %v131 = vld [vmem:[%s2 + $0x8] sm:$0xff]
    %v132 = vld [vmem:[%s2 + $0x10] sm:$0xff]
    %v133 = vld [vmem:[%s2 + $0x18] sm:$0xff]
    %s134 = scalar_lea.vmem %s2, 32
    %v135 = vld [vmem:[%s134] sm:$0xff]
    %v136 = vld [vmem:[%s134 + $0x8] sm:$0xff]
    %v137 = vld [vmem:[%s134 + $0x10] sm:$0xff]
    %v138 = vld [vmem:[%s134 + $0x18] sm:$0xff]
    %vm139 = vcmask 261120
    %v141 = vsel %vm139, 0.0, 0
    %143 = vmatpush.msra.mxu0 0.0
    %144 = vmatpush.msra.mxu0 0.0
    %145 = vmatpush.msra.mxu0 0.0
    %146 = vmatpush.msra.mxu0 0.0
    %147 = vmatpush.msra.mxu0 0.0
    %148 = vmatpush.msra.mxu0 0.0
    %149 = vmatpush.msra.mxu0 0.0
    %150 = vmatpush.msra.mxu0 0.0
    %151 = vmatpush.msra.mxu0 0.0
    %152 = vmatpush.msra.mxu0 0.0
    %153 = vmatpush.msra.mxu0 0.0
    %154 = vmatpush.msra.mxu0 0.0
    %155 = vmatpush.msra.mxu0 %v133
    %156 = vmatpush.msra.mxu0 %v132
    %157 = vmatpush.msra.mxu0 %v131
    %158 = vmatpush.msra.mxu0 %v130
    %159 = vmatmul.f32.gmra.mxu0 %v141
    %v160 = vpop.f32.mrf.mxu0
    %v161 = vadd.f32 0.0, %v160
    %162 = vdwg.mxu0
    %v163 = vadd.f32 %v88, %v161
    %v164 = vxor.u32 %v163, 2147483648
    %v165 = vmul.f32 %v164, 1.442695
    %v166 = vpow.pop %v165
    %v167 = vadd.f32 %v166, 1.0
    %v168 = vrcp.pop %v167
    %v169 = vmul.f32 %v167, %v168
    %v170 = vsub.f32 1.0, %v169
    %v171 = vmul.f32 %v168, %v170
    %v172 = vadd.f32 %v168, %v171
    %vm173 = vweird.f32 %v167
    %vm174 = vweird.f32 %v168
    %vm175 = vmor %vm173, %vm174
    %v176 = vsel %vm175, %v168, %v172
    %v177 = vand.u32 2147483647, %v167
    %vm178 = vcmp.eq.f32.partialorder %v177, 8.507059e+37
    %v179 = vand.u32 %v167, 2147483648
    %v180 = vor.u32 1.1754944e-38, %v179
    %v181 = vsel %vm178, %v180, %v176
    %v182 = vmul.f32 1.0, %v181
    %v183 = vtanh.pop %v163
    %v184 = vmul.f32 %v182, 0.0
    %186 = vrot.lane.b32.xlu0 %v183, 64
    %v187 = vpop.permute.xlu0 %186
    %v189 = vmul.f32 %v182, %v187
    %191 = vrot.lane.b32.xlu0 %v189, 32
    %v192 = vpop.permute.xlu0 %191
    %v194 = vadd.f32 %v184, %v192
    %v195 = vtanh.pop %v194
    %197 = vrot.lane.b32.xlu0 %v195, 64
    %v198 = vpop.permute.xlu0 %197
    %v200 = vmul.f32 %v182, %v198
    %202 = vrot.lane.b32.xlu0 %v200, 32
    %v203 = vpop.permute.xlu0 %202
    %vm205 = vcmask 254976
    %206 = vst.msk [vmem:[%s4] sm:$0x3] %vm205, %v203
    %207 = vmatpush.msra.mxu0 0.0
    %208 = vmatpush.msra.mxu0 0.0
    %209 = vmatpush.msra.mxu0 0.0
    %210 = vmatpush.msra.mxu0 0.0
    %211 = vmatpush.msra.mxu0 0.0
    %212 = vmatpush.msra.mxu0 0.0
    %213 = vmatpush.msra.mxu0 0.0
    %214 = vmatpush.msra.mxu0 0.0
    %215 = vmatpush.msra.mxu0 0.0
    %216 = vmatpush.msra.mxu0 0.0
    %217 = vmatpush.msra.mxu0 0.0
    %218 = vmatpush.msra.mxu0 0.0
    %219 = vmatpush.msra.mxu0 %v138
    %220 = vmatpush.msra.mxu0 %v137
    %221 = vmatpush.msra.mxu0 %v136
    %222 = vmatpush.msra.mxu0 %v135
    %223 = vmatmul.f32.gmra.mxu0 %v141
    %v224 = vpop.f32.mrf.mxu0
    %v225 = vadd.f32 0.0, %v224
    %226 = vdwg.mxu0
    %v228 = vrot.slane %v225, 2
    %v230 = vadd.f32 %v128, %v228
    %v231 = vxor.u32 %v230, 2147483648
    %v232 = vmul.f32 %v231, 1.442695
    %v233 = vpow.pop %v232
    %v234 = vadd.f32 %v233, 1.0
    %v235 = vrcp.pop %v234
    %v236 = vmul.f32 %v234, %v235
    %v237 = vsub.f32 1.0, %v236
    %v238 = vmul.f32 %v235, %v237
    %v239 = vadd.f32 %v235, %v238
    %vm240 = vweird.f32 %v234
    %vm241 = vweird.f32 %v235
    %vm242 = vmor %vm240, %vm241
    %v243 = vsel %vm242, %v235, %v239
    %v244 = vand.u32 2147483647, %v234
    %vm245 = vcmp.eq.f32.partialorder %v244, 8.507059e+37
    %v246 = vand.u32 %v234, 2147483648
    %v247 = vor.u32 1.1754944e-38, %v246
    %v248 = vsel %vm245, %v247, %v243
    %v249 = vmul.f32 1.0, %v248
    %v250 = vtanh.pop %v230
    %v251 = vmul.f32 %v249, 0.0
    %253 = vrot.lane.b32.xlu0 %v250, 64
    %v254 = vpop.permute.xlu0 %253
    %v256 = vmul.f32 %v249, %v254
    %258 = vrot.lane.b32.xlu0 %v256, 32
    %v259 = vpop.permute.xlu0 %258
    %v261 = vadd.f32 %v251, %v259
    %v262 = vtanh.pop %v261
    %264 = vrot.lane.b32.xlu0 %v262, 64
    %v265 = vpop.permute.xlu0 %264
    %v267 = vmul.f32 %v249, %v265
    %269 = vrot.lane.b32.xlu0 %v267, 64
    %v270 = vpop.permute.xlu0 %269
    %vm272 = vcmask 523526
    %273 = vst.msk [vmem:[%s4 + $0x8] sm:$0xc0] %vm272, %v270
    %v274 = vsel %vm139, %v203, 0
    %276 = vmatpush.msra.mxu0 0.0
    %277 = vmatpush.msra.mxu0 0.0
    %278 = vmatpush.msra.mxu0 0.0
    %279 = vmatpush.msra.mxu0 0.0
    %280 = vmatpush.msra.mxu0 0.0
    %281 = vmatpush.msra.mxu0 0.0
    %282 = vmatpush.msra.mxu0 0.0
    %283 = vmatpush.msra.mxu0 0.0
    %284 = vmatpush.msra.mxu0 0.0
    %285 = vmatpush.msra.mxu0 0.0
    %286 = vmatpush.msra.mxu0 0.0
    %287 = vmatpush.msra.mxu0 0.0
    %288 = vmatpush.msra.mxu0 %v133
    %289 = vmatpush.msra.mxu0 %v132
    %290 = vmatpush.msra.mxu0 %v131
    %291 = vmatpush.msra.mxu0 %v130
    %292 = vmatmul.f32.gmra.mxu0 %v274
    %v293 = vpop.f32.mrf.mxu0
    %v294 = vadd.f32 0.0, %v293
    %295 = vdwg.mxu0
    %v297 = vrot.slane %v294, 6
    %v299 = vadd.f32 %v88, %v297
    %v300 = vxor.u32 %v299, 2147483648
    %v301 = vmul.f32 %v300, 1.442695
    %v302 = vpow.pop %v301
    %v303 = vadd.f32 %v302, 1.0
    %v304 = vrcp.pop %v303
    %v305 = vmul.f32 %v303, %v304
    %v306 = vsub.f32 1.0, %v305
    %v307 = vmul.f32 %v304, %v306
    %v308 = vadd.f32 %v304, %v307
    %vm309 = vweird.f32 %v303
    %vm310 = vweird.f32 %v304
    %vm311 = vmor %vm309, %vm310
    %v312 = vsel %vm311, %v304, %v308
    %v313 = vand.u32 2147483647, %v303
    %vm314 = vcmp.eq.f32.partialorder %v313, 8.507059e+37
    %v315 = vand.u32 %v303, 2147483648
    %v316 = vor.u32 1.1754944e-38, %v315
    %v317 = vsel %vm314, %v316, %v312
    %v318 = vmul.f32 1.0, %v317
    %v319 = vtanh.pop %v299
    %v321 = vrot.slane %v194, 6
    %v323 = vmul.f32 %v318, %v321
    %325 = vrot.lane.b32.xlu0 %v319, 64
    %v326 = vpop.permute.xlu0 %325
    %v328 = vmul.f32 %v318, %v326
    %330 = vrot.lane.b32.xlu0 %v328, 32
    %v331 = vpop.permute.xlu0 %330
    %v333 = vadd.f32 %v323, %v331
    %v334 = vtanh.pop %v333
    %336 = vrot.lane.b32.xlu0 %v334, 64
    %v337 = vpop.permute.xlu0 %336
    %v339 = vmul.f32 %v318, %v337
    %341 = vrot.lane.b32.xlu0 %v339, 32
    %v342 = vpop.permute.xlu0 %341
    %vm344 = vcmask 257026
    %345 = vst.msk [vmem:[%s4] sm:$0xc] %vm344, %v342
    %v346 = vrot.slane %v267, 6
    %347 = vrot.lane.b32.xlu0 %v346, 32
    %v348 = vpop.permute.xlu0 %347
    %v349 = vsel %vm139, %v348, 0
    %351 = vmatpush.msra.mxu0 0.0
    %352 = vmatpush.msra.mxu0 0.0
    %353 = vmatpush.msra.mxu0 0.0
    %354 = vmatpush.msra.mxu0 0.0
    %355 = vmatpush.msra.mxu0 0.0
    %356 = vmatpush.msra.mxu0 0.0
    %357 = vmatpush.msra.mxu0 0.0
    %358 = vmatpush.msra.mxu0 0.0
    %359 = vmatpush.msra.mxu0 0.0
    %360 = vmatpush.msra.mxu0 0.0
    %361 = vmatpush.msra.mxu0 0.0
    %362 = vmatpush.msra.mxu0 0.0
    %363 = vmatpush.msra.mxu0 %v138
    %364 = vmatpush.msra.mxu0 %v137
    %365 = vmatpush.msra.mxu0 %v136
    %366 = vmatpush.msra.mxu0 %v135
    %367 = vmatmul.f32.gmra.mxu0 %v349
    %v368 = vpop.f32.mrf.mxu0
    %v369 = vadd.f32 0.0, %v368
    %370 = vdwg.mxu0
    %v372 = vrot.slane %v369, 4
    %v374 = vadd.f32 %v128, %v372
    %v375 = vxor.u32 %v374, 2147483648
    %v376 = vmul.f32 %v375, 1.442695
    %v377 = vpow.pop %v376
    %v378 = vadd.f32 %v377, 1.0
    %v379 = vrcp.pop %v378
    %v380 = vmul.f32 %v378, %v379
    %v381 = vsub.f32 1.0, %v380
    %v382 = vmul.f32 %v379, %v381
    %v383 = vadd.f32 %v379, %v382
    %vm384 = vweird.f32 %v378
    %vm385 = vweird.f32 %v379
    %vm386 = vmor %vm384, %vm385
    %v387 = vsel %vm386, %v379, %v383
    %v388 = vand.u32 2147483647, %v378
    %vm389 = vcmp.eq.f32.partialorder %v388, 8.507059e+37
    %v390 = vand.u32 %v378, 2147483648
    %v391 = vor.u32 1.1754944e-38, %v390
    %v392 = vsel %vm389, %v391, %v387
    %v393 = vmul.f32 1.0, %v392
    %v394 = vtanh.pop %v374
    %v396 = vrot.slane %v261, 2
    %v398 = vmul.f32 %v393, %v396
    %400 = vrot.lane.b32.xlu0 %v394, 64
    %v401 = vpop.permute.xlu0 %400
    %v403 = vmul.f32 %v393, %v401
    %405 = vrot.lane.b32.xlu0 %v403, 32
    %v406 = vpop.permute.xlu0 %405
    %v408 = vadd.f32 %v398, %v406
    %v409 = vtanh.pop %v408
    %411 = vrot.lane.b32.xlu0 %v409, 64
    %v412 = vpop.permute.xlu0 %411
    %v414 = vmul.f32 %v393, %v412
    %416 = vrot.lane.b32.xlu0 %v414, 64
    %v417 = vpop.permute.xlu0 %416
    %vm419 = vcmask 521476
    %420 = vst.msk [vmem:[%s4 + $0x8] sm:$0x30] %vm419, %v417
    %v421 = vrot.slane %v339, 2
    %422 = vrot.lane.b32.xlu0 %v421, 32
    %v423 = vpop.permute.xlu0 %422
    %v424 = vsel %vm139, %v423, 0
    %426 = vmatpush.msra.mxu0 0.0
    %427 = vmatpush.msra.mxu0 0.0
    %428 = vmatpush.msra.mxu0 0.0
    %429 = vmatpush.msra.mxu0 0.0
    %430 = vmatpush.msra.mxu0 0.0
    %431 = vmatpush.msra.mxu0 0.0
    %432 = vmatpush.msra.mxu0 0.0
    %433 = vmatpush.msra.mxu0 0.0
    %434 = vmatpush.msra.mxu0 0.0
    %435 = vmatpush.msra.mxu0 0.0
    %436 = vmatpush.msra.mxu0 0.0
    %437 = vmatpush.msra.mxu0 0.0
    %438 = vmatpush.msra.mxu0 %v133
    %439 = vmatpush.msra.mxu0 %v132
    %440 = vmatpush.msra.mxu0 %v131
    %441 = vmatpush.msra.mxu0 %v130
    %442 = vmatmul.f32.gmra.mxu0 %v424
    %v443 = vpop.f32.mrf.mxu0
    %v444 = vadd.f32 0.0, %v443
    %445 = vdwg.mxu0
    %v447 = vrot.slane %v444, 4
    %v449 = vadd.f32 %v88, %v447
    %v450 = vxor.u32 %v449, 2147483648
    %v451 = vmul.f32 %v450, 1.442695
    %v452 = vpow.pop %v451
    %v453 = vadd.f32 %v452, 1.0
    %v454 = vrcp.pop %v453
    %v455 = vmul.f32 %v453, %v454
    %v456 = vsub.f32 1.0, %v455
    %v457 = vmul.f32 %v454, %v456
    %v458 = vadd.f32 %v454, %v457
    %vm459 = vweird.f32 %v453
    %vm460 = vweird.f32 %v454
    %vm461 = vmor %vm459, %vm460
    %v462 = vsel %vm461, %v454, %v458
    %v463 = vand.u32 2147483647, %v453
    %vm464 = vcmp.eq.f32.partialorder %v463, 8.507059e+37
    %v465 = vand.u32 %v453, 2147483648
    %v466 = vor.u32 1.1754944e-38, %v465
    %v467 = vsel %vm464, %v466, %v462
    %v468 = vmul.f32 1.0, %v467
    %v469 = vtanh.pop %v449
    %v471 = vrot.slane %v333, 6
    %v473 = vmul.f32 %v468, %v471
    %475 = vrot.lane.b32.xlu0 %v469, 64
    %v476 = vpop.permute.xlu0 %475
    %v478 = vmul.f32 %v468, %v476
    %480 = vrot.lane.b32.xlu0 %v478, 32
    %v481 = vpop.permute.xlu0 %480
    %v483 = vadd.f32 %v473, %v481
    %v484 = vtanh.pop %v483
    %486 = vrot.lane.b32.xlu0 %v484, 64
    %v487 = vpop.permute.xlu0 %486
    %v489 = vmul.f32 %v468, %v487
    %491 = vrot.lane.b32.xlu0 %v489, 32
    %v492 = vpop.permute.xlu0 %491
    %vm494 = vcmask 259076
    %495 = vst.msk [vmem:[%s4] sm:$0x30] %vm494, %v492
    %v496 = vrot.slane %v414, 4
    %497 = vrot.lane.b32.xlu0 %v496, 32
    %v498 = vpop.permute.xlu0 %497
    %v499 = vsel %vm139, %v498, 0
    %501 = vmatpush.msra.mxu0 0.0
    %502 = vmatpush.msra.mxu0 0.0
    %503 = vmatpush.msra.mxu0 0.0
    %504 = vmatpush.msra.mxu0 0.0
    %505 = vmatpush.msra.mxu0 0.0
    %506 = vmatpush.msra.mxu0 0.0
    %507 = vmatpush.msra.mxu0 0.0
    %508 = vmatpush.msra.mxu0 0.0
    %509 = vmatpush.msra.mxu0 0.0
    %510 = vmatpush.msra.mxu0 0.0
    %511 = vmatpush.msra.mxu0 0.0
    %512 = vmatpush.msra.mxu0 0.0
    %513 = vmatpush.msra.mxu0 %v138
    %514 = vmatpush.msra.mxu0 %v137
    %515 = vmatpush.msra.mxu0 %v136
    %516 = vmatpush.msra.mxu0 %v135
    %517 = vmatmul.f32.gmra.mxu0 %v499
    %v518 = vpop.f32.mrf.mxu0
    %v519 = vadd.f32 0.0, %v518
    %520 = vdwg.mxu0
    %v522 = vrot.slane %v519, 6
    %v524 = vadd.f32 %v128, %v522
    %v525 = vxor.u32 %v524, 2147483648
    %v526 = vmul.f32 %v525, 1.442695
    %v527 = vpow.pop %v526
    %v528 = vadd.f32 %v527, 1.0
    %v529 = vrcp.pop %v528
    %v530 = vmul.f32 %v528, %v529
    %v531 = vsub.f32 1.0, %v530
    %v532 = vmul.f32 %v529, %v531
    %v533 = vadd.f32 %v529, %v532
    %vm534 = vweird.f32 %v528
    %vm535 = vweird.f32 %v529
    %vm536 = vmor %vm534, %vm535
    %v537 = vsel %vm536, %v529, %v533
    %v538 = vand.u32 2147483647, %v528
    %vm539 = vcmp.eq.f32.partialorder %v538, 8.507059e+37
    %v540 = vand.u32 %v528, 2147483648
    %v541 = vor.u32 1.1754944e-38, %v540
    %v542 = vsel %vm539, %v541, %v537
    %v543 = vmul.f32 1.0, %v542
    %v544 = vtanh.pop %v524
    %v546 = vrot.slane %v408, 2
    %v548 = vmul.f32 %v543, %v546
    %550 = vrot.lane.b32.xlu0 %v544, 64
    %v551 = vpop.permute.xlu0 %550
    %v553 = vmul.f32 %v543, %v551
    %555 = vrot.lane.b32.xlu0 %v553, 32
    %v556 = vpop.permute.xlu0 %555
    %v558 = vadd.f32 %v548, %v556
    %v559 = vtanh.pop %v558
    %561 = vrot.lane.b32.xlu0 %v559, 64
    %v562 = vpop.permute.xlu0 %561
    %v564 = vmul.f32 %v543, %v562
    %566 = vrot.lane.b32.xlu0 %v564, 64
    %v567 = vpop.permute.xlu0 %566
    %vm569 = vcmask 519426
    %570 = vst.msk [vmem:[%s4 + $0x8] sm:$0xc] %vm569, %v567
    %v571 = vrot.slane %v489, 4
    %572 = vrot.lane.b32.xlu0 %v571, 32
    %v573 = vpop.permute.xlu0 %572
    %v574 = vsel %vm139, %v573, 0
    %576 = vmatpush.msra.mxu0 0.0
    %577 = vmatpush.msra.mxu0 0.0
    %578 = vmatpush.msra.mxu0 0.0
    %579 = vmatpush.msra.mxu0 0.0
    %580 = vmatpush.msra.mxu0 0.0
    %581 = vmatpush.msra.mxu0 0.0
    %582 = vmatpush.msra.mxu0 0.0
    %583 = vmatpush.msra.mxu0 0.0
    %584 = vmatpush.msra.mxu0 0.0
    %585 = vmatpush.msra.mxu0 0.0
    %586 = vmatpush.msra.mxu0 0.0
    %587 = vmatpush.msra.mxu0 0.0
    %588 = vmatpush.msra.mxu0 %v133
    %589 = vmatpush.msra.mxu0 %v132
    %590 = vmatpush.msra.mxu0 %v131
    %591 = vmatpush.msra.mxu0 %v130
    %592 = vmatmul.f32.gmra.mxu0 %v574
    %v593 = vpop.f32.mrf.mxu0
    %v594 = vadd.f32 0.0, %v593
    %595 = vdwg.mxu0
    %v597 = vrot.slane %v594, 2
    %v599 = vadd.f32 %v88, %v597
    %v600 = vxor.u32 %v599, 2147483648
    %v601 = vmul.f32 %v600, 1.442695
    %v602 = vpow.pop %v601
    %v603 = vadd.f32 %v602, 1.0
    %v604 = vrcp.pop %v603
    %v605 = vmul.f32 %v603, %v604
    %v606 = vsub.f32 1.0, %v605
    %v607 = vmul.f32 %v604, %v606
    %v608 = vadd.f32 %v604, %v607
    %vm609 = vweird.f32 %v603
    %vm610 = vweird.f32 %v604
    %vm611 = vmor %vm609, %vm610
    %v612 = vsel %vm611, %v604, %v608
    %v613 = vand.u32 2147483647, %v603
    %vm614 = vcmp.eq.f32.partialorder %v613, 8.507059e+37
    %v615 = vand.u32 %v603, 2147483648
    %v616 = vor.u32 1.1754944e-38, %v615
    %v617 = vsel %vm614, %v616, %v612
    %v618 = vmul.f32 1.0, %v617
    %v619 = vtanh.pop %v599
    %v621 = vrot.slane %v483, 6
    %v623 = vmul.f32 %v618, %v621
    %625 = vrot.lane.b32.xlu0 %v619, 64
    %v626 = vpop.permute.xlu0 %625
    %v628 = vmul.f32 %v618, %v626
    %630 = vrot.lane.b32.xlu0 %v628, 32
    %v631 = vpop.permute.xlu0 %630
    %v633 = vadd.f32 %v623, %v631
    %v634 = vtanh.pop %v633
    %636 = vrot.lane.b32.xlu0 %v634, 64
    %v637 = vpop.permute.xlu0 %636
    %v639 = vmul.f32 %v618, %v637
    %641 = vrot.lane.b32.xlu0 %v639, 32
    %v642 = vpop.permute.xlu0 %641
    %vm644 = vcmask 261126
    %645 = vst.msk [vmem:[%s4] sm:$0xc0] %vm644, %v642
    %v646 = vrot.slane %v564, 2
    %647 = vrot.lane.b32.xlu0 %v646, 32
    %v648 = vpop.permute.xlu0 %647
    %v649 = vsel %vm139, %v648, 0
    %651 = vmatpush.msra.mxu0 0.0
    %652 = vmatpush.msra.mxu0 0.0
    %653 = vmatpush.msra.mxu0 0.0
    %654 = vmatpush.msra.mxu0 0.0
    %655 = vmatpush.msra.mxu0 0.0
    %656 = vmatpush.msra.mxu0 0.0
    %657 = vmatpush.msra.mxu0 0.0
    %658 = vmatpush.msra.mxu0 0.0
    %659 = vmatpush.msra.mxu0 0.0
    %660 = vmatpush.msra.mxu0 0.0
    %661 = vmatpush.msra.mxu0 0.0
    %662 = vmatpush.msra.mxu0 0.0
    %663 = vmatpush.msra.mxu0 %v138
    %664 = vmatpush.msra.mxu0 %v137
    %665 = vmatpush.msra.mxu0 %v136
    %666 = vmatpush.msra.mxu0 %v135
    %667 = vmatmul.f32.gmra.mxu0 %v649
    %v668 = vpop.f32.mrf.mxu0
    %v669 = vadd.f32 0.0, %v668
    %670 = vdwg.mxu0
    %v671 = vadd.f32 %v128, %v669
    %v672 = vxor.u32 %v671, 2147483648
    %v673 = vmul.f32 %v672, 1.442695
    %v674 = vpow.pop %v673
    %v675 = vadd.f32 %v674, 1.0
    %v676 = vrcp.pop %v675
    %v677 = vmul.f32 %v675, %v676
    %v678 = vsub.f32 1.0, %v677
    %v679 = vmul.f32 %v676, %v678
    %v680 = vadd.f32 %v676, %v679
    %vm681 = vweird.f32 %v675
    %vm682 = vweird.f32 %v676
    %vm683 = vmor %vm681, %vm682
    %v684 = vsel %vm683, %v676, %v680
    %v685 = vand.u32 2147483647, %v675
    %vm686 = vcmp.eq.f32.partialorder %v685, 8.507059e+37
    %v687 = vand.u32 %v675, 2147483648
    %v688 = vor.u32 1.1754944e-38, %v687
    %v689 = vsel %vm686, %v688, %v684
    %v690 = vmul.f32 1.0, %v689
    %v691 = vtanh.pop %v671
    %v693 = vrot.slane %v558, 2
    %v695 = vmul.f32 %v690, %v693
    %697 = vrot.lane.b32.xlu0 %v691, 64
    %v698 = vpop.permute.xlu0 %697
    %v700 = vmul.f32 %v690, %v698
    %702 = vrot.lane.b32.xlu0 %v700, 32
    %v703 = vpop.permute.xlu0 %702
    %v705 = vadd.f32 %v695, %v703
    %v706 = vtanh.pop %v705
    %708 = vrot.lane.b32.xlu0 %v706, 64
    %v709 = vpop.permute.xlu0 %708
    %v711 = vmul.f32 %v690, %v709
    %713 = vrot.lane.b32.xlu0 %v711, 64
    %v714 = vpop.permute.xlu0 %713
    %vm716 = vcmask 517376
    %717 = vst.msk [vmem:[%s4 + $0x8] sm:$0x3] %vm716, %v714
    %v718 = vrot.slane %v639, 6
    %719 = vrot.lane.b32.xlu0 %v718, 32
    %v720 = vpop.permute.xlu0 %719
    %v721 = vsel %vm139, %v720, 0
    %723 = vmatpush.msra.mxu0 0.0
    %724 = vmatpush.msra.mxu0 0.0
    %725 = vmatpush.msra.mxu0 0.0
    %726 = vmatpush.msra.mxu0 0.0
    %727 = vmatpush.msra.mxu0 0.0
    %728 = vmatpush.msra.mxu0 0.0
    %729 = vmatpush.msra.mxu0 0.0
    %730 = vmatpush.msra.mxu0 0.0
    %731 = vmatpush.msra.mxu0 0.0
    %732 = vmatpush.msra.mxu0 0.0
    %733 = vmatpush.msra.mxu0 0.0
    %734 = vmatpush.msra.mxu0 0.0
    %735 = vmatpush.msra.mxu0 %v133
    %736 = vmatpush.msra.mxu0 %v132
    %737 = vmatpush.msra.mxu0 %v131
    %738 = vmatpush.msra.mxu0 %v130
    %739 = vmatmul.f32.gmra.mxu0 %v721
    %v740 = vpop.f32.mrf.mxu0
    %v741 = vadd.f32 0.0, %v740
    %742 = vdwg.mxu0
    %v743 = vadd.f32 %v91, %v741
    %v744 = vxor.u32 %v743, 2147483648
    %v745 = vmul.f32 %v744, 1.442695
    %v746 = vpow.pop %v745
    %v747 = vadd.f32 %v746, 1.0
    %v748 = vrcp.pop %v747
    %v749 = vmul.f32 %v747, %v748
    %v750 = vsub.f32 1.0, %v749
    %v751 = vmul.f32 %v748, %v750
    %v752 = vadd.f32 %v748, %v751
    %vm753 = vweird.f32 %v747
    %vm754 = vweird.f32 %v748
    %vm755 = vmor %vm753, %vm754
    %v756 = vsel %vm755, %v748, %v752
    %v757 = vand.u32 2147483647, %v747
    %vm758 = vcmp.eq.f32.partialorder %v757, 8.507059e+37
    %v759 = vand.u32 %v747, 2147483648
    %v760 = vor.u32 1.1754944e-38, %v759
    %v761 = vsel %vm758, %v760, %v756
    %v762 = vmul.f32 1.0, %v761
    %v763 = vtanh.pop %v743
    %v765 = vrot.slane %v633, 6
    %v767 = vmul.f32 %v762, %v765
    %769 = vrot.lane.b32.xlu0 %v763, 64
    %v770 = vpop.permute.xlu0 %769
    %v772 = vmul.f32 %v762, %v770
    %774 = vrot.lane.b32.xlu0 %v772, 32
    %v775 = vpop.permute.xlu0 %774
    %v777 = vadd.f32 %v767, %v775
    %v778 = vtanh.pop %v777
    %780 = vrot.lane.b32.xlu0 %v778, 64
    %v781 = vpop.permute.xlu0 %780
    %v783 = vmul.f32 %v762, %v781
    %785 = vrot.lane.b32.xlu0 %v783, 32
    %v786 = vpop.permute.xlu0 %785
    %788 = vst.msk [vmem:[%s4 + $0x8] sm:$0x3] %vm205, %v786
    %789 = vrot.lane.b32.xlu0 %v711, 32
    %v790 = vpop.permute.xlu0 %789
    %v791 = vsel %vm139, %v790, 0
    %793 = vmatpush.msra.mxu0 0.0
    %794 = vmatpush.msra.mxu0 0.0
    %795 = vmatpush.msra.mxu0 0.0
    %796 = vmatpush.msra.mxu0 0.0
    %797 = vmatpush.msra.mxu0 0.0
    %798 = vmatpush.msra.mxu0 0.0
    %799 = vmatpush.msra.mxu0 0.0
    %800 = vmatpush.msra.mxu0 0.0
    %801 = vmatpush.msra.mxu0 0.0
    %802 = vmatpush.msra.mxu0 0.0
    %803 = vmatpush.msra.mxu0 0.0
    %804 = vmatpush.msra.mxu0 0.0
    %805 = vmatpush.msra.mxu0 %v138
    %806 = vmatpush.msra.mxu0 %v137
    %807 = vmatpush.msra.mxu0 %v136
    %808 = vmatpush.msra.mxu0 %v135
    %809 = vmatmul.f32.gmra.mxu0 %v791
    %v810 = vpop.f32.mrf.mxu0
    %v811 = vadd.f32 0.0, %v810
    %812 = vdwg.mxu0
    %v814 = vrot.slane %v811, 2
    %v816 = vadd.f32 %v125, %v814
    %v817 = vxor.u32 %v816, 2147483648
    %v818 = vmul.f32 %v817, 1.442695
    %v819 = vpow.pop %v818
    %v820 = vadd.f32 %v819, 1.0
    %v821 = vrcp.pop %v820
    %v822 = vmul.f32 %v820, %v821
    %v823 = vsub.f32 1.0, %v822
    %v824 = vmul.f32 %v821, %v823
    %v825 = vadd.f32 %v821, %v824
    %vm826 = vweird.f32 %v820
    %vm827 = vweird.f32 %v821
    %vm828 = vmor %vm826, %vm827
    %v829 = vsel %vm828, %v821, %v825
    %v830 = vand.u32 2147483647, %v820
    %vm831 = vcmp.eq.f32.partialorder %v830, 8.507059e+37
    %v832 = vand.u32 %v820, 2147483648
    %v833 = vor.u32 1.1754944e-38, %v832
    %v834 = vsel %vm831, %v833, %v829
    %v835 = vmul.f32 1.0, %v834
    %v836 = vtanh.pop %v816
    %v838 = vrot.slane %v705, 2
    %v840 = vmul.f32 %v835, %v838
    %842 = vrot.lane.b32.xlu0 %v836, 64
    %v843 = vpop.permute.xlu0 %842
    %v845 = vmul.f32 %v835, %v843
    %847 = vrot.lane.b32.xlu0 %v845, 32
    %v848 = vpop.permute.xlu0 %847
    %v850 = vadd.f32 %v840, %v848
    %v851 = vtanh.pop %v850
    %853 = vrot.lane.b32.xlu0 %v851, 64
    %v854 = vpop.permute.xlu0 %853
    %v856 = vmul.f32 %v835, %v854
    %858 = vrot.lane.b32.xlu0 %v856, 64
    %v859 = vpop.permute.xlu0 %858
    %861 = vst.msk [vmem:[%s4] sm:$0xc0] %vm272, %v859
    %v862 = vsel %vm139, %v786, 0
    %864 = vmatpush.msra.mxu0 0.0
    %865 = vmatpush.msra.mxu0 0.0
    %866 = vmatpush.msra.mxu0 0.0
    %867 = vmatpush.msra.mxu0 0.0
    %868 = vmatpush.msra.mxu0 0.0
    %869 = vmatpush.msra.mxu0 0.0
    %870 = vmatpush.msra.mxu0 0.0
    %871 = vmatpush.msra.mxu0 0.0
    %872 = vmatpush.msra.mxu0 0.0
    %873 = vmatpush.msra.mxu0 0.0
    %874 = vmatpush.msra.mxu0 0.0
    %875 = vmatpush.msra.mxu0 0.0
    %876 = vmatpush.msra.mxu0 %v133
    %877 = vmatpush.msra.mxu0 %v132
    %878 = vmatpush.msra.mxu0 %v131
    %879 = vmatpush.msra.mxu0 %v130
    %880 = vmatmul.f32.gmra.mxu0 %v862
    %v881 = vpop.f32.mrf.mxu0
    %v882 = vadd.f32 0.0, %v881
    %883 = vdwg.mxu0
    %v885 = vrot.slane %v882, 6
    %v887 = vadd.f32 %v91, %v885
    %v888 = vxor.u32 %v887, 2147483648
    %v889 = vmul.f32 %v888, 1.442695
    %v890 = vpow.pop %v889
    %v891 = vadd.f32 %v890, 1.0
    %v892 = vrcp.pop %v891
    %v893 = vmul.f32 %v891, %v892
    %v894 = vsub.f32 1.0, %v893
    %v895 = vmul.f32 %v892, %v894
    %v896 = vadd.f32 %v892, %v895
    %vm897 = vweird.f32 %v891
    %vm898 = vweird.f32 %v892
    %vm899 = vmor %vm897, %vm898
    %v900 = vsel %vm899, %v892, %v896
    %v901 = vand.u32 2147483647, %v891
    %vm902 = vcmp.eq.f32.partialorder %v901, 8.507059e+37
    %v903 = vand.u32 %v891, 2147483648
    %v904 = vor.u32 1.1754944e-38, %v903
    %v905 = vsel %vm902, %v904, %v900
    %v906 = vmul.f32 1.0, %v905
    %v907 = vtanh.pop %v887
    %v909 = vrot.slane %v777, 6
    %v911 = vmul.f32 %v906, %v909
    %913 = vrot.lane.b32.xlu0 %v907, 64
    %v914 = vpop.permute.xlu0 %913
    %v916 = vmul.f32 %v906, %v914
    %918 = vrot.lane.b32.xlu0 %v916, 32
    %v919 = vpop.permute.xlu0 %918
    %v921 = vadd.f32 %v911, %v919
    %v922 = vtanh.pop %v921
    %924 = vrot.lane.b32.xlu0 %v922, 64
    %v925 = vpop.permute.xlu0 %924
    %v927 = vmul.f32 %v906, %v925
    %929 = vrot.lane.b32.xlu0 %v927, 32
    %v930 = vpop.permute.xlu0 %929
    %932 = vst.msk [vmem:[%s4 + $0x8] sm:$0xc] %vm344, %v930
    %v933 = vrot.slane %v856, 6
    %934 = vrot.lane.b32.xlu0 %v933, 32
    %v935 = vpop.permute.xlu0 %934
    %v936 = vsel %vm139, %v935, 0
    %938 = vmatpush.msra.mxu0 0.0
    %939 = vmatpush.msra.mxu0 0.0
    %940 = vmatpush.msra.mxu0 0.0
    %941 = vmatpush.msra.mxu0 0.0
    %942 = vmatpush.msra.mxu0 0.0
    %943 = vmatpush.msra.mxu0 0.0
    %944 = vmatpush.msra.mxu0 0.0
    %945 = vmatpush.msra.mxu0 0.0
    %946 = vmatpush.msra.mxu0 0.0
    %947 = vmatpush.msra.mxu0 0.0
    %948 = vmatpush.msra.mxu0 0.0
    %949 = vmatpush.msra.mxu0 0.0
    %950 = vmatpush.msra.mxu0 %v138
    %951 = vmatpush.msra.mxu0 %v137
    %952 = vmatpush.msra.mxu0 %v136
    %953 = vmatpush.msra.mxu0 %v135
    %954 = vmatmul.f32.gmra.mxu0 %v936
    %v955 = vpop.f32.mrf.mxu0
    %v956 = vadd.f32 0.0, %v955
    %957 = vdwg.mxu0
    %v959 = vrot.slane %v956, 4
    %v961 = vadd.f32 %v125, %v959
    %v962 = vxor.u32 %v961, 2147483648
    %v963 = vmul.f32 %v962, 1.442695
    %v964 = vpow.pop %v963
    %v965 = vadd.f32 %v964, 1.0
    %v966 = vrcp.pop %v965
    %v967 = vmul.f32 %v965, %v966
    %v968 = vsub.f32 1.0, %v967
    %v969 = vmul.f32 %v966, %v968
    %v970 = vadd.f32 %v966, %v969
    %vm971 = vweird.f32 %v965
    %vm972 = vweird.f32 %v966
    %vm973 = vmor %vm971, %vm972
    %v974 = vsel %vm973, %v966, %v970
    %v975 = vand.u32 2147483647, %v965
    %vm976 = vcmp.eq.f32.partialorder %v975, 8.507059e+37
    %v977 = vand.u32 %v965, 2147483648
    %v978 = vor.u32 1.1754944e-38, %v977
    %v979 = vsel %vm976, %v978, %v974
    %v980 = vmul.f32 1.0, %v979
    %v981 = vtanh.pop %v961
    %v983 = vrot.slane %v850, 2
    %v985 = vmul.f32 %v980, %v983
    %987 = vrot.lane.b32.xlu0 %v981, 64
    %v988 = vpop.permute.xlu0 %987
    %v990 = vmul.f32 %v980, %v988
    %992 = vrot.lane.b32.xlu0 %v990, 32
    %v993 = vpop.permute.xlu0 %992
    %v995 = vadd.f32 %v985, %v993
    %v996 = vtanh.pop %v995
    %998 = vrot.lane.b32.xlu0 %v996, 64
    %v999 = vpop.permute.xlu0 %998
    %v1001 = vmul.f32 %v980, %v999
    %1003 = vrot.lane.b32.xlu0 %v1001, 64
    %v1004 = vpop.permute.xlu0 %1003
    %1006 = vst.msk [vmem:[%s4] sm:$0x30] %vm419, %v1004
    %v1007 = vrot.slane %v927, 2
    %1008 = vrot.lane.b32.xlu0 %v1007, 32
    %v1009 = vpop.permute.xlu0 %1008
    %v1010 = vsel %vm139, %v1009, 0
    %1012 = vmatpush.msra.mxu0 0.0
    %1013 = vmatpush.msra.mxu0 0.0
    %1014 = vmatpush.msra.mxu0 0.0
    %1015 = vmatpush.msra.mxu0 0.0
    %1016 = vmatpush.msra.mxu0 0.0
    %1017 = vmatpush.msra.mxu0 0.0
    %1018 = vmatpush.msra.mxu0 0.0
    %1019 = vmatpush.msra.mxu0 0.0
    %1020 = vmatpush.msra.mxu0 0.0
    %1021 = vmatpush.msra.mxu0 0.0
    %1022 = vmatpush.msra.mxu0 0.0
    %1023 = vmatpush.msra.mxu0 0.0
    %1024 = vmatpush.msra.mxu0 %v133
    %1025 = vmatpush.msra.mxu0 %v132
    %1026 = vmatpush.msra.mxu0 %v131
    %1027 = vmatpush.msra.mxu0 %v130
    %1028 = vmatmul.f32.gmra.mxu0 %v1010
    %v1029 = vpop.f32.mrf.mxu0
    %v1030 = vadd.f32 0.0, %v1029
    %1031 = vdwg.mxu0
    %v1033 = vrot.slane %v1030, 4
    %v1035 = vadd.f32 %v91, %v1033
    %v1036 = vxor.u32 %v1035, 2147483648
    %v1037 = vmul.f32 %v1036, 1.442695
    %v1038 = vpow.pop %v1037
    %v1039 = vadd.f32 %v1038, 1.0
    %v1040 = vrcp.pop %v1039
    %v1041 = vmul.f32 %v1039, %v1040
    %v1042 = vsub.f32 1.0, %v1041
    %v1043 = vmul.f32 %v1040, %v1042
    %v1044 = vadd.f32 %v1040, %v1043
    %vm1045 = vweird.f32 %v1039
    %vm1046 = vweird.f32 %v1040
    %vm1047 = vmor %vm1045, %vm1046
    %v1048 = vsel %vm1047, %v1040, %v1044
    %v1049 = vand.u32 2147483647, %v1039
    %vm1050 = vcmp.eq.f32.partialorder %v1049, 8.507059e+37
    %v1051 = vand.u32 %v1039, 2147483648
    %v1052 = vor.u32 1.1754944e-38, %v1051
    %v1053 = vsel %vm1050, %v1052, %v1048
    %v1054 = vmul.f32 1.0, %v1053
    %v1055 = vtanh.pop %v1035
    %v1057 = vrot.slane %v921, 6
    %v1059 = vmul.f32 %v1054, %v1057
    %1061 = vrot.lane.b32.xlu0 %v1055, 64
    %v1062 = vpop.permute.xlu0 %1061
    %v1064 = vmul.f32 %v1054, %v1062
    %1066 = vrot.lane.b32.xlu0 %v1064, 32
    %v1067 = vpop.permute.xlu0 %1066
    %v1069 = vadd.f32 %v1059, %v1067
    %v1070 = vtanh.pop %v1069
    %1072 = vrot.lane.b32.xlu0 %v1070, 64
    %v1073 = vpop.permute.xlu0 %1072
    %v1075 = vmul.f32 %v1054, %v1073
    %1077 = vrot.lane.b32.xlu0 %v1075, 32
    %v1078 = vpop.permute.xlu0 %1077
    %1080 = vst.msk [vmem:[%s4 + $0x8] sm:$0x30] %vm494, %v1078
    %v1081 = vrot.slane %v1001, 4
    %1082 = vrot.lane.b32.xlu0 %v1081, 32
    %v1083 = vpop.permute.xlu0 %1082
    %v1084 = vsel %vm139, %v1083, 0
    %1086 = vmatpush.msra.mxu0 0.0
    %1087 = vmatpush.msra.mxu0 0.0
    %1088 = vmatpush.msra.mxu0 0.0
    %1089 = vmatpush.msra.mxu0 0.0
    %1090 = vmatpush.msra.mxu0 0.0
    %1091 = vmatpush.msra.mxu0 0.0
    %1092 = vmatpush.msra.mxu0 0.0
    %1093 = vmatpush.msra.mxu0 0.0
    %1094 = vmatpush.msra.mxu0 0.0
    %1095 = vmatpush.msra.mxu0 0.0
    %1096 = vmatpush.msra.mxu0 0.0
    %1097 = vmatpush.msra.mxu0 0.0
    %1098 = vmatpush.msra.mxu0 %v138
    %1099 = vmatpush.msra.mxu0 %v137
    %1100 = vmatpush.msra.mxu0 %v136
    %1101 = vmatpush.msra.mxu0 %v135
    %1102 = vmatmul.f32.gmra.mxu0 %v1084
    %v1103 = vpop.f32.mrf.mxu0
    %v1104 = vadd.f32 0.0, %v1103
    %1105 = vdwg.mxu0
    %v1107 = vrot.slane %v1104, 6
    %v1109 = vadd.f32 %v125, %v1107
    %v1110 = vxor.u32 %v1109, 2147483648
    %v1111 = vmul.f32 %v1110, 1.442695
    %v1112 = vpow.pop %v1111
    %v1113 = vadd.f32 %v1112, 1.0
    %v1114 = vrcp.pop %v1113
    %v1115 = vmul.f32 %v1113, %v1114
    %v1116 = vsub.f32 1.0, %v1115
    %v1117 = vmul.f32 %v1114, %v1116
    %v1118 = vadd.f32 %v1114, %v1117
    %vm1119 = vweird.f32 %v1113
    %vm1120 = vweird.f32 %v1114
    %vm1121 = vmor %vm1119, %vm1120
    %v1122 = vsel %vm1121, %v1114, %v1118
    %v1123 = vand.u32 2147483647, %v1113
    %vm1124 = vcmp.eq.f32.partialorder %v1123, 8.507059e+37
    %v1125 = vand.u32 %v1113, 2147483648
    %v1126 = vor.u32 1.1754944e-38, %v1125
    %v1127 = vsel %vm1124, %v1126, %v1122
    %v1128 = vmul.f32 1.0, %v1127
    %v1129 = vtanh.pop %v1109
    %v1131 = vrot.slane %v995, 2
    %v1133 = vmul.f32 %v1128, %v1131
    %1135 = vrot.lane.b32.xlu0 %v1129, 64
    %v1136 = vpop.permute.xlu0 %1135
    %v1138 = vmul.f32 %v1128, %v1136
    %1140 = vrot.lane.b32.xlu0 %v1138, 32
    %v1141 = vpop.permute.xlu0 %1140
    %v1143 = vadd.f32 %v1133, %v1141
    %v1144 = vtanh.pop %v1143
    %1146 = vrot.lane.b32.xlu0 %v1144, 64
    %v1147 = vpop.permute.xlu0 %1146
    %v1149 = vmul.f32 %v1128, %v1147
    %1151 = vrot.lane.b32.xlu0 %v1149, 64
    %v1152 = vpop.permute.xlu0 %1151
    %1154 = vst.msk [vmem:[%s4] sm:$0xc] %vm569, %v1152
    %v1155 = vrot.slane %v1075, 4
    %1156 = vrot.lane.b32.xlu0 %v1155, 32
    %v1157 = vpop.permute.xlu0 %1156
    %v1158 = vsel %vm139, %v1157, 0
    %1160 = vmatpush.msra.mxu0 0.0
    %1161 = vmatpush.msra.mxu0 0.0
    %1162 = vmatpush.msra.mxu0 0.0
    %1163 = vmatpush.msra.mxu0 0.0
    %1164 = vmatpush.msra.mxu0 0.0
    %1165 = vmatpush.msra.mxu0 0.0
    %1166 = vmatpush.msra.mxu0 0.0
    %1167 = vmatpush.msra.mxu0 0.0
    %1168 = vmatpush.msra.mxu0 0.0
    %1169 = vmatpush.msra.mxu0 0.0
    %1170 = vmatpush.msra.mxu0 0.0
    %1171 = vmatpush.msra.mxu0 0.0
    %1172 = vmatpush.msra.mxu0 %v133
    %1173 = vmatpush.msra.mxu0 %v132
    %1174 = vmatpush.msra.mxu0 %v131
    %1175 = vmatpush.msra.mxu0 %v130
    %1176 = vmatmul.f32.gmra.mxu0 %v1158
    %v1177 = vpop.f32.mrf.mxu0
    %v1178 = vadd.f32 0.0, %v1177
    %1179 = vdwg.mxu0
    %v1181 = vrot.slane %v1178, 2
    %v1183 = vadd.f32 %v91, %v1181
    %v1184 = vxor.u32 %v1183, 2147483648
    %v1185 = vmul.f32 %v1184, 1.442695
    %v1186 = vpow.pop %v1185
    %v1187 = vadd.f32 %v1186, 1.0
    %v1188 = vrcp.pop %v1187
    %v1189 = vmul.f32 %v1187, %v1188
    %v1190 = vsub.f32 1.0, %v1189
    %v1191 = vmul.f32 %v1188, %v1190
    %v1192 = vadd.f32 %v1188, %v1191
    %vm1193 = vweird.f32 %v1187
    %vm1194 = vweird.f32 %v1188
    %vm1195 = vmor %vm1193, %vm1194
    %v1196 = vsel %vm1195, %v1188, %v1192
    %v1197 = vand.u32 2147483647, %v1187
    %vm1198 = vcmp.eq.f32.partialorder %v1197, 8.507059e+37
    %v1199 = vand.u32 %v1187, 2147483648
    %v1200 = vor.u32 1.1754944e-38, %v1199
    %v1201 = vsel %vm1198, %v1200, %v1196
    %v1202 = vmul.f32 1.0, %v1201
    %v1203 = vtanh.pop %v1183
    %v1205 = vrot.slane %v1069, 6
    %v1207 = vmul.f32 %v1202, %v1205
    %1209 = vrot.lane.b32.xlu0 %v1203, 64
    %v1210 = vpop.permute.xlu0 %1209
    %v1212 = vmul.f32 %v1202, %v1210
    %1214 = vrot.lane.b32.xlu0 %v1212, 32
    %v1215 = vpop.permute.xlu0 %1214
    %v1217 = vadd.f32 %v1207, %v1215
    %v1218 = vtanh.pop %v1217
    %1220 = vrot.lane.b32.xlu0 %v1218, 64
    %v1221 = vpop.permute.xlu0 %1220
    %v1223 = vmul.f32 %v1202, %v1221
    %1225 = vrot.lane.b32.xlu0 %v1223, 32
    %v1226 = vpop.permute.xlu0 %1225
    %1228 = vst.msk [vmem:[%s4 + $0x8] sm:$0xc0] %vm644, %v1226
    %v1229 = vrot.slane %v1149, 2
    %1230 = vrot.lane.b32.xlu0 %v1229, 32
    %v1231 = vpop.permute.xlu0 %1230
    %v1232 = vsel %vm139, %v1231, 0
    %1234 = vmatpush.msra.mxu0 0.0
    %1235 = vmatpush.msra.mxu0 0.0
    %1236 = vmatpush.msra.mxu0 0.0
    %1237 = vmatpush.msra.mxu0 0.0
    %1238 = vmatpush.msra.mxu0 0.0
    %1239 = vmatpush.msra.mxu0 0.0
    %1240 = vmatpush.msra.mxu0 0.0
    %1241 = vmatpush.msra.mxu0 0.0
    %1242 = vmatpush.msra.mxu0 0.0
    %1243 = vmatpush.msra.mxu0 0.0
    %1244 = vmatpush.msra.mxu0 0.0
    %1245 = vmatpush.msra.mxu0 0.0
    %1246 = vmatpush.msra.mxu0 %v138
    %1247 = vmatpush.msra.mxu0 %v137
    %1248 = vmatpush.msra.mxu0 %v136
    %1249 = vmatpush.msra.mxu0 %v135
    %1250 = vmatmul.f32.gmra.mxu0 %v1232
    %v1251 = vpop.f32.mrf.mxu0
    %v1252 = vadd.f32 0.0, %v1251
    %1253 = vdwg.mxu0
    %v1254 = vadd.f32 %v125, %v1252
    %v1255 = vxor.u32 %v1254, 2147483648
    %v1256 = vmul.f32 %v1255, 1.442695
    %v1257 = vpow.pop %v1256
    %v1258 = vadd.f32 %v1257, 1.0
    %v1259 = vrcp.pop %v1258
    %v1260 = vmul.f32 %v1258, %v1259
    %v1261 = vsub.f32 1.0, %v1260
    %v1262 = vmul.f32 %v1259, %v1261
    %v1263 = vadd.f32 %v1259, %v1262
    %vm1264 = vweird.f32 %v1258
    %vm1265 = vweird.f32 %v1259
    %vm1266 = vmor %vm1264, %vm1265
    %v1267 = vsel %vm1266, %v1259, %v1263
    %v1268 = vand.u32 2147483647, %v1258
    %vm1269 = vcmp.eq.f32.partialorder %v1268, 8.507059e+37
    %v1270 = vand.u32 %v1258, 2147483648
    %v1271 = vor.u32 1.1754944e-38, %v1270
    %v1272 = vsel %vm1269, %v1271, %v1267
    %v1273 = vmul.f32 1.0, %v1272
    %v1274 = vtanh.pop %v1254
    %v1276 = vrot.slane %v1143, 2
    %v1278 = vmul.f32 %v1273, %v1276
    %1280 = vrot.lane.b32.xlu0 %v1274, 64
    %v1281 = vpop.permute.xlu0 %1280
    %v1283 = vmul.f32 %v1273, %v1281
    %1285 = vrot.lane.b32.xlu0 %v1283, 32
    %v1286 = vpop.permute.xlu0 %1285
    %v1288 = vadd.f32 %v1278, %v1286
    %v1289 = vtanh.pop %v1288
    %1291 = vrot.lane.b32.xlu0 %v1289, 64
    %v1292 = vpop.permute.xlu0 %1291
    %v1294 = vmul.f32 %v1273, %v1292
    %1296 = vrot.lane.b32.xlu0 %v1294, 64
    %v1297 = vpop.permute.xlu0 %1296
    %1299 = vst.msk [vmem:[%s4] sm:$0x3] %vm716, %v1297
    // Predicated region
    $region26: #{lstm_model_forward.6} parent=1 // pred_check
      _
    $region27: #{lstm_model_forward.6} parent=1 // pred_check_branch
      %1301 = sbr.rel (0) target = $region29
    $region28: #{lstm_model_forward.6} parent=1 // pred_region
      _
    $region29: #{lstm_model_forward.6} parent=1 // pred_fallthru
      _
    // Predicated region
    $region30: #{lstm_model_forward.6} parent=1 // pred_check
      _
    $region31: #{lstm_model_forward.6} parent=1 // pred_check_branch
      %1303 = sbr.rel (0) target = $region33
    $region32: #{lstm_model_forward.6} parent=1 // pred_region
      _
    $region33: #{lstm_model_forward.6} parent=1 // pred_fallthru
      _
    %1304 = vsyncpa [#allocation3], 1
    %1305 = vsyncpa [#allocation5], 1

</llo_original>
